<compile_context>
chip_gen: v5e
topology: v5e:2x2
jax: 0.10.0
libtpu: 0.0.40
codegen_flags: <defaults>
</compile_context>

<pallas_src>
import jax
import jax.numpy as jnp
from jax.experimental import pallas as pl
from jax.experimental.pallas import tpu as pltpu

_EPS = 1e-5  # PyTorch BatchNorm1d default eps


# ------------------------------- Pallas kernel --------------------------------

def _improved_cnn_kernel(x_ref, w1_ref, sh1_ref, w2_ref, sh2_ref, w3_ref, sh3_ref,
                         w4_ref, sh4_ref, w5_ref, sh5_ref, w6_ref, b6_ref,
                         w7_ref, b7_ref, out_ref):
    """Whole ImprovedCNN forward for a TB-sample batch tile; everything on-chip."""
    f32, bf16 = jnp.float32, jnp.bfloat16
    TB, L = x_ref.shape

    def pool2(h):
        # MaxPool1d(2) over the (static) position list: out[j] = max(h[2j], h[2j+1]).
        return [jnp.maximum(h[2 * i], h[2 * i + 1]) for i in range(len(h) // 2)]

    def conv_k3(h, w_ref_, sh_ref_):
        # Conv1d(k=3, padding=1) + folded-BN shift + ReLU.
        # Per position: one (TB, taps*Cin) x (taps*Cin, Cout) bf16 MXU matmul.
        # Weight rows are ordered [k=0 (prev) | k=1 (cur) | k=2 (next)] * Cin.
        Lh = len(h)
        cin = h[0].shape[1]
        sh = sh_ref_[...]
        out = []
        for l in range(Lh):
            taps = []
            if l > 0:
                taps.append(h[l - 1])
            taps.append(h[l])
            if l < Lh - 1:
                taps.append(h[l + 1])
            lo = 0 if l > 0 else cin                 # drop prev-tap rows at l == 0
            hi = 3 * cin if l < Lh - 1 else 2 * cin  # drop next-tap rows at l == Lh-1
            if len(taps) > 1:
                a = jnp.concatenate(taps, axis=1).astype(bf16)
            else:
                a = taps[0].astype(bf16)
            acc = jnp.dot(a, w_ref_[lo:hi, :], preferred_element_type=f32)
            out.append(jnp.maximum(acc + sh, 0.0))   # (TB, Cout)
        return out

    # ---- conv1 (Cin=1): K=3 is MXU-degenerate -> f32 VPU broadcast FMA ----
    x = x_ref[...]                                   # (TB, L) f32
    w1 = w1_ref[...]                                 # (3, 64), BN scale folded
    sh1 = sh1_ref[...]                               # (1, 64)
    cols = [x[:, l:l + 1] for l in range(L)]         # L columns of (TB, 1)
    h = []
    for l in range(L):
        acc = cols[l] * w1[1:2, :]
        if l > 0:
            acc = acc + cols[l - 1] * w1[0:1, :]
        if l < L - 1:
            acc = acc + cols[l + 1] * w1[2:3, :]
        h.append(jnp.maximum(acc + sh1, 0.0))        # (TB, 64)
    h = pool2(h)                                     # L/2 slabs of (TB, 64)

    # ---- conv2 + BN + ReLU + pool (dropout = identity) ----
    h = conv_k3(h, w2_ref, sh2_ref)                  # L/2 slabs of (TB, 128)
    h = pool2(h)                                     # L/4 slabs of (TB, 128)

    # ---- conv3 + BN + ReLU ----
    h = conv_k3(h, w3_ref, sh3_ref)                  # L/4 slabs of (TB, 256)

    # ---- fc1 + BN + ReLU: channel-major flatten folded into per-position taps ----
    L4 = len(h)
    acc = jnp.dot(h[0].astype(bf16), w4_ref[0], preferred_element_type=f32)
    for l in range(1, L4):
        acc = acc + jnp.dot(h[l].astype(bf16), w4_ref[l], preferred_element_type=f32)
    f1 = jnp.maximum(acc + sh4_ref[...], 0.0)        # (TB, 512)

    # ---- fc2 + BN + ReLU ----
    f2 = jnp.dot(f1.astype(bf16), w5_ref[...], preferred_element_type=f32)
    f2 = jnp.maximum(f2 + sh5_ref[...], 0.0)         # (TB, 128)

    # ---- fc3 + ReLU ----
    f3 = jnp.dot(f2.astype(bf16), w6_ref[...], preferred_element_type=f32)
    f3 = jnp.maximum(f3 + b6_ref[...], 0.0)          # (TB, 32)

    # ---- fc4 (weight lane-padded to 128 so the HBM store is dense) ----
    f4 = jnp.dot(f3.astype(bf16), w7_ref[...], preferred_element_type=f32)
    out_ref[...] = f4 + b7_ref[...]                  # (TB, 128); column 0 is the logit


# --------------------------------- wrapper -------------------------------------

_W_KEYS = ("w1", "sh1", "w2", "sh2", "w3", "sh3", "w4", "sh4",
           "w5", "sh5", "w6", "b6", "w7", "b7")


def _round_up(v, m):
    return (v + m - 1) // m * m


def improved_cnn_forward(x_ncl, kp, tb=128):
    """x_ncl: (N, 1, input_size) like torch Conv1d input. Returns (N, 1).

    tb: batch tile per grid step. 128 fills the v5e MXU; use 256+ on v6e/v7x.
    """
    N, cin, L = x_ncl.shape
    assert cin == 1 and L % 4 == 0
    TB = min(_round_up(tb, 8), _round_up(N, 8))
    N_pad = _round_up(N, TB)

    x = jnp.reshape(x_ncl.astype(jnp.float32), (N, L))
    if N_pad != N:
        x = jnp.pad(x, ((0, N_pad - N), (0, 0)))

    def full_spec(a):
        zero = (0,) * a.ndim
        return pl.BlockSpec(a.shape, lambda n, _z=zero: _z)

    out = pl.pallas_call(
        _improved_cnn_kernel,
        out_shape=jax.ShapeDtypeStruct((N_pad, 128), jnp.float32),
        grid=(N_pad // TB,),
        in_specs=[pl.BlockSpec((TB, L), lambda n: (n, 0))]
                 + [full_spec(kp[k]) for k in _W_KEYS],
        out_specs=pl.BlockSpec((TB, 128), lambda n: (n, 0)),
        compiler_params=pltpu.CompilerParams(dimension_semantics=("parallel",)),
    )(x, *[kp[k] for k in _W_KEYS])
    return out[:N, :1]


# ------------------------ parameter preparation (folding) ----------------------

def prepare_params(params, input_size):
    """Fold BN running stats + conv/linear biases into kernel-ready bf16 weights."""
    f32, bf16 = jnp.float32, jnp.bfloat16
    L4 = input_size // 4

    def fold(gamma, beta, mean, var, bias):
        scale = gamma * jax.lax.rsqrt(var + _EPS)
        shift = beta + (bias - mean) * scale
        return scale.astype(f32), shift.reshape(1, -1).astype(f32)

    kp = {}

    w, b, g, be, mu, var = params["conv1"]                    # w: (64, 1, 3)
    s, kp["sh1"] = fold(g, be, mu, var, b)
    kp["w1"] = (jnp.transpose(w[:, 0, :], (1, 0)) * s[None, :]).astype(f32)      # (3, 64)

    w, b, g, be, mu, var = params["conv2"]                    # w: (128, 64, 3)
    s, kp["sh2"] = fold(g, be, mu, var, b)
    w2 = jnp.transpose(w, (2, 1, 0)) * s[None, None, :]       # (3, 64, 128) [k, cin, cout]
    kp["w2"] = w2.reshape(3 * 64, 128).astype(bf16)           # rows: [k0 | k1 | k2] * cin

    w, b, g, be, mu, var = params["conv3"]                    # w: (256, 128, 3)
    s, kp["sh3"] = fold(g, be, mu, var, b)
    w3 = jnp.transpose(w, (2, 1, 0)) * s[None, None, :]       # (3, 128, 256)
    kp["w3"] = w3.reshape(3 * 128, 256).astype(bf16)

    w, b, g, be, mu, var = params["fc1"]                      # w: (512, 256*L4)
    s, kp["sh4"] = fold(g, be, mu, var, b)
    n_out, n_flat = w.shape
    # torch flatten is channel-major: flat[c*L4 + l] -> regroup into position taps.
    w_taps = jnp.transpose(w.reshape(n_out, n_flat // L4, L4), (2, 1, 0))        # (L4, 256, 512)
    kp["w4"] = (w_taps * s[None, None, :]).astype(bf16)

    w, b, g, be, mu, var = params["fc2"]                      # w: (128, 512)
    s, kp["sh5"] = fold(g, be, mu, var, b)
    kp["w5"] = (w.T * s[None, :]).astype(bf16)                                   # (512, 128)

    w, b = params["fc3"]                                      # (32, 128), (32,)
    kp["w6"] = w.T.astype(bf16)                                                  # (128, 32)
    kp["b6"] = b.reshape(1, -1).astype(f32)

    w, b = params["fc4"]                                      # (1, 32), (1,)
    kp["w7"] = jnp.zeros((w.shape[1], 128), bf16).at[:, 0].set(w[0].astype(bf16))
    kp["b7"] = jnp.zeros((1, 128), f32).at[0, 0].set(b[0])
    return kp


# --------------------------- deterministic raw params --------------------------

def init_params(key, input_size):
    keys = iter(jax.random.split(key, 40))

    def nrm(shape, s=0.05):
        return jax.random.normal(next(keys), shape, jnp.float32) * s

    def bn(c):
        gamma = jax.random.uniform(next(keys), (c,), jnp.float32, 0.5, 1.5)
        beta = nrm((c,))
        running_mean = nrm((c,))
        running_var = jax.random.uniform(next(keys), (c,), jnp.float32, 0.5, 1.5)
        return gamma, beta, running_mean, running_var

    p = {}
    p["conv1"] = (nrm((64, 1, 3)), nrm((64,))) + bn(64)
    p["conv2"] = (nrm((128, 64, 3)), nrm((128,))) + bn(128)
    p["conv3"] = (nrm((256, 128, 3)), nrm((256,))) + bn(256)
    flat = 256 * (input_size // 4)
    p["fc1"] = (nrm((512, flat)), nrm((512,))) + bn(512)
    p["fc2"] = (nrm((128, 512)), nrm((128,))) + bn(128)
    p["fc3"] = (nrm((32, 128)), nrm((32,)))
    p["fc4"] = (nrm((1, 32)), nrm((1,)))
    return p


# -------------------------- pure-JAX f32 reference -----------------------------

def reference_forward(x_ncl, params):
    """Plain-JAX f32 implementation of the PyTorch forward (inference mode)."""
    x = x_ncl.astype(jnp.float32)                             # (N, 1, L)

    def conv_bn_relu(x, w, b, g, be, mu, var):
        y = jax.lax.conv_general_dilated(
            x, w, window_strides=(1,), padding=((1, 1),),
            dimension_numbers=("NCH", "OIH", "NCH"))
        y = y + b[None, :, None]
        scale = (g / jnp.sqrt(var + _EPS))
        y = (y - mu[None, :, None]) * scale[None, :, None] + be[None, :, None]
        return jnp.maximum(y, 0.0)

    def pool(x):                                              # (N, C, L) -> (N, C, L//2)
        n, c, l = x.shape
        return jnp.max(x.reshape(n, c, l // 2, 2), axis=-1)

    x = pool(conv_bn_relu(x, *params["conv1"]))
    x = pool(conv_bn_relu(x, *params["conv2"]))
    x = conv_bn_relu(x, *params["conv3"])
    n = x.shape[0]
    x = x.reshape(n, -1)                                      # channel-major flatten

    def lin(x, w, b):
        return x @ w.T + b

    w, b, g, be, mu, var = params["fc1"]
    x = jnp.maximum((lin(x, w, b) - mu) * (g / jnp.sqrt(var + _EPS)) + be, 0.0)
    w, b, g, be, mu, var = params["fc2"]
    x = jnp.maximum((lin(x, w, b) - mu) * (g / jnp.sqrt(var + _EPS)) + be, 0.0)
    x = jnp.maximum(lin(x, *params["fc3"]), 0.0)
    return lin(x, *params["fc4"])                             # (N, 1)


# ----------------------------------- main ---------------------------------------

if __name__ == "__main__":
    input_size = 16   # must be divisible by 4 (two MaxPool1d(2) stages)
    batch = 20        # deliberately not a multiple of the batch tile

    key = jax.random.PRNGKey(0)
    pkey, xkey = jax.random.split(key)
    params = init_params(pkey, input_size)
    kparams = prepare_params(params, input_size)
    x = jax.random.normal(xkey, (batch, 1, input_size), jnp.float32)  # NCL like torch

    # Small batch tile here to exercise a multi-step grid; use 128/256 in production.
    fwd = jax.jit(lambda xb, kp: improved_cnn_forward(xb, kp, tb=8))
    out = jax.block_until_ready(fwd(x, kparams))
    assert out.shape == (batch, 1), out.shape

    with jax.default_matmul_precision("highest"):
        ref = reference_forward(x, params)
    err = float(jnp.max(jnp.abs(out - ref)))
    assert err < 5e-2, f"max abs err vs f32 reference: {err}"
    print("KERNEL_OK")
</pallas_src>

<mosaic_0001>
module attributes {stable_mosaic.version = 11 : i64} {
  func.func @_improved_cnn_kernel(%arg0: i32, %arg1: memref<8x16xf32, #tpu.memory_space<vmem>>, %arg2: memref<3x64xf32, #tpu.memory_space<vmem>>, %arg3: memref<1x64xf32, #tpu.memory_space<vmem>>, %arg4: memref<192x128xbf16, #tpu.memory_space<vmem>>, %arg5: memref<1x128xf32, #tpu.memory_space<vmem>>, %arg6: memref<384x256xbf16, #tpu.memory_space<vmem>>, %arg7: memref<1x256xf32, #tpu.memory_space<vmem>>, %arg8: memref<4x256x512xbf16, #tpu.memory_space<vmem>>, %arg9: memref<1x512xf32, #tpu.memory_space<vmem>>, %arg10: memref<512x128xbf16, #tpu.memory_space<vmem>>, %arg11: memref<1x128xf32, #tpu.memory_space<vmem>>, %arg12: memref<128x32xbf16, #tpu.memory_space<vmem>>, %arg13: memref<1x32xf32, #tpu.memory_space<vmem>>, %arg14: memref<32x128xbf16, #tpu.memory_space<vmem>>, %arg15: memref<1x128xf32, #tpu.memory_space<vmem>>, %arg16: memref<8x128xf32, #tpu.memory_space<vmem>>) attributes {dimension_semantics = [#tpu.dimension_semantics<parallel>], iteration_bounds = array<i64: 3>, scalar_prefetch = 0 : i64, scratch_operands = 0 : i64, tpu.core_type = #tpu.core_type<tc>, window_params = [{transform_indices = @transform_0, window_bounds = array<i64: 8, 16>}, {pipeline_mode = #tpu.pipeline_mode<synchronous>, transform_indices = @transform_1, window_bounds = array<i64: 3, 64>}, {pipeline_mode = #tpu.pipeline_mode<synchronous>, transform_indices = @transform_2, window_bounds = array<i64: 1, 64>}, {pipeline_mode = #tpu.pipeline_mode<synchronous>, transform_indices = @transform_3, window_bounds = array<i64: 192, 128>}, {pipeline_mode = #tpu.pipeline_mode<synchronous>, transform_indices = @transform_4, window_bounds = array<i64: 1, 128>}, {pipeline_mode = #tpu.pipeline_mode<synchronous>, transform_indices = @transform_5, window_bounds = array<i64: 384, 256>}, {pipeline_mode = #tpu.pipeline_mode<synchronous>, transform_indices = @transform_6, window_bounds = array<i64: 1, 256>}, {pipeline_mode = #tpu.pipeline_mode<synchronous>, transform_indices = @transform_7, window_bounds = array<i64: 4, 256, 512>}, {pipeline_mode = #tpu.pipeline_mode<synchronous>, transform_indices = @transform_8, window_bounds = array<i64: 1, 512>}, {pipeline_mode = #tpu.pipeline_mode<synchronous>, transform_indices = @transform_9, window_bounds = array<i64: 512, 128>}, {pipeline_mode = #tpu.pipeline_mode<synchronous>, transform_indices = @transform_10, window_bounds = array<i64: 1, 128>}, {pipeline_mode = #tpu.pipeline_mode<synchronous>, transform_indices = @transform_11, window_bounds = array<i64: 128, 32>}, {pipeline_mode = #tpu.pipeline_mode<synchronous>, transform_indices = @transform_12, window_bounds = array<i64: 1, 32>}, {pipeline_mode = #tpu.pipeline_mode<synchronous>, transform_indices = @transform_13, window_bounds = array<i64: 32, 128>}, {pipeline_mode = #tpu.pipeline_mode<synchronous>, transform_indices = @transform_14, window_bounds = array<i64: 1, 128>}, {transform_indices = @transform_15, window_bounds = array<i64: 8, 128>}]} {
    %c0 = arith.constant 0 : index
    %c0_0 = arith.constant 0 : index
    %0 = vector.load %arg1[%c0, %c0_0] : memref<8x16xf32, #tpu.memory_space<vmem>>, vector<8x16xf32>
    %c0_1 = arith.constant 0 : index
    %c0_2 = arith.constant 0 : index
    %1 = vector.load %arg2[%c0_1, %c0_2] : memref<3x64xf32, #tpu.memory_space<vmem>>, vector<3x64xf32>
    %c0_3 = arith.constant 0 : index
    %c0_4 = arith.constant 0 : index
    %2 = vector.load %arg3[%c0_3, %c0_4] : memref<1x64xf32, #tpu.memory_space<vmem>>, vector<1x64xf32>
    %3 = vector.extract_strided_slice %0 {offsets = [0, 0], sizes = [8, 1], strides = [1, 1]} : vector<8x16xf32> to vector<8x1xf32>
    %4 = vector.extract_strided_slice %0 {offsets = [0, 1], sizes = [8, 1], strides = [1, 1]} : vector<8x16xf32> to vector<8x1xf32>
    %5 = vector.extract_strided_slice %0 {offsets = [0, 2], sizes = [8, 1], strides = [1, 1]} : vector<8x16xf32> to vector<8x1xf32>
    %6 = vector.extract_strided_slice %0 {offsets = [0, 3], sizes = [8, 1], strides = [1, 1]} : vector<8x16xf32> to vector<8x1xf32>
    %7 = vector.extract_strided_slice %0 {offsets = [0, 4], sizes = [8, 1], strides = [1, 1]} : vector<8x16xf32> to vector<8x1xf32>
    %8 = vector.extract_strided_slice %0 {offsets = [0, 5], sizes = [8, 1], strides = [1, 1]} : vector<8x16xf32> to vector<8x1xf32>
    %9 = vector.extract_strided_slice %0 {offsets = [0, 6], sizes = [8, 1], strides = [1, 1]} : vector<8x16xf32> to vector<8x1xf32>
    %10 = vector.extract_strided_slice %0 {offsets = [0, 7], sizes = [8, 1], strides = [1, 1]} : vector<8x16xf32> to vector<8x1xf32>
    %11 = vector.extract_strided_slice %0 {offsets = [0, 8], sizes = [8, 1], strides = [1, 1]} : vector<8x16xf32> to vector<8x1xf32>
    %12 = vector.extract_strided_slice %0 {offsets = [0, 9], sizes = [8, 1], strides = [1, 1]} : vector<8x16xf32> to vector<8x1xf32>
    %13 = vector.extract_strided_slice %0 {offsets = [0, 10], sizes = [8, 1], strides = [1, 1]} : vector<8x16xf32> to vector<8x1xf32>
    %14 = vector.extract_strided_slice %0 {offsets = [0, 11], sizes = [8, 1], strides = [1, 1]} : vector<8x16xf32> to vector<8x1xf32>
    %15 = vector.extract_strided_slice %0 {offsets = [0, 12], sizes = [8, 1], strides = [1, 1]} : vector<8x16xf32> to vector<8x1xf32>
    %16 = vector.extract_strided_slice %0 {offsets = [0, 13], sizes = [8, 1], strides = [1, 1]} : vector<8x16xf32> to vector<8x1xf32>
    %17 = vector.extract_strided_slice %0 {offsets = [0, 14], sizes = [8, 1], strides = [1, 1]} : vector<8x16xf32> to vector<8x1xf32>
    %18 = vector.extract_strided_slice %0 {offsets = [0, 15], sizes = [8, 1], strides = [1, 1]} : vector<8x16xf32> to vector<8x1xf32>
    %19 = vector.extract_strided_slice %1 {offsets = [1, 0], sizes = [1, 64], strides = [1, 1]} : vector<3x64xf32> to vector<1x64xf32>
    %20 = vector.broadcast %3 : vector<8x1xf32> to vector<8x64xf32>
    %21 = vector.broadcast %19 : vector<1x64xf32> to vector<8x64xf32>
    %22 = arith.mulf %20, %21 : vector<8x64xf32>
    %23 = vector.extract_strided_slice %1 {offsets = [2, 0], sizes = [1, 64], strides = [1, 1]} : vector<3x64xf32> to vector<1x64xf32>
    %24 = vector.broadcast %4 : vector<8x1xf32> to vector<8x64xf32>
    %25 = vector.broadcast %23 : vector<1x64xf32> to vector<8x64xf32>
    %26 = arith.mulf %24, %25 : vector<8x64xf32>
    %27 = arith.addf %22, %26 : vector<8x64xf32>
    %28 = vector.broadcast %2 : vector<1x64xf32> to vector<8x64xf32>
    %29 = arith.addf %27, %28 : vector<8x64xf32>
    %cst = arith.constant 0.000000e+00 : f32
    %30 = vector.broadcast %cst : f32 to vector<8x64xf32>
    %31 = arith.maximumf %29, %30 : vector<8x64xf32>
    %32 = vector.extract_strided_slice %1 {offsets = [1, 0], sizes = [1, 64], strides = [1, 1]} : vector<3x64xf32> to vector<1x64xf32>
    %33 = vector.broadcast %4 : vector<8x1xf32> to vector<8x64xf32>
    %34 = vector.broadcast %32 : vector<1x64xf32> to vector<8x64xf32>
    %35 = arith.mulf %33, %34 : vector<8x64xf32>
    %36 = vector.extract_strided_slice %1 {offsets = [0, 0], sizes = [1, 64], strides = [1, 1]} : vector<3x64xf32> to vector<1x64xf32>
    %37 = vector.broadcast %3 : vector<8x1xf32> to vector<8x64xf32>
    %38 = vector.broadcast %36 : vector<1x64xf32> to vector<8x64xf32>
    %39 = arith.mulf %37, %38 : vector<8x64xf32>
    %40 = arith.addf %35, %39 : vector<8x64xf32>
    %41 = vector.extract_strided_slice %1 {offsets = [2, 0], sizes = [1, 64], strides = [1, 1]} : vector<3x64xf32> to vector<1x64xf32>
    %42 = vector.broadcast %5 : vector<8x1xf32> to vector<8x64xf32>
    %43 = vector.broadcast %41 : vector<1x64xf32> to vector<8x64xf32>
    %44 = arith.mulf %42, %43 : vector<8x64xf32>
    %45 = arith.addf %40, %44 : vector<8x64xf32>
    %46 = vector.broadcast %2 : vector<1x64xf32> to vector<8x64xf32>
    %47 = arith.addf %45, %46 : vector<8x64xf32>
    %cst_5 = arith.constant 0.000000e+00 : f32
    %48 = vector.broadcast %cst_5 : f32 to vector<8x64xf32>
    %49 = arith.maximumf %47, %48 : vector<8x64xf32>
    %50 = vector.extract_strided_slice %1 {offsets = [1, 0], sizes = [1, 64], strides = [1, 1]} : vector<3x64xf32> to vector<1x64xf32>
    %51 = vector.broadcast %5 : vector<8x1xf32> to vector<8x64xf32>
    %52 = vector.broadcast %50 : vector<1x64xf32> to vector<8x64xf32>
    %53 = arith.mulf %51, %52 : vector<8x64xf32>
    %54 = vector.extract_strided_slice %1 {offsets = [0, 0], sizes = [1, 64], strides = [1, 1]} : vector<3x64xf32> to vector<1x64xf32>
    %55 = vector.broadcast %4 : vector<8x1xf32> to vector<8x64xf32>
    %56 = vector.broadcast %54 : vector<1x64xf32> to vector<8x64xf32>
    %57 = arith.mulf %55, %56 : vector<8x64xf32>
    %58 = arith.addf %53, %57 : vector<8x64xf32>
    %59 = vector.extract_strided_slice %1 {offsets = [2, 0], sizes = [1, 64], strides = [1, 1]} : vector<3x64xf32> to vector<1x64xf32>
    %60 = vector.broadcast %6 : vector<8x1xf32> to vector<8x64xf32>
    %61 = vector.broadcast %59 : vector<1x64xf32> to vector<8x64xf32>
    %62 = arith.mulf %60, %61 : vector<8x64xf32>
    %63 = arith.addf %58, %62 : vector<8x64xf32>
    %64 = vector.broadcast %2 : vector<1x64xf32> to vector<8x64xf32>
    %65 = arith.addf %63, %64 : vector<8x64xf32>
    %cst_6 = arith.constant 0.000000e+00 : f32
    %66 = vector.broadcast %cst_6 : f32 to vector<8x64xf32>
    %67 = arith.maximumf %65, %66 : vector<8x64xf32>
    %68 = vector.extract_strided_slice %1 {offsets = [1, 0], sizes = [1, 64], strides = [1, 1]} : vector<3x64xf32> to vector<1x64xf32>
    %69 = vector.broadcast %6 : vector<8x1xf32> to vector<8x64xf32>
    %70 = vector.broadcast %68 : vector<1x64xf32> to vector<8x64xf32>
    %71 = arith.mulf %69, %70 : vector<8x64xf32>
    %72 = vector.extract_strided_slice %1 {offsets = [0, 0], sizes = [1, 64], strides = [1, 1]} : vector<3x64xf32> to vector<1x64xf32>
    %73 = vector.broadcast %5 : vector<8x1xf32> to vector<8x64xf32>
    %74 = vector.broadcast %72 : vector<1x64xf32> to vector<8x64xf32>
    %75 = arith.mulf %73, %74 : vector<8x64xf32>
    %76 = arith.addf %71, %75 : vector<8x64xf32>
    %77 = vector.extract_strided_slice %1 {offsets = [2, 0], sizes = [1, 64], strides = [1, 1]} : vector<3x64xf32> to vector<1x64xf32>
    %78 = vector.broadcast %7 : vector<8x1xf32> to vector<8x64xf32>
    %79 = vector.broadcast %77 : vector<1x64xf32> to vector<8x64xf32>
    %80 = arith.mulf %78, %79 : vector<8x64xf32>
    %81 = arith.addf %76, %80 : vector<8x64xf32>
    %82 = vector.broadcast %2 : vector<1x64xf32> to vector<8x64xf32>
    %83 = arith.addf %81, %82 : vector<8x64xf32>
    %cst_7 = arith.constant 0.000000e+00 : f32
    %84 = vector.broadcast %cst_7 : f32 to vector<8x64xf32>
    %85 = arith.maximumf %83, %84 : vector<8x64xf32>
    %86 = vector.extract_strided_slice %1 {offsets = [1, 0], sizes = [1, 64], strides = [1, 1]} : vector<3x64xf32> to vector<1x64xf32>
    %87 = vector.broadcast %7 : vector<8x1xf32> to vector<8x64xf32>
    %88 = vector.broadcast %86 : vector<1x64xf32> to vector<8x64xf32>
    %89 = arith.mulf %87, %88 : vector<8x64xf32>
    %90 = vector.extract_strided_slice %1 {offsets = [0, 0], sizes = [1, 64], strides = [1, 1]} : vector<3x64xf32> to vector<1x64xf32>
    %91 = vector.broadcast %6 : vector<8x1xf32> to vector<8x64xf32>
    %92 = vector.broadcast %90 : vector<1x64xf32> to vector<8x64xf32>
    %93 = arith.mulf %91, %92 : vector<8x64xf32>
    %94 = arith.addf %89, %93 : vector<8x64xf32>
    %95 = vector.extract_strided_slice %1 {offsets = [2, 0], sizes = [1, 64], strides = [1, 1]} : vector<3x64xf32> to vector<1x64xf32>
    %96 = vector.broadcast %8 : vector<8x1xf32> to vector<8x64xf32>
    %97 = vector.broadcast %95 : vector<1x64xf32> to vector<8x64xf32>
    %98 = arith.mulf %96, %97 : vector<8x64xf32>
    %99 = arith.addf %94, %98 : vector<8x64xf32>
    %100 = vector.broadcast %2 : vector<1x64xf32> to vector<8x64xf32>
    %101 = arith.addf %99, %100 : vector<8x64xf32>
    %cst_8 = arith.constant 0.000000e+00 : f32
    %102 = vector.broadcast %cst_8 : f32 to vector<8x64xf32>
    %103 = arith.maximumf %101, %102 : vector<8x64xf32>
    %104 = vector.extract_strided_slice %1 {offsets = [1, 0], sizes = [1, 64], strides = [1, 1]} : vector<3x64xf32> to vector<1x64xf32>
    %105 = vector.broadcast %8 : vector<8x1xf32> to vector<8x64xf32>
    %106 = vector.broadcast %104 : vector<1x64xf32> to vector<8x64xf32>
    %107 = arith.mulf %105, %106 : vector<8x64xf32>
    %108 = vector.extract_strided_slice %1 {offsets = [0, 0], sizes = [1, 64], strides = [1, 1]} : vector<3x64xf32> to vector<1x64xf32>
    %109 = vector.broadcast %7 : vector<8x1xf32> to vector<8x64xf32>
    %110 = vector.broadcast %108 : vector<1x64xf32> to vector<8x64xf32>
    %111 = arith.mulf %109, %110 : vector<8x64xf32>
    %112 = arith.addf %107, %111 : vector<8x64xf32>
    %113 = vector.extract_strided_slice %1 {offsets = [2, 0], sizes = [1, 64], strides = [1, 1]} : vector<3x64xf32> to vector<1x64xf32>
    %114 = vector.broadcast %9 : vector<8x1xf32> to vector<8x64xf32>
    %115 = vector.broadcast %113 : vector<1x64xf32> to vector<8x64xf32>
    %116 = arith.mulf %114, %115 : vector<8x64xf32>
    %117 = arith.addf %112, %116 : vector<8x64xf32>
    %118 = vector.broadcast %2 : vector<1x64xf32> to vector<8x64xf32>
    %119 = arith.addf %117, %118 : vector<8x64xf32>
    %cst_9 = arith.constant 0.000000e+00 : f32
    %120 = vector.broadcast %cst_9 : f32 to vector<8x64xf32>
    %121 = arith.maximumf %119, %120 : vector<8x64xf32>
    %122 = vector.extract_strided_slice %1 {offsets = [1, 0], sizes = [1, 64], strides = [1, 1]} : vector<3x64xf32> to vector<1x64xf32>
    %123 = vector.broadcast %9 : vector<8x1xf32> to vector<8x64xf32>
    %124 = vector.broadcast %122 : vector<1x64xf32> to vector<8x64xf32>
    %125 = arith.mulf %123, %124 : vector<8x64xf32>
    %126 = vector.extract_strided_slice %1 {offsets = [0, 0], sizes = [1, 64], strides = [1, 1]} : vector<3x64xf32> to vector<1x64xf32>
    %127 = vector.broadcast %8 : vector<8x1xf32> to vector<8x64xf32>
    %128 = vector.broadcast %126 : vector<1x64xf32> to vector<8x64xf32>
    %129 = arith.mulf %127, %128 : vector<8x64xf32>
    %130 = arith.addf %125, %129 : vector<8x64xf32>
    %131 = vector.extract_strided_slice %1 {offsets = [2, 0], sizes = [1, 64], strides = [1, 1]} : vector<3x64xf32> to vector<1x64xf32>
    %132 = vector.broadcast %10 : vector<8x1xf32> to vector<8x64xf32>
    %133 = vector.broadcast %131 : vector<1x64xf32> to vector<8x64xf32>
    %134 = arith.mulf %132, %133 : vector<8x64xf32>
    %135 = arith.addf %130, %134 : vector<8x64xf32>
    %136 = vector.broadcast %2 : vector<1x64xf32> to vector<8x64xf32>
    %137 = arith.addf %135, %136 : vector<8x64xf32>
    %cst_10 = arith.constant 0.000000e+00 : f32
    %138 = vector.broadcast %cst_10 : f32 to vector<8x64xf32>
    %139 = arith.maximumf %137, %138 : vector<8x64xf32>
    %140 = vector.extract_strided_slice %1 {offsets = [1, 0], sizes = [1, 64], strides = [1, 1]} : vector<3x64xf32> to vector<1x64xf32>
    %141 = vector.broadcast %10 : vector<8x1xf32> to vector<8x64xf32>
    %142 = vector.broadcast %140 : vector<1x64xf32> to vector<8x64xf32>
    %143 = arith.mulf %141, %142 : vector<8x64xf32>
    %144 = vector.extract_strided_slice %1 {offsets = [0, 0], sizes = [1, 64], strides = [1, 1]} : vector<3x64xf32> to vector<1x64xf32>
    %145 = vector.broadcast %9 : vector<8x1xf32> to vector<8x64xf32>
    %146 = vector.broadcast %144 : vector<1x64xf32> to vector<8x64xf32>
    %147 = arith.mulf %145, %146 : vector<8x64xf32>
    %148 = arith.addf %143, %147 : vector<8x64xf32>
    %149 = vector.extract_strided_slice %1 {offsets = [2, 0], sizes = [1, 64], strides = [1, 1]} : vector<3x64xf32> to vector<1x64xf32>
    %150 = vector.broadcast %11 : vector<8x1xf32> to vector<8x64xf32>
    %151 = vector.broadcast %149 : vector<1x64xf32> to vector<8x64xf32>
    %152 = arith.mulf %150, %151 : vector<8x64xf32>
    %153 = arith.addf %148, %152 : vector<8x64xf32>
    %154 = vector.broadcast %2 : vector<1x64xf32> to vector<8x64xf32>
    %155 = arith.addf %153, %154 : vector<8x64xf32>
    %cst_11 = arith.constant 0.000000e+00 : f32
    %156 = vector.broadcast %cst_11 : f32 to vector<8x64xf32>
    %157 = arith.maximumf %155, %156 : vector<8x64xf32>
    %158 = vector.extract_strided_slice %1 {offsets = [1, 0], sizes = [1, 64], strides = [1, 1]} : vector<3x64xf32> to vector<1x64xf32>
    %159 = vector.broadcast %11 : vector<8x1xf32> to vector<8x64xf32>
    %160 = vector.broadcast %158 : vector<1x64xf32> to vector<8x64xf32>
    %161 = arith.mulf %159, %160 : vector<8x64xf32>
    %162 = vector.extract_strided_slice %1 {offsets = [0, 0], sizes = [1, 64], strides = [1, 1]} : vector<3x64xf32> to vector<1x64xf32>
    %163 = vector.broadcast %10 : vector<8x1xf32> to vector<8x64xf32>
    %164 = vector.broadcast %162 : vector<1x64xf32> to vector<8x64xf32>
    %165 = arith.mulf %163, %164 : vector<8x64xf32>
    %166 = arith.addf %161, %165 : vector<8x64xf32>
    %167 = vector.extract_strided_slice %1 {offsets = [2, 0], sizes = [1, 64], strides = [1, 1]} : vector<3x64xf32> to vector<1x64xf32>
    %168 = vector.broadcast %12 : vector<8x1xf32> to vector<8x64xf32>
    %169 = vector.broadcast %167 : vector<1x64xf32> to vector<8x64xf32>
    %170 = arith.mulf %168, %169 : vector<8x64xf32>
    %171 = arith.addf %166, %170 : vector<8x64xf32>
    %172 = vector.broadcast %2 : vector<1x64xf32> to vector<8x64xf32>
    %173 = arith.addf %171, %172 : vector<8x64xf32>
    %cst_12 = arith.constant 0.000000e+00 : f32
    %174 = vector.broadcast %cst_12 : f32 to vector<8x64xf32>
    %175 = arith.maximumf %173, %174 : vector<8x64xf32>
    %176 = vector.extract_strided_slice %1 {offsets = [1, 0], sizes = [1, 64], strides = [1, 1]} : vector<3x64xf32> to vector<1x64xf32>
    %177 = vector.broadcast %12 : vector<8x1xf32> to vector<8x64xf32>
    %178 = vector.broadcast %176 : vector<1x64xf32> to vector<8x64xf32>
    %179 = arith.mulf %177, %178 : vector<8x64xf32>
    %180 = vector.extract_strided_slice %1 {offsets = [0, 0], sizes = [1, 64], strides = [1, 1]} : vector<3x64xf32> to vector<1x64xf32>
    %181 = vector.broadcast %11 : vector<8x1xf32> to vector<8x64xf32>
    %182 = vector.broadcast %180 : vector<1x64xf32> to vector<8x64xf32>
    %183 = arith.mulf %181, %182 : vector<8x64xf32>
    %184 = arith.addf %179, %183 : vector<8x64xf32>
    %185 = vector.extract_strided_slice %1 {offsets = [2, 0], sizes = [1, 64], strides = [1, 1]} : vector<3x64xf32> to vector<1x64xf32>
    %186 = vector.broadcast %13 : vector<8x1xf32> to vector<8x64xf32>
    %187 = vector.broadcast %185 : vector<1x64xf32> to vector<8x64xf32>
    %188 = arith.mulf %186, %187 : vector<8x64xf32>
    %189 = arith.addf %184, %188 : vector<8x64xf32>
    %190 = vector.broadcast %2 : vector<1x64xf32> to vector<8x64xf32>
    %191 = arith.addf %189, %190 : vector<8x64xf32>
    %cst_13 = arith.constant 0.000000e+00 : f32
    %192 = vector.broadcast %cst_13 : f32 to vector<8x64xf32>
    %193 = arith.maximumf %191, %192 : vector<8x64xf32>
    %194 = vector.extract_strided_slice %1 {offsets = [1, 0], sizes = [1, 64], strides = [1, 1]} : vector<3x64xf32> to vector<1x64xf32>
    %195 = vector.broadcast %13 : vector<8x1xf32> to vector<8x64xf32>
    %196 = vector.broadcast %194 : vector<1x64xf32> to vector<8x64xf32>
    %197 = arith.mulf %195, %196 : vector<8x64xf32>
    %198 = vector.extract_strided_slice %1 {offsets = [0, 0], sizes = [1, 64], strides = [1, 1]} : vector<3x64xf32> to vector<1x64xf32>
    %199 = vector.broadcast %12 : vector<8x1xf32> to vector<8x64xf32>
    %200 = vector.broadcast %198 : vector<1x64xf32> to vector<8x64xf32>
    %201 = arith.mulf %199, %200 : vector<8x64xf32>
    %202 = arith.addf %197, %201 : vector<8x64xf32>
    %203 = vector.extract_strided_slice %1 {offsets = [2, 0], sizes = [1, 64], strides = [1, 1]} : vector<3x64xf32> to vector<1x64xf32>
    %204 = vector.broadcast %14 : vector<8x1xf32> to vector<8x64xf32>
    %205 = vector.broadcast %203 : vector<1x64xf32> to vector<8x64xf32>
    %206 = arith.mulf %204, %205 : vector<8x64xf32>
    %207 = arith.addf %202, %206 : vector<8x64xf32>
    %208 = vector.broadcast %2 : vector<1x64xf32> to vector<8x64xf32>
    %209 = arith.addf %207, %208 : vector<8x64xf32>
    %cst_14 = arith.constant 0.000000e+00 : f32
    %210 = vector.broadcast %cst_14 : f32 to vector<8x64xf32>
    %211 = arith.maximumf %209, %210 : vector<8x64xf32>
    %212 = vector.extract_strided_slice %1 {offsets = [1, 0], sizes = [1, 64], strides = [1, 1]} : vector<3x64xf32> to vector<1x64xf32>
    %213 = vector.broadcast %14 : vector<8x1xf32> to vector<8x64xf32>
    %214 = vector.broadcast %212 : vector<1x64xf32> to vector<8x64xf32>
    %215 = arith.mulf %213, %214 : vector<8x64xf32>
    %216 = vector.extract_strided_slice %1 {offsets = [0, 0], sizes = [1, 64], strides = [1, 1]} : vector<3x64xf32> to vector<1x64xf32>
    %217 = vector.broadcast %13 : vector<8x1xf32> to vector<8x64xf32>
    %218 = vector.broadcast %216 : vector<1x64xf32> to vector<8x64xf32>
    %219 = arith.mulf %217, %218 : vector<8x64xf32>
    %220 = arith.addf %215, %219 : vector<8x64xf32>
    %221 = vector.extract_strided_slice %1 {offsets = [2, 0], sizes = [1, 64], strides = [1, 1]} : vector<3x64xf32> to vector<1x64xf32>
    %222 = vector.broadcast %15 : vector<8x1xf32> to vector<8x64xf32>
    %223 = vector.broadcast %221 : vector<1x64xf32> to vector<8x64xf32>
    %224 = arith.mulf %222, %223 : vector<8x64xf32>
    %225 = arith.addf %220, %224 : vector<8x64xf32>
    %226 = vector.broadcast %2 : vector<1x64xf32> to vector<8x64xf32>
    %227 = arith.addf %225, %226 : vector<8x64xf32>
    %cst_15 = arith.constant 0.000000e+00 : f32
    %228 = vector.broadcast %cst_15 : f32 to vector<8x64xf32>
    %229 = arith.maximumf %227, %228 : vector<8x64xf32>
    %230 = vector.extract_strided_slice %1 {offsets = [1, 0], sizes = [1, 64], strides = [1, 1]} : vector<3x64xf32> to vector<1x64xf32>
    %231 = vector.broadcast %15 : vector<8x1xf32> to vector<8x64xf32>
    %232 = vector.broadcast %230 : vector<1x64xf32> to vector<8x64xf32>
    %233 = arith.mulf %231, %232 : vector<8x64xf32>
    %234 = vector.extract_strided_slice %1 {offsets = [0, 0], sizes = [1, 64], strides = [1, 1]} : vector<3x64xf32> to vector<1x64xf32>
    %235 = vector.broadcast %14 : vector<8x1xf32> to vector<8x64xf32>
    %236 = vector.broadcast %234 : vector<1x64xf32> to vector<8x64xf32>
    %237 = arith.mulf %235, %236 : vector<8x64xf32>
    %238 = arith.addf %233, %237 : vector<8x64xf32>
    %239 = vector.extract_strided_slice %1 {offsets = [2, 0], sizes = [1, 64], strides = [1, 1]} : vector<3x64xf32> to vector<1x64xf32>
    %240 = vector.broadcast %16 : vector<8x1xf32> to vector<8x64xf32>
    %241 = vector.broadcast %239 : vector<1x64xf32> to vector<8x64xf32>
    %242 = arith.mulf %240, %241 : vector<8x64xf32>
    %243 = arith.addf %238, %242 : vector<8x64xf32>
    %244 = vector.broadcast %2 : vector<1x64xf32> to vector<8x64xf32>
    %245 = arith.addf %243, %244 : vector<8x64xf32>
    %cst_16 = arith.constant 0.000000e+00 : f32
    %246 = vector.broadcast %cst_16 : f32 to vector<8x64xf32>
    %247 = arith.maximumf %245, %246 : vector<8x64xf32>
    %248 = vector.extract_strided_slice %1 {offsets = [1, 0], sizes = [1, 64], strides = [1, 1]} : vector<3x64xf32> to vector<1x64xf32>
    %249 = vector.broadcast %16 : vector<8x1xf32> to vector<8x64xf32>
    %250 = vector.broadcast %248 : vector<1x64xf32> to vector<8x64xf32>
    %251 = arith.mulf %249, %250 : vector<8x64xf32>
    %252 = vector.extract_strided_slice %1 {offsets = [0, 0], sizes = [1, 64], strides = [1, 1]} : vector<3x64xf32> to vector<1x64xf32>
    %253 = vector.broadcast %15 : vector<8x1xf32> to vector<8x64xf32>
    %254 = vector.broadcast %252 : vector<1x64xf32> to vector<8x64xf32>
    %255 = arith.mulf %253, %254 : vector<8x64xf32>
    %256 = arith.addf %251, %255 : vector<8x64xf32>
    %257 = vector.extract_strided_slice %1 {offsets = [2, 0], sizes = [1, 64], strides = [1, 1]} : vector<3x64xf32> to vector<1x64xf32>
    %258 = vector.broadcast %17 : vector<8x1xf32> to vector<8x64xf32>
    %259 = vector.broadcast %257 : vector<1x64xf32> to vector<8x64xf32>
    %260 = arith.mulf %258, %259 : vector<8x64xf32>
    %261 = arith.addf %256, %260 : vector<8x64xf32>
    %262 = vector.broadcast %2 : vector<1x64xf32> to vector<8x64xf32>
    %263 = arith.addf %261, %262 : vector<8x64xf32>
    %cst_17 = arith.constant 0.000000e+00 : f32
    %264 = vector.broadcast %cst_17 : f32 to vector<8x64xf32>
    %265 = arith.maximumf %263, %264 : vector<8x64xf32>
    %266 = vector.extract_strided_slice %1 {offsets = [1, 0], sizes = [1, 64], strides = [1, 1]} : vector<3x64xf32> to vector<1x64xf32>
    %267 = vector.broadcast %17 : vector<8x1xf32> to vector<8x64xf32>
    %268 = vector.broadcast %266 : vector<1x64xf32> to vector<8x64xf32>
    %269 = arith.mulf %267, %268 : vector<8x64xf32>
    %270 = vector.extract_strided_slice %1 {offsets = [0, 0], sizes = [1, 64], strides = [1, 1]} : vector<3x64xf32> to vector<1x64xf32>
    %271 = vector.broadcast %16 : vector<8x1xf32> to vector<8x64xf32>
    %272 = vector.broadcast %270 : vector<1x64xf32> to vector<8x64xf32>
    %273 = arith.mulf %271, %272 : vector<8x64xf32>
    %274 = arith.addf %269, %273 : vector<8x64xf32>
    %275 = vector.extract_strided_slice %1 {offsets = [2, 0], sizes = [1, 64], strides = [1, 1]} : vector<3x64xf32> to vector<1x64xf32>
    %276 = vector.broadcast %18 : vector<8x1xf32> to vector<8x64xf32>
    %277 = vector.broadcast %275 : vector<1x64xf32> to vector<8x64xf32>
    %278 = arith.mulf %276, %277 : vector<8x64xf32>
    %279 = arith.addf %274, %278 : vector<8x64xf32>
    %280 = vector.broadcast %2 : vector<1x64xf32> to vector<8x64xf32>
    %281 = arith.addf %279, %280 : vector<8x64xf32>
    %cst_18 = arith.constant 0.000000e+00 : f32
    %282 = vector.broadcast %cst_18 : f32 to vector<8x64xf32>
    %283 = arith.maximumf %281, %282 : vector<8x64xf32>
    %284 = vector.extract_strided_slice %1 {offsets = [1, 0], sizes = [1, 64], strides = [1, 1]} : vector<3x64xf32> to vector<1x64xf32>
    %285 = vector.broadcast %18 : vector<8x1xf32> to vector<8x64xf32>
    %286 = vector.broadcast %284 : vector<1x64xf32> to vector<8x64xf32>
    %287 = arith.mulf %285, %286 : vector<8x64xf32>
    %288 = vector.extract_strided_slice %1 {offsets = [0, 0], sizes = [1, 64], strides = [1, 1]} : vector<3x64xf32> to vector<1x64xf32>
    %289 = vector.broadcast %17 : vector<8x1xf32> to vector<8x64xf32>
    %290 = vector.broadcast %288 : vector<1x64xf32> to vector<8x64xf32>
    %291 = arith.mulf %289, %290 : vector<8x64xf32>
    %292 = arith.addf %287, %291 : vector<8x64xf32>
    %293 = vector.broadcast %2 : vector<1x64xf32> to vector<8x64xf32>
    %294 = arith.addf %292, %293 : vector<8x64xf32>
    %cst_19 = arith.constant 0.000000e+00 : f32
    %295 = vector.broadcast %cst_19 : f32 to vector<8x64xf32>
    %296 = arith.maximumf %294, %295 : vector<8x64xf32>
    %297 = arith.maximumf %31, %49 : vector<8x64xf32>
    %298 = arith.maximumf %67, %85 : vector<8x64xf32>
    %299 = arith.maximumf %103, %121 : vector<8x64xf32>
    %300 = arith.maximumf %139, %157 : vector<8x64xf32>
    %301 = arith.maximumf %175, %193 : vector<8x64xf32>
    %302 = arith.maximumf %211, %229 : vector<8x64xf32>
    %303 = arith.maximumf %247, %265 : vector<8x64xf32>
    %304 = arith.maximumf %283, %296 : vector<8x64xf32>
    %c0_20 = arith.constant 0 : index
    %c0_21 = arith.constant 0 : index
    %305 = vector.load %arg5[%c0_20, %c0_21] : memref<1x128xf32, #tpu.memory_space<vmem>>, vector<1x128xf32>
    %306 = tpu.concatenate %297, %298 in 1 : vector<8x64xf32>, vector<8x64xf32> -> vector<8x128xf32>
    %307 = arith.truncf %306 : vector<8x128xf32> to vector<8x128xbf16>
    %c64 = arith.constant 64 : index
    %c0_22 = arith.constant 0 : index
    %308 = vector.load %arg4[%c64, %c0_22] : memref<192x128xbf16, #tpu.memory_space<vmem>>, vector<128x128xbf16>
    %cst_23 = arith.constant dense<0.000000e+00> : vector<8x128xf32>
    %309 = tpu.matmul %307, %308, %cst_23 {dimension_numbers = #tpu.dot_dimension_numbers<[1], [0], [0], [1], [0, 0, 1, 1], [], []>} : vector<8x128xbf16>, vector<128x128xbf16>, vector<8x128xf32> -> vector<8x128xf32>
    %310 = vector.broadcast %305 : vector<1x128xf32> to vector<8x128xf32>
    %311 = arith.addf %309, %310 : vector<8x128xf32>
    %cst_24 = arith.constant 0.000000e+00 : f32
    %312 = vector.broadcast %cst_24 : f32 to vector<8x128xf32>
    %313 = arith.maximumf %311, %312 : vector<8x128xf32>
    %314 = tpu.concatenate %297, %298, %299 in 1 : vector<8x64xf32>, vector<8x64xf32>, vector<8x64xf32> -> vector<8x192xf32>
    %315 = arith.truncf %314 : vector<8x192xf32> to vector<8x192xbf16>
    %c0_25 = arith.constant 0 : index
    %c0_26 = arith.constant 0 : index
    %316 = vector.load %arg4[%c0_25, %c0_26] : memref<192x128xbf16, #tpu.memory_space<vmem>>, vector<192x128xbf16>
    %cst_27 = arith.constant dense<0.000000e+00> : vector<8x128xf32>
    %317 = tpu.matmul %315, %316, %cst_27 {dimension_numbers = #tpu.dot_dimension_numbers<[1], [0], [0], [1], [0, 0, 1, 1], [], []>} : vector<8x192xbf16>, vector<192x128xbf16>, vector<8x128xf32> -> vector<8x128xf32>
    %318 = vector.broadcast %305 : vector<1x128xf32> to vector<8x128xf32>
    %319 = arith.addf %317, %318 : vector<8x128xf32>
    %cst_28 = arith.constant 0.000000e+00 : f32
    %320 = vector.broadcast %cst_28 : f32 to vector<8x128xf32>
    %321 = arith.maximumf %319, %320 : vector<8x128xf32>
    %322 = tpu.concatenate %298, %299, %300 in 1 : vector<8x64xf32>, vector<8x64xf32>, vector<8x64xf32> -> vector<8x192xf32>
    %323 = arith.truncf %322 : vector<8x192xf32> to vector<8x192xbf16>
    %c0_29 = arith.constant 0 : index
    %c0_30 = arith.constant 0 : index
    %324 = vector.load %arg4[%c0_29, %c0_30] : memref<192x128xbf16, #tpu.memory_space<vmem>>, vector<192x128xbf16>
    %cst_31 = arith.constant dense<0.000000e+00> : vector<8x128xf32>
    %325 = tpu.matmul %323, %324, %cst_31 {dimension_numbers = #tpu.dot_dimension_numbers<[1], [0], [0], [1], [0, 0, 1, 1], [], []>} : vector<8x192xbf16>, vector<192x128xbf16>, vector<8x128xf32> -> vector<8x128xf32>
    %326 = vector.broadcast %305 : vector<1x128xf32> to vector<8x128xf32>
    %327 = arith.addf %325, %326 : vector<8x128xf32>
    %cst_32 = arith.constant 0.000000e+00 : f32
    %328 = vector.broadcast %cst_32 : f32 to vector<8x128xf32>
    %329 = arith.maximumf %327, %328 : vector<8x128xf32>
    %330 = tpu.concatenate %299, %300, %301 in 1 : vector<8x64xf32>, vector<8x64xf32>, vector<8x64xf32> -> vector<8x192xf32>
    %331 = arith.truncf %330 : vector<8x192xf32> to vector<8x192xbf16>
    %c0_33 = arith.constant 0 : index
    %c0_34 = arith.constant 0 : index
    %332 = vector.load %arg4[%c0_33, %c0_34] : memref<192x128xbf16, #tpu.memory_space<vmem>>, vector<192x128xbf16>
    %cst_35 = arith.constant dense<0.000000e+00> : vector<8x128xf32>
    %333 = tpu.matmul %331, %332, %cst_35 {dimension_numbers = #tpu.dot_dimension_numbers<[1], [0], [0], [1], [0, 0, 1, 1], [], []>} : vector<8x192xbf16>, vector<192x128xbf16>, vector<8x128xf32> -> vector<8x128xf32>
    %334 = vector.broadcast %305 : vector<1x128xf32> to vector<8x128xf32>
    %335 = arith.addf %333, %334 : vector<8x128xf32>
    %cst_36 = arith.constant 0.000000e+00 : f32
    %336 = vector.broadcast %cst_36 : f32 to vector<8x128xf32>
    %337 = arith.maximumf %335, %336 : vector<8x128xf32>
    %338 = tpu.concatenate %300, %301, %302 in 1 : vector<8x64xf32>, vector<8x64xf32>, vector<8x64xf32> -> vector<8x192xf32>
    %339 = arith.truncf %338 : vector<8x192xf32> to vector<8x192xbf16>
    %c0_37 = arith.constant 0 : index
    %c0_38 = arith.constant 0 : index
    %340 = vector.load %arg4[%c0_37, %c0_38] : memref<192x128xbf16, #tpu.memory_space<vmem>>, vector<192x128xbf16>
    %cst_39 = arith.constant dense<0.000000e+00> : vector<8x128xf32>
    %341 = tpu.matmul %339, %340, %cst_39 {dimension_numbers = #tpu.dot_dimension_numbers<[1], [0], [0], [1], [0, 0, 1, 1], [], []>} : vector<8x192xbf16>, vector<192x128xbf16>, vector<8x128xf32> -> vector<8x128xf32>
    %342 = vector.broadcast %305 : vector<1x128xf32> to vector<8x128xf32>
    %343 = arith.addf %341, %342 : vector<8x128xf32>
    %cst_40 = arith.constant 0.000000e+00 : f32
    %344 = vector.broadcast %cst_40 : f32 to vector<8x128xf32>
    %345 = arith.maximumf %343, %344 : vector<8x128xf32>
    %346 = tpu.concatenate %301, %302, %303 in 1 : vector<8x64xf32>, vector<8x64xf32>, vector<8x64xf32> -> vector<8x192xf32>
    %347 = arith.truncf %346 : vector<8x192xf32> to vector<8x192xbf16>
    %c0_41 = arith.constant 0 : index
    %c0_42 = arith.constant 0 : index
    %348 = vector.load %arg4[%c0_41, %c0_42] : memref<192x128xbf16, #tpu.memory_space<vmem>>, vector<192x128xbf16>
    %cst_43 = arith.constant dense<0.000000e+00> : vector<8x128xf32>
    %349 = tpu.matmul %347, %348, %cst_43 {dimension_numbers = #tpu.dot_dimension_numbers<[1], [0], [0], [1], [0, 0, 1, 1], [], []>} : vector<8x192xbf16>, vector<192x128xbf16>, vector<8x128xf32> -> vector<8x128xf32>
    %350 = vector.broadcast %305 : vector<1x128xf32> to vector<8x128xf32>
    %351 = arith.addf %349, %350 : vector<8x128xf32>
    %cst_44 = arith.constant 0.000000e+00 : f32
    %352 = vector.broadcast %cst_44 : f32 to vector<8x128xf32>
    %353 = arith.maximumf %351, %352 : vector<8x128xf32>
    %354 = tpu.concatenate %302, %303, %304 in 1 : vector<8x64xf32>, vector<8x64xf32>, vector<8x64xf32> -> vector<8x192xf32>
    %355 = arith.truncf %354 : vector<8x192xf32> to vector<8x192xbf16>
    %c0_45 = arith.constant 0 : index
    %c0_46 = arith.constant 0 : index
    %356 = vector.load %arg4[%c0_45, %c0_46] : memref<192x128xbf16, #tpu.memory_space<vmem>>, vector<192x128xbf16>
    %cst_47 = arith.constant dense<0.000000e+00> : vector<8x128xf32>
    %357 = tpu.matmul %355, %356, %cst_47 {dimension_numbers = #tpu.dot_dimension_numbers<[1], [0], [0], [1], [0, 0, 1, 1], [], []>} : vector<8x192xbf16>, vector<192x128xbf16>, vector<8x128xf32> -> vector<8x128xf32>
    %358 = vector.broadcast %305 : vector<1x128xf32> to vector<8x128xf32>
    %359 = arith.addf %357, %358 : vector<8x128xf32>
    %cst_48 = arith.constant 0.000000e+00 : f32
    %360 = vector.broadcast %cst_48 : f32 to vector<8x128xf32>
    %361 = arith.maximumf %359, %360 : vector<8x128xf32>
    %362 = tpu.concatenate %303, %304 in 1 : vector<8x64xf32>, vector<8x64xf32> -> vector<8x128xf32>
    %363 = arith.truncf %362 : vector<8x128xf32> to vector<8x128xbf16>
    %c0_49 = arith.constant 0 : index
    %c0_50 = arith.constant 0 : index
    %364 = vector.load %arg4[%c0_49, %c0_50] : memref<192x128xbf16, #tpu.memory_space<vmem>>, vector<128x128xbf16>
    %cst_51 = arith.constant dense<0.000000e+00> : vector<8x128xf32>
    %365 = tpu.matmul %363, %364, %cst_51 {dimension_numbers = #tpu.dot_dimension_numbers<[1], [0], [0], [1], [0, 0, 1, 1], [], []>} : vector<8x128xbf16>, vector<128x128xbf16>, vector<8x128xf32> -> vector<8x128xf32>
    %366 = vector.broadcast %305 : vector<1x128xf32> to vector<8x128xf32>
    %367 = arith.addf %365, %366 : vector<8x128xf32>
    %cst_52 = arith.constant 0.000000e+00 : f32
    %368 = vector.broadcast %cst_52 : f32 to vector<8x128xf32>
    %369 = arith.maximumf %367, %368 : vector<8x128xf32>
    %370 = arith.maximumf %313, %321 : vector<8x128xf32>
    %371 = arith.maximumf %329, %337 : vector<8x128xf32>
    %372 = arith.maximumf %345, %353 : vector<8x128xf32>
    %373 = arith.maximumf %361, %369 : vector<8x128xf32>
    %c0_53 = arith.constant 0 : index
    %c0_54 = arith.constant 0 : index
    %374 = vector.load %arg7[%c0_53, %c0_54] : memref<1x256xf32, #tpu.memory_space<vmem>>, vector<1x256xf32>
    %375 = tpu.concatenate %370, %371 in 1 : vector<8x128xf32>, vector<8x128xf32> -> vector<8x256xf32>
    %376 = arith.truncf %375 : vector<8x256xf32> to vector<8x256xbf16>
    %c128 = arith.constant 128 : index
    %c0_55 = arith.constant 0 : index
    %377 = vector.load %arg6[%c128, %c0_55] : memref<384x256xbf16, #tpu.memory_space<vmem>>, vector<256x256xbf16>
    %cst_56 = arith.constant dense<0.000000e+00> : vector<8x256xf32>
    %378 = tpu.matmul %376, %377, %cst_56 {dimension_numbers = #tpu.dot_dimension_numbers<[1], [0], [0], [1], [0, 0, 1, 1], [], []>} : vector<8x256xbf16>, vector<256x256xbf16>, vector<8x256xf32> -> vector<8x256xf32>
    %379 = vector.broadcast %374 : vector<1x256xf32> to vector<8x256xf32>
    %380 = arith.addf %378, %379 : vector<8x256xf32>
    %cst_57 = arith.constant 0.000000e+00 : f32
    %381 = vector.broadcast %cst_57 : f32 to vector<8x256xf32>
    %382 = arith.maximumf %380, %381 : vector<8x256xf32>
    %383 = tpu.concatenate %370, %371, %372 in 1 : vector<8x128xf32>, vector<8x128xf32>, vector<8x128xf32> -> vector<8x384xf32>
    %384 = arith.truncf %383 : vector<8x384xf32> to vector<8x384xbf16>
    %c0_58 = arith.constant 0 : index
    %c0_59 = arith.constant 0 : index
    %385 = vector.load %arg6[%c0_58, %c0_59] : memref<384x256xbf16, #tpu.memory_space<vmem>>, vector<384x256xbf16>
    %cst_60 = arith.constant dense<0.000000e+00> : vector<8x256xf32>
    %386 = tpu.matmul %384, %385, %cst_60 {dimension_numbers = #tpu.dot_dimension_numbers<[1], [0], [0], [1], [0, 0, 1, 1], [], []>} : vector<8x384xbf16>, vector<384x256xbf16>, vector<8x256xf32> -> vector<8x256xf32>
    %387 = vector.broadcast %374 : vector<1x256xf32> to vector<8x256xf32>
    %388 = arith.addf %386, %387 : vector<8x256xf32>
    %cst_61 = arith.constant 0.000000e+00 : f32
    %389 = vector.broadcast %cst_61 : f32 to vector<8x256xf32>
    %390 = arith.maximumf %388, %389 : vector<8x256xf32>
    %391 = tpu.concatenate %371, %372, %373 in 1 : vector<8x128xf32>, vector<8x128xf32>, vector<8x128xf32> -> vector<8x384xf32>
    %392 = arith.truncf %391 : vector<8x384xf32> to vector<8x384xbf16>
    %c0_62 = arith.constant 0 : index
    %c0_63 = arith.constant 0 : index
    %393 = vector.load %arg6[%c0_62, %c0_63] : memref<384x256xbf16, #tpu.memory_space<vmem>>, vector<384x256xbf16>
    %cst_64 = arith.constant dense<0.000000e+00> : vector<8x256xf32>
    %394 = tpu.matmul %392, %393, %cst_64 {dimension_numbers = #tpu.dot_dimension_numbers<[1], [0], [0], [1], [0, 0, 1, 1], [], []>} : vector<8x384xbf16>, vector<384x256xbf16>, vector<8x256xf32> -> vector<8x256xf32>
    %395 = vector.broadcast %374 : vector<1x256xf32> to vector<8x256xf32>
    %396 = arith.addf %394, %395 : vector<8x256xf32>
    %cst_65 = arith.constant 0.000000e+00 : f32
    %397 = vector.broadcast %cst_65 : f32 to vector<8x256xf32>
    %398 = arith.maximumf %396, %397 : vector<8x256xf32>
    %399 = tpu.concatenate %372, %373 in 1 : vector<8x128xf32>, vector<8x128xf32> -> vector<8x256xf32>
    %400 = arith.truncf %399 : vector<8x256xf32> to vector<8x256xbf16>
    %c0_66 = arith.constant 0 : index
    %c0_67 = arith.constant 0 : index
    %401 = vector.load %arg6[%c0_66, %c0_67] : memref<384x256xbf16, #tpu.memory_space<vmem>>, vector<256x256xbf16>
    %cst_68 = arith.constant dense<0.000000e+00> : vector<8x256xf32>
    %402 = tpu.matmul %400, %401, %cst_68 {dimension_numbers = #tpu.dot_dimension_numbers<[1], [0], [0], [1], [0, 0, 1, 1], [], []>} : vector<8x256xbf16>, vector<256x256xbf16>, vector<8x256xf32> -> vector<8x256xf32>
    %403 = vector.broadcast %374 : vector<1x256xf32> to vector<8x256xf32>
    %404 = arith.addf %402, %403 : vector<8x256xf32>
    %cst_69 = arith.constant 0.000000e+00 : f32
    %405 = vector.broadcast %cst_69 : f32 to vector<8x256xf32>
    %406 = arith.maximumf %404, %405 : vector<8x256xf32>
    %407 = arith.truncf %382 : vector<8x256xf32> to vector<8x256xbf16>
    %c0_70 = arith.constant 0 : index
    %c0_71 = arith.constant 0 : index
    %c0_72 = arith.constant 0 : index
    %408 = vector.load %arg8[%c0_70, %c0_71, %c0_72] : memref<4x256x512xbf16, #tpu.memory_space<vmem>>, vector<1x256x512xbf16>
    %409 = vector.shape_cast %408 : vector<1x256x512xbf16> to vector<256x512xbf16>
    %cst_73 = arith.constant dense<0.000000e+00> : vector<8x512xf32>
    %410 = tpu.matmul %407, %409, %cst_73 {dimension_numbers = #tpu.dot_dimension_numbers<[1], [0], [0], [1], [0, 0, 1, 1], [], []>} : vector<8x256xbf16>, vector<256x512xbf16>, vector<8x512xf32> -> vector<8x512xf32>
    %411 = arith.truncf %390 : vector<8x256xf32> to vector<8x256xbf16>
    %c1 = arith.constant 1 : index
    %c0_74 = arith.constant 0 : index
    %c0_75 = arith.constant 0 : index
    %412 = vector.load %arg8[%c1, %c0_74, %c0_75] : memref<4x256x512xbf16, #tpu.memory_space<vmem>>, vector<1x256x512xbf16>
    %413 = vector.shape_cast %412 : vector<1x256x512xbf16> to vector<256x512xbf16>
    %cst_76 = arith.constant dense<0.000000e+00> : vector<8x512xf32>
    %414 = tpu.matmul %411, %413, %cst_76 {dimension_numbers = #tpu.dot_dimension_numbers<[1], [0], [0], [1], [0, 0, 1, 1], [], []>} : vector<8x256xbf16>, vector<256x512xbf16>, vector<8x512xf32> -> vector<8x512xf32>
    %415 = arith.addf %410, %414 : vector<8x512xf32>
    %416 = arith.truncf %398 : vector<8x256xf32> to vector<8x256xbf16>
    %c2 = arith.constant 2 : index
    %c0_77 = arith.constant 0 : index
    %c0_78 = arith.constant 0 : index
    %417 = vector.load %arg8[%c2, %c0_77, %c0_78] : memref<4x256x512xbf16, #tpu.memory_space<vmem>>, vector<1x256x512xbf16>
    %418 = vector.shape_cast %417 : vector<1x256x512xbf16> to vector<256x512xbf16>
    %cst_79 = arith.constant dense<0.000000e+00> : vector<8x512xf32>
    %419 = tpu.matmul %416, %418, %cst_79 {dimension_numbers = #tpu.dot_dimension_numbers<[1], [0], [0], [1], [0, 0, 1, 1], [], []>} : vector<8x256xbf16>, vector<256x512xbf16>, vector<8x512xf32> -> vector<8x512xf32>
    %420 = arith.addf %415, %419 : vector<8x512xf32>
    %421 = arith.truncf %406 : vector<8x256xf32> to vector<8x256xbf16>
    %c3 = arith.constant 3 : index
    %c0_80 = arith.constant 0 : index
    %c0_81 = arith.constant 0 : index
    %422 = vector.load %arg8[%c3, %c0_80, %c0_81] : memref<4x256x512xbf16, #tpu.memory_space<vmem>>, vector<1x256x512xbf16>
    %423 = vector.shape_cast %422 : vector<1x256x512xbf16> to vector<256x512xbf16>
    %cst_82 = arith.constant dense<0.000000e+00> : vector<8x512xf32>
    %424 = tpu.matmul %421, %423, %cst_82 {dimension_numbers = #tpu.dot_dimension_numbers<[1], [0], [0], [1], [0, 0, 1, 1], [], []>} : vector<8x256xbf16>, vector<256x512xbf16>, vector<8x512xf32> -> vector<8x512xf32>
    %425 = arith.addf %420, %424 : vector<8x512xf32>
    %c0_83 = arith.constant 0 : index
    %c0_84 = arith.constant 0 : index
    %426 = vector.load %arg9[%c0_83, %c0_84] : memref<1x512xf32, #tpu.memory_space<vmem>>, vector<1x512xf32>
    %427 = vector.broadcast %426 : vector<1x512xf32> to vector<8x512xf32>
    %428 = arith.addf %425, %427 : vector<8x512xf32>
    %cst_85 = arith.constant 0.000000e+00 : f32
    %429 = vector.broadcast %cst_85 : f32 to vector<8x512xf32>
    %430 = arith.maximumf %428, %429 : vector<8x512xf32>
    %431 = arith.truncf %430 : vector<8x512xf32> to vector<8x512xbf16>
    %c0_86 = arith.constant 0 : index
    %c0_87 = arith.constant 0 : index
    %432 = vector.load %arg10[%c0_86, %c0_87] : memref<512x128xbf16, #tpu.memory_space<vmem>>, vector<512x128xbf16>
    %cst_88 = arith.constant dense<0.000000e+00> : vector<8x128xf32>
    %433 = tpu.matmul %431, %432, %cst_88 {dimension_numbers = #tpu.dot_dimension_numbers<[1], [0], [0], [1], [0, 0, 1, 1], [], []>} : vector<8x512xbf16>, vector<512x128xbf16>, vector<8x128xf32> -> vector<8x128xf32>
    %c0_89 = arith.constant 0 : index
    %c0_90 = arith.constant 0 : index
    %434 = vector.load %arg11[%c0_89, %c0_90] : memref<1x128xf32, #tpu.memory_space<vmem>>, vector<1x128xf32>
    %435 = vector.broadcast %434 : vector<1x128xf32> to vector<8x128xf32>
    %436 = arith.addf %433, %435 : vector<8x128xf32>
    %cst_91 = arith.constant 0.000000e+00 : f32
    %437 = vector.broadcast %cst_91 : f32 to vector<8x128xf32>
    %438 = arith.maximumf %436, %437 : vector<8x128xf32>
    %439 = arith.truncf %438 : vector<8x128xf32> to vector<8x128xbf16>
    %c0_92 = arith.constant 0 : index
    %c0_93 = arith.constant 0 : index
    %440 = vector.load %arg12[%c0_92, %c0_93] : memref<128x32xbf16, #tpu.memory_space<vmem>>, vector<128x32xbf16>
    %cst_94 = arith.constant dense<0.000000e+00> : vector<8x32xf32>
    %441 = tpu.matmul %439, %440, %cst_94 {dimension_numbers = #tpu.dot_dimension_numbers<[1], [0], [0], [1], [0, 0, 1, 1], [], []>} : vector<8x128xbf16>, vector<128x32xbf16>, vector<8x32xf32> -> vector<8x32xf32>
    %c0_95 = arith.constant 0 : index
    %c0_96 = arith.constant 0 : index
    %442 = vector.load %arg13[%c0_95, %c0_96] : memref<1x32xf32, #tpu.memory_space<vmem>>, vector<1x32xf32>
    %443 = vector.broadcast %442 : vector<1x32xf32> to vector<8x32xf32>
    %444 = arith.addf %441, %443 : vector<8x32xf32>
    %cst_97 = arith.constant 0.000000e+00 : f32
    %445 = vector.broadcast %cst_97 : f32 to vector<8x32xf32>
    %446 = arith.maximumf %444, %445 : vector<8x32xf32>
    %447 = arith.truncf %446 : vector<8x32xf32> to vector<8x32xbf16>
    %c0_98 = arith.constant 0 : index
    %c0_99 = arith.constant 0 : index
    %448 = vector.load %arg14[%c0_98, %c0_99] : memref<32x128xbf16, #tpu.memory_space<vmem>>, vector<32x128xbf16>
    %cst_100 = arith.constant dense<0.000000e+00> : vector<8x128xf32>
    %449 = tpu.matmul %447, %448, %cst_100 {dimension_numbers = #tpu.dot_dimension_numbers<[1], [0], [0], [1], [0, 0, 1, 1], [], []>} : vector<8x32xbf16>, vector<32x128xbf16>, vector<8x128xf32> -> vector<8x128xf32>
    %c0_101 = arith.constant 0 : index
    %c0_102 = arith.constant 0 : index
    %450 = vector.load %arg15[%c0_101, %c0_102] : memref<1x128xf32, #tpu.memory_space<vmem>>, vector<1x128xf32>
    %451 = vector.broadcast %450 : vector<1x128xf32> to vector<8x128xf32>
    %452 = arith.addf %449, %451 : vector<8x128xf32>
    %c0_103 = arith.constant 0 : index
    %c0_104 = arith.constant 0 : index
    %453 = vector.load %arg16[%c0_103, %c0_104] : memref<8x128xf32, #tpu.memory_space<vmem>>, vector<8x128xf32>
    tpu.vector_store %arg16[%c0_103, %c0_104], %452 {strides = array<i32>} : memref<8x128xf32, #tpu.memory_space<vmem>>, vector<8x128xf32>,
    return
  }
  func.func @transform_0(%arg0: i32) -> (i32, i32) {
    %c0_i32 = arith.constant 0 : i32
    %c0_i32_0 = arith.constant 0 : i32
    return %arg0, %c0_i32 : i32, i32
  }
  func.func @transform_1(%arg0: i32) -> (i32, i32) {
    %c0_i32 = arith.constant 0 : i32
    %c0_i32_0 = arith.constant 0 : i32
    %c0_i32_1 = arith.constant 0 : i32
    return %c0_i32, %c0_i32_0 : i32, i32
  }
  func.func @transform_2(%arg0: i32) -> (i32, i32) {
    %c0_i32 = arith.constant 0 : i32
    %c0_i32_0 = arith.constant 0 : i32
    %c0_i32_1 = arith.constant 0 : i32
    return %c0_i32, %c0_i32_0 : i32, i32
  }
  func.func @transform_3(%arg0: i32) -> (i32, i32) {
    %c0_i32 = arith.constant 0 : i32
    %c0_i32_0 = arith.constant 0 : i32
    %c0_i32_1 = arith.constant 0 : i32
    return %c0_i32, %c0_i32_0 : i32, i32
  }
  func.func @transform_4(%arg0: i32) -> (i32, i32) {
    %c0_i32 = arith.constant 0 : i32
    %c0_i32_0 = arith.constant 0 : i32
    %c0_i32_1 = arith.constant 0 : i32
    return %c0_i32, %c0_i32_0 : i32, i32
  }
  func.func @transform_5(%arg0: i32) -> (i32, i32) {
    %c0_i32 = arith.constant 0 : i32
    %c0_i32_0 = arith.constant 0 : i32
    %c0_i32_1 = arith.constant 0 : i32
    return %c0_i32, %c0_i32_0 : i32, i32
  }
  func.func @transform_6(%arg0: i32) -> (i32, i32) {
    %c0_i32 = arith.constant 0 : i32
    %c0_i32_0 = arith.constant 0 : i32
    %c0_i32_1 = arith.constant 0 : i32
    return %c0_i32, %c0_i32_0 : i32, i32
  }
  func.func @transform_7(%arg0: i32) -> (i32, i32, i32) {
    %c0_i32 = arith.constant 0 : i32
    %c0_i32_0 = arith.constant 0 : i32
    %c0_i32_1 = arith.constant 0 : i32
    %c0_i32_2 = arith.constant 0 : i32
    return %c0_i32, %c0_i32_0, %c0_i32_1 : i32, i32, i32
  }
  func.func @transform_8(%arg0: i32) -> (i32, i32) {
    %c0_i32 = arith.constant 0 : i32
    %c0_i32_0 = arith.constant 0 : i32
    %c0_i32_1 = arith.constant 0 : i32
    return %c0_i32, %c0_i32_0 : i32, i32
  }
  func.func @transform_9(%arg0: i32) -> (i32, i32) {
    %c0_i32 = arith.constant 0 : i32
    %c0_i32_0 = arith.constant 0 : i32
    %c0_i32_1 = arith.constant 0 : i32
    return %c0_i32, %c0_i32_0 : i32, i32
  }
  func.func @transform_10(%arg0: i32) -> (i32, i32) {
    %c0_i32 = arith.constant 0 : i32
    %c0_i32_0 = arith.constant 0 : i32
    %c0_i32_1 = arith.constant 0 : i32
    return %c0_i32, %c0_i32_0 : i32, i32
  }
  func.func @transform_11(%arg0: i32) -> (i32, i32) {
    %c0_i32 = arith.constant 0 : i32
    %c0_i32_0 = arith.constant 0 : i32
    %c0_i32_1 = arith.constant 0 : i32
    return %c0_i32, %c0_i32_0 : i32, i32
  }
  func.func @transform_12(%arg0: i32) -> (i32, i32) {
    %c0_i32 = arith.constant 0 : i32
    %c0_i32_0 = arith.constant 0 : i32
    %c0_i32_1 = arith.constant 0 : i32
    return %c0_i32, %c0_i32_0 : i32, i32
  }
  func.func @transform_13(%arg0: i32) -> (i32, i32) {
    %c0_i32 = arith.constant 0 : i32
    %c0_i32_0 = arith.constant 0 : i32
    %c0_i32_1 = arith.constant 0 : i32
    return %c0_i32, %c0_i32_0 : i32, i32
  }
  func.func @transform_14(%arg0: i32) -> (i32, i32) {
    %c0_i32 = arith.constant 0 : i32
    %c0_i32_0 = arith.constant 0 : i32
    %c0_i32_1 = arith.constant 0 : i32
    return %c0_i32, %c0_i32_0 : i32, i32
  }
  func.func @transform_15(%arg0: i32) -> (i32, i32) {
    %c0_i32 = arith.constant 0 : i32
    %c0_i32_0 = arith.constant 0 : i32
    return %arg0, %c0_i32 : i32, i32
  }
}

</mosaic_0001>

<llo_original>
// kernel: _lambda_.1
$region0: #{_lambda_.1}
  #allocation0 [shape = 'u32[]', space=smem, size = 0x4, offset = 0x4, fixed_abs, tag = 'smem constant byte address 0x4 - core index']
  #allocation1 [shape = 'u32[72,128]{1,0:T(1,128)}', space=vmem, size = 0x9000, scoped, tag = 'internal scratch']
  %s0 = inlined_call_operand.vmem [shape: f32[24,16], index: 0, kind: input, shape index: {}]
  %s1 = inlined_call_operand.vmem [shape: f32[3,64], index: 1, kind: input, shape index: {}]
  %s2 = inlined_call_operand.vmem [shape: f32[1,64], index: 2, kind: input, shape index: {}]
  %s3 = inlined_call_operand.vmem [shape: bf16[192,128], index: 3, kind: input, shape index: {}]
  %s4 = inlined_call_operand.vmem [shape: f32[1,128], index: 4, kind: input, shape index: {}]
  %s5 = inlined_call_operand.hbm [shape: bf16[384,256], index: 5, kind: input, shape index: {}]
  %s6 = inlined_call_operand.vmem [shape: f32[1,256], index: 6, kind: input, shape index: {}]
  %s7 = inlined_call_operand.hbm [shape: bf16[4,256,512], index: 7, kind: input, shape index: {}]
  %s8 = inlined_call_operand.vmem [shape: f32[1,512], index: 8, kind: input, shape index: {}]
  %s9 = inlined_call_operand.hbm [shape: bf16[512,128], index: 9, kind: input, shape index: {}]
  %s10 = inlined_call_operand.vmem [shape: f32[1,128], index: 10, kind: input, shape index: {}]
  %s11 = inlined_call_operand.vmem [shape: bf16[128,32], index: 11, kind: input, shape index: {}]
  %s12 = inlined_call_operand.vmem [shape: f32[1,32], index: 12, kind: input, shape index: {}]
  %s13 = inlined_call_operand.vmem [shape: bf16[32,128], index: 13, kind: input, shape index: {}]
  %s14 = inlined_call_operand.vmem [shape: f32[1,128], index: 14, kind: input, shape index: {}]
  %s15 = inlined_call_operand.vmem [shape: f32[24,128], index: 15, kind: output, shape index: {}]
  %s16 = sld [smem:[#allocation0]]
  $region105: #{_lambda_.1} parent=0
    _
  %s18 = ssub.s32 1, %s16
  %s19 = scalar_select 0, %s18, %s16
  $region1: #{_lambda_.1} parent=0
    #allocation2 [shape = 'u8[196608]{0}', space=vmem, size = 0x30000, scoped, tag = 'input window, operand 5, single buffered']
    #allocation3 [shape = 's32[2]{0}', space=sflag, size = 0x8, scoped, tag = 'scoped memory for _lambda_.1']
    #allocation4 [shape = 'u8[1048576]{0}', space=vmem, size = 0x100000, scoped, tag = 'input window, operand 7, single buffered']
    #allocation5 [shape = 's32[1]{0}', space=sflag, size = 0x4, scoped, tag = 'scoped memory for _lambda_.1']
    #allocation6 [shape = 'u8[131072]{0}', space=vmem, size = 0x20000, scoped, tag = 'input window, operand 9, single buffered']
    %20 = vsyncpa [#allocation3], 0
    %21 = vsyncpa [#allocation5], 0
    loop: start=0, step=1, limit=5
    $region2: #{_lambda_.1} parent=1 // loop_pre_header
      _
    $region3: #{_lambda_.1} parent=1 // loop_header
      %s23 = sphi 0, %s27
      %p24 = scmp.ge.s32.totalorder %s23, 5
      %s33 = sphi 0, %s35
      %s36 = sphi 0, %s33
      %s37 = sphi 0, %s36
      %s53 = sphi 0, %s37
      %s57 = sphi 0, %s57
      %s59 = sphi 0, %s57
      %s60 = sphi 0, %s59
      %s74 = sphi 0, %s60
      %s78 = sphi 0, %s78
      %s80 = sphi 0, %s78
      %s81 = sphi 0, %s80
      %s95 = sphi 0, %s81
      %s99 = sphi 0, %s99
      %s101 = sphi 0, %s99
      %s102 = sphi 0, %s101
      %s116 = sphi 0, %s102
      %s120 = sphi 0, %s120
      %s122 = sphi 0, %s120
      %s123 = sphi 0, %s122
      %s137 = sphi 0, %s123
      %s141 = sphi 0, %s141
      %s143 = sphi 0, %s141
      %s144 = sphi 0, %s143
      %s158 = sphi 0, %s144
      %s162 = sphi 0, %s162
      %s164 = sphi 0, %s162
      %s165 = sphi 0, %s164
      %s179 = sphi 0, %s165
      %s183 = sphi 0, %s183
      %s185 = sphi 0, %s183
      %s186 = sphi 0, %s185
      %s200 = sphi 0, %s186
      %s204 = sphi 0, %s204
      %s206 = sphi 0, %s204
      %s207 = sphi 0, %s206
      %s221 = sphi 0, %s207
      %s225 = sphi 0, %s225
      %s227 = sphi 0, %s225
      %s228 = sphi 0, %s227
      %s242 = sphi 0, %s228
      %s246 = sphi 0, %s246
      %s248 = sphi 0, %s246
      %s249 = sphi 0, %s248
      %s263 = sphi 0, %s249
      %s267 = sphi 0, %s267
      %s269 = sphi 0, %s267
      %s270 = sphi 0, %s269
      %s284 = sphi 0, %s270
      %s288 = sphi 0, %s288
      %s290 = sphi 0, %s288
      %s291 = sphi 0, %s290
      %s305 = sphi 0, %s291
      %s309 = sphi 0, %s309
      %s311 = sphi 0, %s309
      %s312 = sphi 0, %s311
      %s326 = sphi 0, %s312
      %s330 = sphi 0, %s330
      %s332 = sphi 0, %s330
      %s333 = sphi 0, %s332
      %s347 = sphi 0, %s333
      %s353 = sphi 0, %s355
      %s356 = sphi 0, %s353
      %s357 = sphi 0, %s356
      %s373 = sphi 0, %s357
    $region4: #{_lambda_.1} parent=1 // loop_header_branch
      %26 = sbr.rel (%p24) target = $region8
    $region5: #{_lambda_.1} parent=1 // loop_body
      %s28 = ssub.s32 %s23, 1
      %s29 = ssub.s32 %s23, 2
      %s30 = sadd.s32 %s23, 1
      %s31 = ssub.s32 %s23, %s30
      %p32 = scmp.eq.s32.totalorder %s31, 0
      %s34 = sadd.s32 %s33, 1
      %s35 = scalar_select %p32, %s33, %s34
      %p38 = pneg %p32
      %p39 = scmp.eq.s32.totalorder %s23, 2
      %p40 = por %p38, %p39
      %p41 = scmp.ne.s32.totalorder %s33, %s36
      %p42 = scmp.eq.s32.totalorder %s23, 0
      %p43 = por %p41, %p42
      %p44 = scmp.ne.s32.totalorder %s33, %s36
      %p45 = scmp.eq.s32.totalorder %s28, 2
      %p46 = por %p44, %p45
      %p47 = scmp.ne.s32.totalorder %s36, %s37
      %p48 = scmp.eq.s32.totalorder %s28, 0
      %p49 = por %p47, %p48
      %p50 = scmp.ne.s32.totalorder %s36, %s37
      %p51 = scmp.eq.s32.totalorder %s29, 2
      %p52 = por %p50, %p51
      %p54 = scmp.ne.s32.totalorder %s37, %s53
      %p55 = scmp.eq.s32.totalorder %s29, 0
      %p56 = por %p54, %p55
      %s58 = sadd.s32 %s57, 1
      %p61 = scmp.eq.s32.totalorder %s23, 2
      %p62 = scmp.ne.s32.totalorder %s57, %s59
      %p63 = scmp.eq.s32.totalorder %s23, 0
      %p64 = por %p62, %p63
      %p65 = scmp.ne.s32.totalorder %s57, %s59
      %p66 = scmp.eq.s32.totalorder %s28, 2
      %p67 = por %p65, %p66
      %p68 = scmp.ne.s32.totalorder %s59, %s60
      %p69 = scmp.eq.s32.totalorder %s28, 0
      %p70 = por %p68, %p69
      %p71 = scmp.ne.s32.totalorder %s59, %s60
      %p72 = scmp.eq.s32.totalorder %s29, 2
      %p73 = por %p71, %p72
      %p75 = scmp.ne.s32.totalorder %s60, %s74
      %p76 = scmp.eq.s32.totalorder %s29, 0
      %p77 = por %p75, %p76
      %s79 = sadd.s32 %s78, 1
      %p82 = scmp.eq.s32.totalorder %s23, 2
      %p83 = scmp.ne.s32.totalorder %s78, %s80
      %p84 = scmp.eq.s32.totalorder %s23, 0
      %p85 = por %p83, %p84
      %p86 = scmp.ne.s32.totalorder %s78, %s80
      %p87 = scmp.eq.s32.totalorder %s28, 2
      %p88 = por %p86, %p87
      %p89 = scmp.ne.s32.totalorder %s80, %s81
      %p90 = scmp.eq.s32.totalorder %s28, 0
      %p91 = por %p89, %p90
      %p92 = scmp.ne.s32.totalorder %s80, %s81
      %p93 = scmp.eq.s32.totalorder %s29, 2
      %p94 = por %p92, %p93
      %p96 = scmp.ne.s32.totalorder %s81, %s95
      %p97 = scmp.eq.s32.totalorder %s29, 0
      %p98 = por %p96, %p97
      %s100 = sadd.s32 %s99, 1
      %p103 = scmp.eq.s32.totalorder %s23, 2
      %p104 = scmp.ne.s32.totalorder %s99, %s101
      %p105 = scmp.eq.s32.totalorder %s23, 0
      %p106 = por %p104, %p105
      %p107 = scmp.ne.s32.totalorder %s99, %s101
      %p108 = scmp.eq.s32.totalorder %s28, 2
      %p109 = por %p107, %p108
      %p110 = scmp.ne.s32.totalorder %s101, %s102
      %p111 = scmp.eq.s32.totalorder %s28, 0
      %p112 = por %p110, %p111
      %p113 = scmp.ne.s32.totalorder %s101, %s102
      %p114 = scmp.eq.s32.totalorder %s29, 2
      %p115 = por %p113, %p114
      %p117 = scmp.ne.s32.totalorder %s102, %s116
      %p118 = scmp.eq.s32.totalorder %s29, 0
      %p119 = por %p117, %p118
      %s121 = sadd.s32 %s120, 1
      %p124 = scmp.eq.s32.totalorder %s23, 2
      %p125 = scmp.ne.s32.totalorder %s120, %s122
      %p126 = scmp.eq.s32.totalorder %s23, 0
      %p127 = por %p125, %p126
      %p128 = scmp.ne.s32.totalorder %s120, %s122
      %p129 = scmp.eq.s32.totalorder %s28, 2
      %p130 = por %p128, %p129
      %p131 = scmp.ne.s32.totalorder %s122, %s123
      %p132 = scmp.eq.s32.totalorder %s28, 0
      %p133 = por %p131, %p132
      %p134 = scmp.ne.s32.totalorder %s122, %s123
      %p135 = scmp.eq.s32.totalorder %s29, 2
      %p136 = por %p134, %p135
      %p138 = scmp.ne.s32.totalorder %s123, %s137
      %p139 = scmp.eq.s32.totalorder %s29, 0
      %p140 = por %p138, %p139
      %s142 = sadd.s32 %s141, 1
      %p145 = scmp.eq.s32.totalorder %s23, 2
      %p146 = scmp.ne.s32.totalorder %s141, %s143
      %p147 = scmp.eq.s32.totalorder %s23, 0
      %p148 = por %p146, %p147
      %p149 = scmp.ne.s32.totalorder %s141, %s143
      %p150 = scmp.eq.s32.totalorder %s28, 2
      %p151 = por %p149, %p150
      %p152 = scmp.ne.s32.totalorder %s143, %s144
      %p153 = scmp.eq.s32.totalorder %s28, 0
      %p154 = por %p152, %p153
      %p155 = scmp.ne.s32.totalorder %s143, %s144
      %p156 = scmp.eq.s32.totalorder %s29, 2
      %p157 = por %p155, %p156
      %p159 = scmp.ne.s32.totalorder %s144, %s158
      %p160 = scmp.eq.s32.totalorder %s29, 0
      %p161 = por %p159, %p160
      %s163 = sadd.s32 %s162, 1
      %p166 = scmp.eq.s32.totalorder %s23, 2
      %p167 = scmp.ne.s32.totalorder %s162, %s164
      %p168 = scmp.eq.s32.totalorder %s23, 0
      %p169 = por %p167, %p168
      %p170 = scmp.ne.s32.totalorder %s162, %s164
      %p171 = scmp.eq.s32.totalorder %s28, 2
      %p172 = por %p170, %p171
      %p173 = scmp.ne.s32.totalorder %s164, %s165
      %p174 = scmp.eq.s32.totalorder %s28, 0
      %p175 = por %p173, %p174
      %p176 = scmp.ne.s32.totalorder %s164, %s165
      %p177 = scmp.eq.s32.totalorder %s29, 2
      %p178 = por %p176, %p177
      %p180 = scmp.ne.s32.totalorder %s165, %s179
      %p181 = scmp.eq.s32.totalorder %s29, 0
      %p182 = por %p180, %p181
      %s184 = sadd.s32 %s183, 1
      %p187 = scmp.eq.s32.totalorder %s23, 2
      %p188 = scmp.ne.s32.totalorder %s183, %s185
      %p189 = scmp.eq.s32.totalorder %s23, 0
      %p190 = por %p188, %p189
      %p191 = scmp.ne.s32.totalorder %s183, %s185
      %p192 = scmp.eq.s32.totalorder %s28, 2
      %p193 = por %p191, %p192
      %p194 = scmp.ne.s32.totalorder %s185, %s186
      %p195 = scmp.eq.s32.totalorder %s28, 0
      %p196 = por %p194, %p195
      %p197 = scmp.ne.s32.totalorder %s185, %s186
      %p198 = scmp.eq.s32.totalorder %s29, 2
      %p199 = por %p197, %p198
      %p201 = scmp.ne.s32.totalorder %s186, %s200
      %p202 = scmp.eq.s32.totalorder %s29, 0
      %p203 = por %p201, %p202
      %s205 = sadd.s32 %s204, 1
      %p208 = scmp.eq.s32.totalorder %s23, 2
      %p209 = scmp.ne.s32.totalorder %s204, %s206
      %p210 = scmp.eq.s32.totalorder %s23, 0
      %p211 = por %p209, %p210
      %p212 = scmp.ne.s32.totalorder %s204, %s206
      %p213 = scmp.eq.s32.totalorder %s28, 2
      %p214 = por %p212, %p213
      %p215 = scmp.ne.s32.totalorder %s206, %s207
      %p216 = scmp.eq.s32.totalorder %s28, 0
      %p217 = por %p215, %p216
      %p218 = scmp.ne.s32.totalorder %s206, %s207
      %p219 = scmp.eq.s32.totalorder %s29, 2
      %p220 = por %p218, %p219
      %p222 = scmp.ne.s32.totalorder %s207, %s221
      %p223 = scmp.eq.s32.totalorder %s29, 0
      %p224 = por %p222, %p223
      %s226 = sadd.s32 %s225, 1
      %p229 = scmp.eq.s32.totalorder %s23, 2
      %p230 = scmp.ne.s32.totalorder %s225, %s227
      %p231 = scmp.eq.s32.totalorder %s23, 0
      %p232 = por %p230, %p231
      %p233 = scmp.ne.s32.totalorder %s225, %s227
      %p234 = scmp.eq.s32.totalorder %s28, 2
      %p235 = por %p233, %p234
      %p236 = scmp.ne.s32.totalorder %s227, %s228
      %p237 = scmp.eq.s32.totalorder %s28, 0
      %p238 = por %p236, %p237
      %p239 = scmp.ne.s32.totalorder %s227, %s228
      %p240 = scmp.eq.s32.totalorder %s29, 2
      %p241 = por %p239, %p240
      %p243 = scmp.ne.s32.totalorder %s228, %s242
      %p244 = scmp.eq.s32.totalorder %s29, 0
      %p245 = por %p243, %p244
      %s247 = sadd.s32 %s246, 1
      %p250 = scmp.eq.s32.totalorder %s23, 2
      %p251 = scmp.ne.s32.totalorder %s246, %s248
      %p252 = scmp.eq.s32.totalorder %s23, 0
      %p253 = por %p251, %p252
      %p254 = scmp.ne.s32.totalorder %s246, %s248
      %p255 = scmp.eq.s32.totalorder %s28, 2
      %p256 = por %p254, %p255
      %p257 = scmp.ne.s32.totalorder %s248, %s249
      %p258 = scmp.eq.s32.totalorder %s28, 0
      %p259 = por %p257, %p258
      %p260 = scmp.ne.s32.totalorder %s248, %s249
      %p261 = scmp.eq.s32.totalorder %s29, 2
      %p262 = por %p260, %p261
      %p264 = scmp.ne.s32.totalorder %s249, %s263
      %p265 = scmp.eq.s32.totalorder %s29, 0
      %p266 = por %p264, %p265
      %s268 = sadd.s32 %s267, 1
      %p271 = scmp.eq.s32.totalorder %s23, 2
      %p272 = scmp.ne.s32.totalorder %s267, %s269
      %p273 = scmp.eq.s32.totalorder %s23, 0
      %p274 = por %p272, %p273
      %p275 = scmp.ne.s32.totalorder %s267, %s269
      %p276 = scmp.eq.s32.totalorder %s28, 2
      %p277 = por %p275, %p276
      %p278 = scmp.ne.s32.totalorder %s269, %s270
      %p279 = scmp.eq.s32.totalorder %s28, 0
      %p280 = por %p278, %p279
      %p281 = scmp.ne.s32.totalorder %s269, %s270
      %p282 = scmp.eq.s32.totalorder %s29, 2
      %p283 = por %p281, %p282
      %p285 = scmp.ne.s32.totalorder %s270, %s284
      %p286 = scmp.eq.s32.totalorder %s29, 0
      %p287 = por %p285, %p286
      %s289 = sadd.s32 %s288, 1
      %p292 = scmp.eq.s32.totalorder %s23, 2
      %p293 = scmp.ne.s32.totalorder %s288, %s290
      %p294 = scmp.eq.s32.totalorder %s23, 0
      %p295 = por %p293, %p294
      %p296 = scmp.ne.s32.totalorder %s288, %s290
      %p297 = scmp.eq.s32.totalorder %s28, 2
      %p298 = por %p296, %p297
      %p299 = scmp.ne.s32.totalorder %s290, %s291
      %p300 = scmp.eq.s32.totalorder %s28, 0
      %p301 = por %p299, %p300
      %p302 = scmp.ne.s32.totalorder %s290, %s291
      %p303 = scmp.eq.s32.totalorder %s29, 2
      %p304 = por %p302, %p303
      %p306 = scmp.ne.s32.totalorder %s291, %s305
      %p307 = scmp.eq.s32.totalorder %s29, 0
      %p308 = por %p306, %p307
      %s310 = sadd.s32 %s309, 1
      %p313 = scmp.eq.s32.totalorder %s23, 2
      %p314 = scmp.ne.s32.totalorder %s309, %s311
      %p315 = scmp.eq.s32.totalorder %s23, 0
      %p316 = por %p314, %p315
      %p317 = scmp.ne.s32.totalorder %s309, %s311
      %p318 = scmp.eq.s32.totalorder %s28, 2
      %p319 = por %p317, %p318
      %p320 = scmp.ne.s32.totalorder %s311, %s312
      %p321 = scmp.eq.s32.totalorder %s28, 0
      %p322 = por %p320, %p321
      %p323 = scmp.ne.s32.totalorder %s311, %s312
      %p324 = scmp.eq.s32.totalorder %s29, 2
      %p325 = por %p323, %p324
      %p327 = scmp.ne.s32.totalorder %s312, %s326
      %p328 = scmp.eq.s32.totalorder %s29, 0
      %p329 = por %p327, %p328
      %s331 = sadd.s32 %s330, 1
      %p334 = scmp.eq.s32.totalorder %s23, 2
      %p335 = scmp.ne.s32.totalorder %s330, %s332
      %p336 = scmp.eq.s32.totalorder %s23, 0
      %p337 = por %p335, %p336
      %p338 = scmp.ne.s32.totalorder %s330, %s332
      %p339 = scmp.eq.s32.totalorder %s28, 2
      %p340 = por %p338, %p339
      %p341 = scmp.ne.s32.totalorder %s332, %s333
      %p342 = scmp.eq.s32.totalorder %s28, 0
      %p343 = por %p341, %p342
      %p344 = scmp.ne.s32.totalorder %s332, %s333
      %p345 = scmp.eq.s32.totalorder %s29, 2
      %p346 = por %p344, %p345
      %p348 = scmp.ne.s32.totalorder %s333, %s347
      %p349 = scmp.eq.s32.totalorder %s29, 0
      %p350 = por %p348, %p349
      %s351 = ssub.s32 %s23, %s30
      %p352 = scmp.eq.s32.totalorder %s351, 0
      %s354 = sadd.s32 %s353, 1
      %s355 = scalar_select %p352, %s353, %s354
      %p358 = pneg %p352
      %p359 = scmp.eq.s32.totalorder %s23, 2
      %p360 = por %p358, %p359
      %p361 = scmp.ne.s32.totalorder %s353, %s356
      %p362 = scmp.eq.s32.totalorder %s23, 0
      %p363 = por %p361, %p362
      %p364 = scmp.ne.s32.totalorder %s353, %s356
      %p365 = scmp.eq.s32.totalorder %s28, 2
      %p366 = por %p364, %p365
      %p367 = scmp.ne.s32.totalorder %s356, %s357
      %p368 = scmp.eq.s32.totalorder %s28, 0
      %p369 = por %p367, %p368
      %p370 = scmp.ne.s32.totalorder %s356, %s357
      %p371 = scmp.eq.s32.totalorder %s29, 2
      %p372 = por %p370, %p371
      %p374 = scmp.ne.s32.totalorder %s357, %s373
      %p375 = scmp.eq.s32.totalorder %s29, 0
      %p376 = por %p374, %p375
      %p377 = scmp.le.s32.totalorder 1, %s23
      %p378 = scmp.lt.s32.totalorder %s23, 4
      %p379 = pnand %p377, %p378
      %p380 = pneg %p379
      // Predicated region
      $region9: #{_lambda_.1} parent=5 // pred_check
        _
      $region10: #{_lambda_.1} parent=5 // pred_check_branch
        %382 = sbr.rel (%p379) target = $region12
      $region11: #{_lambda_.1} parent=5 // pred_region
        %s383 = ssub.s32 %s23, 1
        // Predicated region
        $region13: #{_lambda_.1} parent=11 // pred_check
          %p384 = pneg %p70
        $region14: #{_lambda_.1} parent=11 // pred_check_branch
          %386 = sbr.rel (%p384) target = $region16
        $region15: #{_lambda_.1} parent=11 // pred_region
          _
        $region16: #{_lambda_.1} parent=11 // pred_fallthru
          _
        // Predicated region
        $region17: #{_lambda_.1} parent=11 // pred_check
          %p387 = pneg %p91
        $region18: #{_lambda_.1} parent=11 // pred_check_branch
          %389 = sbr.rel (%p387) target = $region20
        $region19: #{_lambda_.1} parent=11 // pred_region
          _
        $region20: #{_lambda_.1} parent=11 // pred_fallthru
          _
        // Predicated region
        $region21: #{_lambda_.1} parent=11 // pred_check
          %p390 = pneg %p112
        $region22: #{_lambda_.1} parent=11 // pred_check_branch
          %392 = sbr.rel (%p390) target = $region24
        $region23: #{_lambda_.1} parent=11 // pred_region
          _
        $region24: #{_lambda_.1} parent=11 // pred_fallthru
          _
        // Predicated region
        $region25: #{_lambda_.1} parent=11 // pred_check
          %p393 = pneg %p133
        $region26: #{_lambda_.1} parent=11 // pred_check_branch
          %395 = sbr.rel (%p393) target = $region28
        $region27: #{_lambda_.1} parent=11 // pred_region
          _
        $region28: #{_lambda_.1} parent=11 // pred_fallthru
          _
        // Predicated region
        $region29: #{_lambda_.1} parent=11 // pred_check
          %p396 = pneg %p154
        $region30: #{_lambda_.1} parent=11 // pred_check_branch
          %398 = sbr.rel (%p396) target = $region32
        $region31: #{_lambda_.1} parent=11 // pred_region
          %400 = vsyncadd [#allocation3], 0
          %s401 = sshll.u32 %s5, 4
          %s402 = int_to_ptr.hbm [resolvable:$true] %s401
          %s403 = sshll.u32 [#allocation2], 4
          %s404 = int_to_ptr.vmem [resolvable:$true] %s403
          %409 = dma.hbm_to_vmem [thread:$0]  %s402, 6144, %s404, [#allocation3], 128, 128, 8
        $region32: #{_lambda_.1} parent=11 // pred_fallthru
          _
        // Predicated region
        $region33: #{_lambda_.1} parent=11 // pred_check
          %p410 = pneg %p175
        $region34: #{_lambda_.1} parent=11 // pred_check_branch
          %412 = sbr.rel (%p410) target = $region36
        $region35: #{_lambda_.1} parent=11 // pred_region
          _
        $region36: #{_lambda_.1} parent=11 // pred_fallthru
          _
        // Predicated region
        $region37: #{_lambda_.1} parent=11 // pred_check
          %p413 = pneg %p196
        $region38: #{_lambda_.1} parent=11 // pred_check_branch
          %415 = sbr.rel (%p413) target = $region40
        $region39: #{_lambda_.1} parent=11 // pred_region
          %417 = vsyncadd [#allocation5], 0
          %s418 = sshll.u32 %s7, 4
          %s419 = int_to_ptr.hbm [resolvable:$true] %s418
          %s420 = sshll.u32 [#allocation4], 4
          %s421 = int_to_ptr.vmem [resolvable:$true] %s420
          %426 = dma.hbm_to_vmem [thread:$0]  %s419, 32768, %s421, [#allocation5], 256, 256, 16
        $region40: #{_lambda_.1} parent=11 // pred_fallthru
          _
        // Predicated region
        $region41: #{_lambda_.1} parent=11 // pred_check
          %p427 = pneg %p217
        $region42: #{_lambda_.1} parent=11 // pred_check_branch
          %429 = sbr.rel (%p427) target = $region44
        $region43: #{_lambda_.1} parent=11 // pred_region
          _
        $region44: #{_lambda_.1} parent=11 // pred_fallthru
          _
        // Predicated region
        $region45: #{_lambda_.1} parent=11 // pred_check
          %p430 = pneg %p238
        $region46: #{_lambda_.1} parent=11 // pred_check_branch
          %432 = sbr.rel (%p430) target = $region48
        $region47: #{_lambda_.1} parent=11 // pred_region
          %434 = vsyncadd [#allocation5], 0
          %s435 = sshll.u32 %s9, 4
          %s436 = int_to_ptr.hbm [resolvable:$true] %s435
          %s437 = sshll.u32 [#allocation6], 4
          %s438 = int_to_ptr.vmem [resolvable:$true] %s437
          %443 = dma.hbm_to_vmem [thread:$0]  %s436, 4096, %s438, [#allocation5], 64, 64, 4
        $region48: #{_lambda_.1} parent=11 // pred_fallthru
          _
        // Predicated region
        $region49: #{_lambda_.1} parent=11 // pred_check
          %p444 = pneg %p259
        $region50: #{_lambda_.1} parent=11 // pred_check_branch
          %446 = sbr.rel (%p444) target = $region52
        $region51: #{_lambda_.1} parent=11 // pred_region
          _
        $region52: #{_lambda_.1} parent=11 // pred_fallthru
          _
        // Predicated region
        $region53: #{_lambda_.1} parent=11 // pred_check
          %p447 = pneg %p280
        $region54: #{_lambda_.1} parent=11 // pred_check_branch
          %449 = sbr.rel (%p447) target = $region56
        $region55: #{_lambda_.1} parent=11 // pred_region
          _
        $region56: #{_lambda_.1} parent=11 // pred_fallthru
          _
        // Predicated region
        $region57: #{_lambda_.1} parent=11 // pred_check
          %p450 = pneg %p301
        $region58: #{_lambda_.1} parent=11 // pred_check_branch
          %452 = sbr.rel (%p450) target = $region60
        $region59: #{_lambda_.1} parent=11 // pred_region
          _
        $region60: #{_lambda_.1} parent=11 // pred_fallthru
          _
        // Predicated region
        $region61: #{_lambda_.1} parent=11 // pred_check
          %p453 = pneg %p322
        $region62: #{_lambda_.1} parent=11 // pred_check_branch
          %455 = sbr.rel (%p453) target = $region64
        $region63: #{_lambda_.1} parent=11 // pred_region
          _
        $region64: #{_lambda_.1} parent=11 // pred_fallthru
          _
        // Predicated region
        $region65: #{_lambda_.1} parent=11 // pred_check
          %p456 = pneg %p343
        $region66: #{_lambda_.1} parent=11 // pred_check_branch
          %458 = sbr.rel (%p456) target = $region68
        $region67: #{_lambda_.1} parent=11 // pred_region
          _
        $region68: #{_lambda_.1} parent=11 // pred_fallthru
          _
      $region12: #{_lambda_.1} parent=5 // pred_fallthru
        _
      %p459 = scmp.lt.s32.totalorder %s23, 3
      // Predicated region
      $region69: #{_lambda_.1} parent=5 // pred_check
        %p460 = pneg %p459
      $region70: #{_lambda_.1} parent=5 // pred_check_branch
        %462 = sbr.rel (%p460) target = $region72
      $region71: #{_lambda_.1} parent=5 // pred_region
        // Predicated region
        $region73: #{_lambda_.1} parent=71 // pred_check
          %p463 = pneg %p43
        $region74: #{_lambda_.1} parent=71 // pred_check_branch
          %465 = sbr.rel (%p463) target = $region76
        $region75: #{_lambda_.1} parent=71 // pred_region
          %p466 = scmp.lt.s32.totalorder %s23, 2
          %s467 = scalar_select %p466, %s23, 2
          %s468 = smul.addr %s467, 8
          %s469 = scalar_lea.vmem %s0, %s468
        $region76: #{_lambda_.1} parent=71 // pred_fallthru
          _
      $region72: #{_lambda_.1} parent=5 // pred_fallthru
        _
      %p470 = scmp.le.s32.totalorder 1, %s23
      %p471 = scmp.lt.s32.totalorder %s23, 4
      %p472 = pnand %p470, %p471
      %p473 = pneg %p472
      // Predicated region
      $region77: #{_lambda_.1} parent=5 // pred_check
        _
      $region78: #{_lambda_.1} parent=5 // pred_check_branch
        %475 = sbr.rel (%p472) target = $region80
      $region79: #{_lambda_.1} parent=5 // pred_region
        %s476 = ssub.s32 %s23, 1
        // Predicated region
        $region81: #{_lambda_.1} parent=79 // pred_check
          %p477 = pneg %p154
        $region82: #{_lambda_.1} parent=79 // pred_check_branch
          %479 = sbr.rel (%p477) target = $region84
        $region83: #{_lambda_.1} parent=79 // pred_region
          %481 = dma.done [#allocation3], 6144
        $region84: #{_lambda_.1} parent=79 // pred_fallthru
          _
        // Predicated region
        $region85: #{_lambda_.1} parent=79 // pred_check
          %p482 = pneg %p196
        $region86: #{_lambda_.1} parent=79 // pred_check_branch
          %484 = sbr.rel (%p482) target = $region88
        $region87: #{_lambda_.1} parent=79 // pred_region
          %486 = dma.done [#allocation5], 32768
        $region88: #{_lambda_.1} parent=79 // pred_fallthru
          _
        // Predicated region
        $region89: #{_lambda_.1} parent=79 // pred_check
          %p487 = pneg %p238
        $region90: #{_lambda_.1} parent=79 // pred_check_branch
          %489 = sbr.rel (%p487) target = $region92
        $region91: #{_lambda_.1} parent=79 // pred_region
          %491 = dma.done [#allocation5], 4096
        $region92: #{_lambda_.1} parent=79 // pred_fallthru
          _
        %p492 = scmp.lt.s32.totalorder %s28, 2
        %s493 = scalar_select %p492, %s28, 2
        %s494 = smul.addr %s493, 8
        %s495 = scalar_lea.vmem %s0, %s494
        %p496 = pneg %p49
        %p497 = pneg %p46
        %p498 = pneg %p70
        %p499 = pneg %p67
        %p500 = pneg %p91
        %p501 = pneg %p88
        %p502 = pneg %p112
        %p503 = pneg %p109
        %p504 = pneg %p133
        %p505 = pneg %p130
        %p506 = pneg %p154
        %p507 = pneg %p151
        %p508 = pneg %p175
        %p509 = pneg %p172
        %p510 = pneg %p196
        %p511 = pneg %p193
        %p512 = pneg %p217
        %p513 = pneg %p214
        %p514 = pneg %p238
        %p515 = pneg %p235
        %p516 = pneg %p259
        %p517 = pneg %p256
        %p518 = pneg %p280
        %p519 = pneg %p277
        %p520 = pneg %p301
        %p521 = pneg %p298
        %p522 = pneg %p322
        %p523 = pneg %p319
        %p524 = pneg %p343
        %p525 = pneg %p340
        %p526 = pneg %p369
        %p527 = pneg %p366
        %p528 = scmp.lt.s32.totalorder %s28, 2
        %s529 = scalar_select %p528, %s28, 2
        %s530 = smul.addr %s529, 8
        %s531 = scalar_lea.vmem %s15, %s530
        %p532 = scmp.lt.s32.totalorder %s28, 2
        %s533 = scalar_select %p532, %s28, 2
        %s534 = smul.addr %s533, 8
        %s535 = scalar_lea.vmem %s0, %s534
        %p536 = scmp.lt.s32.totalorder %s28, 2
        %s537 = scalar_select %p536, %s28, 2
        %s538 = smul.addr %s537, 8
        %s539 = scalar_lea.vmem %s15, %s538
        %v541 = vld [vmem:[%s535] sm:$0xff]
        %v542 = vld [vmem:[%s1] sm:$0x7]
        %v543 = vld [vmem:[%s2] sm:$0x1]
        %545 = vset.pattern.permute.xlu0 0
        %546 = vperm.xlu0 %545, %v541
        %v547 = vpop.permute.xlu0 %546
        %v549 = vperm.slane %v542, 1
        %v550 = vmul.f32 %v547, %v549
        %551 = vset.pattern.permute.xlu0 1
        %552 = vperm.xlu0 %551, %v541
        %v553 = vpop.permute.xlu0 %552
        %v555 = vperm.slane %v542, 2
        %v556 = vmul.f32 %v553, %v555
        %v557 = vadd.f32 %v550, %v556
        %v559 = vperm.slane %v543, 0
        %v561 = vadd.f32 %v557, %v559
        %v562 = vmax.f32 %v561, 0.0
        %v563 = vmul.f32 %v553, %v549
        %v564 = vperm.slane %v542, 0
        %v565 = vmul.f32 %v547, %v564
        %v566 = vadd.f32 %v563, %v565
        %567 = vset.pattern.permute.xlu0 2
        %568 = vperm.xlu0 %567, %v541
        %v569 = vpop.permute.xlu0 %568
        %v571 = vmul.f32 %v569, %v555
        %v572 = vadd.f32 %v566, %v571
        %v573 = vadd.f32 %v572, %v559
        %v574 = vmax.f32 %v573, 0.0
        %v575 = vmul.f32 %v569, %v549
        %v576 = vmul.f32 %v553, %v564
        %v577 = vadd.f32 %v575, %v576
        %578 = vset.pattern.permute.xlu0 3
        %579 = vperm.xlu0 %578, %v541
        %v580 = vpop.permute.xlu0 %579
        %v582 = vmul.f32 %v580, %v555
        %v583 = vadd.f32 %v577, %v582
        %v584 = vadd.f32 %v583, %v559
        %v585 = vmax.f32 %v584, 0.0
        %v586 = vmul.f32 %v580, %v549
        %v587 = vmul.f32 %v569, %v564
        %v588 = vadd.f32 %v586, %v587
        %589 = vset.pattern.permute.xlu0 4
        %590 = vperm.xlu0 %589, %v541
        %v591 = vpop.permute.xlu0 %590
        %v593 = vmul.f32 %v591, %v555
        %v594 = vadd.f32 %v588, %v593
        %v595 = vadd.f32 %v594, %v559
        %v596 = vmax.f32 %v595, 0.0
        %v597 = vmul.f32 %v591, %v549
        %v598 = vmul.f32 %v580, %v564
        %v599 = vadd.f32 %v597, %v598
        %600 = vset.pattern.permute.xlu0 5
        %601 = vperm.xlu0 %600, %v541
        %v602 = vpop.permute.xlu0 %601
        %v604 = vmul.f32 %v602, %v555
        %v605 = vadd.f32 %v599, %v604
        %v606 = vadd.f32 %v605, %v559
        %v607 = vmax.f32 %v606, 0.0
        %v608 = vmul.f32 %v602, %v549
        %v609 = vmul.f32 %v591, %v564
        %v610 = vadd.f32 %v608, %v609
        %611 = vset.pattern.permute.xlu0 6
        %612 = vperm.xlu0 %611, %v541
        %v613 = vpop.permute.xlu0 %612
        %v615 = vmul.f32 %v613, %v555
        %v616 = vadd.f32 %v610, %v615
        %v617 = vadd.f32 %v616, %v559
        %v618 = vmax.f32 %v617, 0.0
        %v619 = vmul.f32 %v613, %v549
        %v620 = vmul.f32 %v602, %v564
        %v621 = vadd.f32 %v619, %v620
        %622 = vset.pattern.permute.xlu0 7
        %623 = vperm.xlu0 %622, %v541
        %v624 = vpop.permute.xlu0 %623
        %v626 = vmul.f32 %v624, %v555
        %v627 = vadd.f32 %v621, %v626
        %v628 = vadd.f32 %v627, %v559
        %v629 = vmax.f32 %v628, 0.0
        %v630 = vmul.f32 %v624, %v549
        %v631 = vmul.f32 %v613, %v564
        %v632 = vadd.f32 %v630, %v631
        %633 = vset.pattern.permute.xlu0 8
        %634 = vperm.xlu0 %633, %v541
        %v635 = vpop.permute.xlu0 %634
        %v637 = vmul.f32 %v635, %v555
        %v638 = vadd.f32 %v632, %v637
        %v639 = vadd.f32 %v638, %v559
        %v640 = vmax.f32 %v639, 0.0
        %v641 = vmul.f32 %v635, %v549
        %v642 = vmul.f32 %v624, %v564
        %v643 = vadd.f32 %v641, %v642
        %644 = vset.pattern.permute.xlu0 9
        %645 = vperm.xlu0 %644, %v541
        %v646 = vpop.permute.xlu0 %645
        %v648 = vmul.f32 %v646, %v555
        %v649 = vadd.f32 %v643, %v648
        %v650 = vadd.f32 %v649, %v559
        %v651 = vmax.f32 %v650, 0.0
        %v652 = vmul.f32 %v646, %v549
        %v653 = vmul.f32 %v635, %v564
        %v654 = vadd.f32 %v652, %v653
        %655 = vset.pattern.permute.xlu0 10
        %656 = vperm.xlu0 %655, %v541
        %v657 = vpop.permute.xlu0 %656
        %v659 = vmul.f32 %v657, %v555
        %v660 = vadd.f32 %v654, %v659
        %v661 = vadd.f32 %v660, %v559
        %v662 = vmax.f32 %v661, 0.0
        %v663 = vmul.f32 %v657, %v549
        %v664 = vmul.f32 %v646, %v564
        %v665 = vadd.f32 %v663, %v664
        %666 = vset.pattern.permute.xlu0 11
        %667 = vperm.xlu0 %666, %v541
        %v668 = vpop.permute.xlu0 %667
        %v670 = vmul.f32 %v668, %v555
        %v671 = vadd.f32 %v665, %v670
        %v672 = vadd.f32 %v671, %v559
        %v673 = vmax.f32 %v672, 0.0
        %v674 = vmul.f32 %v668, %v549
        %v675 = vmul.f32 %v657, %v564
        %v676 = vadd.f32 %v674, %v675
        %677 = vset.pattern.permute.xlu0 12
        %678 = vperm.xlu0 %677, %v541
        %v679 = vpop.permute.xlu0 %678
        %v681 = vmul.f32 %v679, %v555
        %v682 = vadd.f32 %v676, %v681
        %v683 = vadd.f32 %v682, %v559
        %v684 = vmax.f32 %v683, 0.0
        %v685 = vmul.f32 %v679, %v549
        %v686 = vmul.f32 %v668, %v564
        %v687 = vadd.f32 %v685, %v686
        %688 = vset.pattern.permute.xlu0 13
        %689 = vperm.xlu0 %688, %v541
        %v690 = vpop.permute.xlu0 %689
        %v692 = vmul.f32 %v690, %v555
        %v693 = vadd.f32 %v687, %v692
        %v694 = vadd.f32 %v693, %v559
        %v695 = vmax.f32 %v694, 0.0
        %v696 = vmul.f32 %v690, %v549
        %v697 = vmul.f32 %v679, %v564
        %v698 = vadd.f32 %v696, %v697
        %699 = vset.pattern.permute.xlu0 14
        %700 = vperm.xlu0 %699, %v541
        %v701 = vpop.permute.xlu0 %700
        %v703 = vmul.f32 %v701, %v555
        %v704 = vadd.f32 %v698, %v703
        %v705 = vadd.f32 %v704, %v559
        %v706 = vmax.f32 %v705, 0.0
        %v707 = vmul.f32 %v701, %v549
        %v708 = vmul.f32 %v690, %v564
        %v709 = vadd.f32 %v707, %v708
        %710 = vset.pattern.permute.xlu0 15
        %711 = vperm.xlu0 %710, %v541
        %v712 = vpop.permute.xlu0 %711
        %v714 = vmul.f32 %v712, %v555
        %v715 = vadd.f32 %v709, %v714
        %v716 = vadd.f32 %v715, %v559
        %v717 = vmax.f32 %v716, 0.0
        %v718 = vmul.f32 %v712, %v549
        %v719 = vmul.f32 %v701, %v564
        %v720 = vadd.f32 %v718, %v719
        %v721 = vadd.f32 %v720, %v559
        %v722 = vmax.f32 %v721, 0.0
        %v723 = vmax.f32 %v562, %v574
        %v724 = vmax.f32 %v585, %v596
        %v725 = vmax.f32 %v607, %v618
        %v726 = vmax.f32 %v629, %v640
        %v727 = vmax.f32 %v651, %v662
        %v728 = vmax.f32 %v673, %v684
        %v729 = vmax.f32 %v695, %v706
        %v730 = vmax.f32 %v717, %v722
        %v731 = vld [vmem:[%s4] sm:$0x1]
        %733 = vrot.lane.b32.xlu0 %v724, 64
        %v734 = vpop.permute.xlu0 %733
        %vm736 = vcmask 523264
        %v737 = vsel %vm736, %v723, %v734
        %v738 = vpack.c.bf16 %v737, %v737
        %v739 = vld [vmem:[%s3 + $0x20] sm:$0xf]
        %v740 = vld [vmem:[%s3 + $0x24] sm:$0xf]
        %v741 = vld [vmem:[%s3 + $0x28] sm:$0xf]
        %v742 = vld [vmem:[%s3 + $0x2c] sm:$0xf]
        %v743 = vld [vmem:[%s3 + $0x30] sm:$0xf]
        %v744 = vld [vmem:[%s3 + $0x34] sm:$0xf]
        %v745 = vld [vmem:[%s3 + $0x38] sm:$0xf]
        %v746 = vld [vmem:[%s3 + $0x3c] sm:$0xf]
        %v747 = vld [vmem:[%s3 + $0x40] sm:$0xf]
        %v748 = vld [vmem:[%s3 + $0x44] sm:$0xf]
        %v749 = vld [vmem:[%s3 + $0x48] sm:$0xf]
        %v750 = vld [vmem:[%s3 + $0x4c] sm:$0xf]
        %v751 = vld [vmem:[%s3 + $0x50] sm:$0xf]
        %v752 = vld [vmem:[%s3 + $0x54] sm:$0xf]
        %v753 = vld [vmem:[%s3 + $0x58] sm:$0xf]
        %v754 = vld [vmem:[%s3 + $0x5c] sm:$0xf]
        %v756 = vperm.slane %v731, 0
        %v774 = vunpack.c.l.b16 %v739
        %v775 = vunpack.c.l.b16 %v740
        %v776 = vunpack.c.l.b16 %v741
        %v777 = vunpack.c.l.b16 %v742
        %v778 = vunpack.c.l.b16 %v743
        %v779 = vunpack.c.l.b16 %v744
        %v780 = vunpack.c.l.b16 %v745
        %v781 = vunpack.c.l.b16 %v746
        %v782 = vunpack.c.l.b16 %v747
        %v783 = vunpack.c.l.b16 %v748
        %v784 = vunpack.c.l.b16 %v749
        %v785 = vunpack.c.l.b16 %v750
        %v786 = vunpack.c.l.b16 %v751
        %v787 = vunpack.c.l.b16 %v752
        %v788 = vunpack.c.l.b16 %v753
        %v789 = vunpack.c.l.b16 %v754
        %v790 = vpack.c.b16 %v775, %v774
        %v791 = vpack.c.b16 %v777, %v776
        %v792 = vpack.c.b16 %v779, %v778
        %v793 = vpack.c.b16 %v781, %v780
        %v794 = vpack.c.b16 %v783, %v782
        %v795 = vpack.c.b16 %v785, %v784
        %v796 = vpack.c.b16 %v787, %v786
        %v797 = vpack.c.b16 %v789, %v788
        %806 = vmatpush.bf16.msra.mxu0 %v797
        %807 = vmatpush.bf16.msra.mxu0 %v796
        %808 = vmatpush.bf16.msra.mxu0 %v795
        %809 = vmatpush.bf16.msra.mxu0 %v794
        %810 = vmatpush.bf16.msra.mxu0 %v793
        %811 = vmatpush.bf16.msra.mxu0 %v792
        %812 = vmatpush.bf16.msra.mxu0 %v791
        %813 = vmatpush.bf16.msra.mxu0 %v790
        %814 = vmatmul.bf16.gmra.mxu0 %v738
        %v815 = vpop.f32.mrf.mxu0
        %v816 = vadd.f32 %v756, %v815
        %v817 = vpop.f32.mrf.mxu0
        %818 = vdwg.mxu0
        %v819 = vmax.f32 %v816, 0.0
        %v820 = vpack.c.bf16 %v725, %v725
        %v821 = vld [vmem:[%s3] sm:$0xf]
        %v822 = vld [vmem:[%s3 + $0x4] sm:$0xf]
        %v823 = vld [vmem:[%s3 + $0x8] sm:$0xf]
        %v824 = vld [vmem:[%s3 + $0xc] sm:$0xf]
        %v825 = vld [vmem:[%s3 + $0x10] sm:$0xf]
        %v826 = vld [vmem:[%s3 + $0x14] sm:$0xf]
        %v827 = vld [vmem:[%s3 + $0x18] sm:$0xf]
        %v828 = vld [vmem:[%s3 + $0x1c] sm:$0xf]
        %v837 = vunpack.c.l.b16 %v821
        %v838 = vunpack.c.l.b16 %v822
        %v839 = vunpack.c.l.b16 %v823
        %v840 = vunpack.c.l.b16 %v824
        %v841 = vunpack.c.l.b16 %v825
        %v842 = vunpack.c.l.b16 %v826
        %v843 = vunpack.c.l.b16 %v827
        %v844 = vunpack.c.l.b16 %v828
        %v845 = vpack.c.b16 %v838, %v837
        %v846 = vpack.c.b16 %v840, %v839
        %v847 = vpack.c.b16 %v842, %v841
        %v848 = vpack.c.b16 %v844, %v843
        %v854 = vsel %vm736, %v820, 0
        %856 = vmatpush.bf16.msra.mxu0 %v793
        %857 = vmatpush.bf16.msra.mxu0 %v792
        %858 = vmatpush.bf16.msra.mxu0 %v791
        %859 = vmatpush.bf16.msra.mxu0 %v790
        %860 = vmatpush.bf16.msra.mxu0 %v848
        %861 = vmatpush.bf16.msra.mxu0 %v847
        %862 = vmatpush.bf16.msra.mxu0 %v846
        %863 = vmatpush.bf16.msra.mxu0 %v845
        %864 = vmatmul.bf16.gmra.mxu0 %v738
        %v865 = vpop.f32.mrf.mxu0
        %v866 = vadd.f32 %v756, %v865
        %v867 = vpop.f32.mrf.mxu0
        %868 = vdwg.mxu0
        %869 = vmatpush.bf16.msra.mxu0 0
        %870 = vmatpush.bf16.msra.mxu0 0
        %871 = vmatpush.bf16.msra.mxu0 0
        %872 = vmatpush.bf16.msra.mxu0 0
        %873 = vmatpush.bf16.msra.mxu0 %v797
        %874 = vmatpush.bf16.msra.mxu0 %v796
        %875 = vmatpush.bf16.msra.mxu0 %v795
        %876 = vmatpush.bf16.msra.mxu0 %v794
        %877 = vmatmul.bf16.gmra.mxu0 %v854
        %v878 = vpop.f32.mrf.mxu0
        %v879 = vadd.f32 %v866, %v878
        %v880 = vpop.f32.mrf.mxu0
        %881 = vdwg.mxu0
        %v882 = vmax.f32 %v879, 0.0
        %884 = vrot.lane.b32.xlu0 %v725, 64
        %v885 = vpop.permute.xlu0 %884
        %v887 = vsel %vm736, %v724, %v885
        %v888 = vpack.c.bf16 %v887, %v887
        %v889 = vpack.c.bf16 %v726, %v726
        %v891 = vsel %vm736, %v889, 0
        %893 = vmatpush.bf16.msra.mxu0 %v793
        %894 = vmatpush.bf16.msra.mxu0 %v792
        %895 = vmatpush.bf16.msra.mxu0 %v791
        %896 = vmatpush.bf16.msra.mxu0 %v790
        %897 = vmatpush.bf16.msra.mxu0 %v848
        %898 = vmatpush.bf16.msra.mxu0 %v847
        %899 = vmatpush.bf16.msra.mxu0 %v846
        %900 = vmatpush.bf16.msra.mxu0 %v845
        %901 = vmatmul.bf16.gmra.mxu0 %v888
        %v902 = vpop.f32.mrf.mxu0
        %v903 = vadd.f32 %v756, %v902
        %v904 = vpop.f32.mrf.mxu0
        %905 = vdwg.mxu0
        %906 = vmatpush.bf16.msra.mxu0 0
        %907 = vmatpush.bf16.msra.mxu0 0
        %908 = vmatpush.bf16.msra.mxu0 0
        %909 = vmatpush.bf16.msra.mxu0 0
        %910 = vmatpush.bf16.msra.mxu0 %v797
        %911 = vmatpush.bf16.msra.mxu0 %v796
        %912 = vmatpush.bf16.msra.mxu0 %v795
        %913 = vmatpush.bf16.msra.mxu0 %v794
        %914 = vmatmul.bf16.gmra.mxu0 %v891
        %v915 = vpop.f32.mrf.mxu0
        %v916 = vadd.f32 %v903, %v915
        %v917 = vpop.f32.mrf.mxu0
        %918 = vdwg.mxu0
        %v919 = vmax.f32 %v916, 0.0
        %921 = vrot.lane.b32.xlu0 %v726, 64
        %v922 = vpop.permute.xlu0 %921
        %v924 = vsel %vm736, %v725, %v922
        %v925 = vpack.c.bf16 %v924, %v924
        %v926 = vpack.c.bf16 %v727, %v727
        %v928 = vsel %vm736, %v926, 0
        %930 = vmatpush.bf16.msra.mxu0 %v793
        %931 = vmatpush.bf16.msra.mxu0 %v792
        %932 = vmatpush.bf16.msra.mxu0 %v791
        %933 = vmatpush.bf16.msra.mxu0 %v790
        %934 = vmatpush.bf16.msra.mxu0 %v848
        %935 = vmatpush.bf16.msra.mxu0 %v847
        %936 = vmatpush.bf16.msra.mxu0 %v846
        %937 = vmatpush.bf16.msra.mxu0 %v845
        %938 = vmatmul.bf16.gmra.mxu0 %v925
        %v939 = vpop.f32.mrf.mxu0
        %v940 = vadd.f32 %v756, %v939
        %v941 = vpop.f32.mrf.mxu0
        %942 = vdwg.mxu0
        %943 = vmatpush.bf16.msra.mxu0 0
        %944 = vmatpush.bf16.msra.mxu0 0
        %945 = vmatpush.bf16.msra.mxu0 0
        %946 = vmatpush.bf16.msra.mxu0 0
        %947 = vmatpush.bf16.msra.mxu0 %v797
        %948 = vmatpush.bf16.msra.mxu0 %v796
        %949 = vmatpush.bf16.msra.mxu0 %v795
        %950 = vmatpush.bf16.msra.mxu0 %v794
        %951 = vmatmul.bf16.gmra.mxu0 %v928
        %v952 = vpop.f32.mrf.mxu0
        %v953 = vadd.f32 %v940, %v952
        %v954 = vpop.f32.mrf.mxu0
        %955 = vdwg.mxu0
        %v956 = vmax.f32 %v953, 0.0
        %958 = vrot.lane.b32.xlu0 %v727, 64
        %v959 = vpop.permute.xlu0 %958
        %v961 = vsel %vm736, %v726, %v959
        %v962 = vpack.c.bf16 %v961, %v961
        %v963 = vpack.c.bf16 %v728, %v728
        %v965 = vsel %vm736, %v963, 0
        %967 = vmatpush.bf16.msra.mxu0 %v793
        %968 = vmatpush.bf16.msra.mxu0 %v792
        %969 = vmatpush.bf16.msra.mxu0 %v791
        %970 = vmatpush.bf16.msra.mxu0 %v790
        %971 = vmatpush.bf16.msra.mxu0 %v848
        %972 = vmatpush.bf16.msra.mxu0 %v847
        %973 = vmatpush.bf16.msra.mxu0 %v846
        %974 = vmatpush.bf16.msra.mxu0 %v845
        %975 = vmatmul.bf16.gmra.mxu0 %v962
        %v976 = vpop.f32.mrf.mxu0
        %v977 = vadd.f32 %v756, %v976
        %v978 = vpop.f32.mrf.mxu0
        %979 = vdwg.mxu0
        %980 = vmatpush.bf16.msra.mxu0 0
        %981 = vmatpush.bf16.msra.mxu0 0
        %982 = vmatpush.bf16.msra.mxu0 0
        %983 = vmatpush.bf16.msra.mxu0 0
        %984 = vmatpush.bf16.msra.mxu0 %v797
        %985 = vmatpush.bf16.msra.mxu0 %v796
        %986 = vmatpush.bf16.msra.mxu0 %v795
        %987 = vmatpush.bf16.msra.mxu0 %v794
        %988 = vmatmul.bf16.gmra.mxu0 %v965
        %v989 = vpop.f32.mrf.mxu0
        %v990 = vadd.f32 %v977, %v989
        %v991 = vpop.f32.mrf.mxu0
        %992 = vdwg.mxu0
        %v993 = vmax.f32 %v990, 0.0
        %995 = vrot.lane.b32.xlu0 %v728, 64
        %v996 = vpop.permute.xlu0 %995
        %v998 = vsel %vm736, %v727, %v996
        %v999 = vpack.c.bf16 %v998, %v998
        %v1000 = vpack.c.bf16 %v729, %v729
        %v1002 = vsel %vm736, %v1000, 0
        %1004 = vmatpush.bf16.msra.mxu0 %v793
        %1005 = vmatpush.bf16.msra.mxu0 %v792
        %1006 = vmatpush.bf16.msra.mxu0 %v791
        %1007 = vmatpush.bf16.msra.mxu0 %v790
        %1008 = vmatpush.bf16.msra.mxu0 %v848
        %1009 = vmatpush.bf16.msra.mxu0 %v847
        %1010 = vmatpush.bf16.msra.mxu0 %v846
        %1011 = vmatpush.bf16.msra.mxu0 %v845
        %1012 = vmatmul.bf16.gmra.mxu0 %v999
        %v1013 = vpop.f32.mrf.mxu0
        %v1014 = vadd.f32 %v756, %v1013
        %v1015 = vpop.f32.mrf.mxu0
        %1016 = vdwg.mxu0
        %1017 = vmatpush.bf16.msra.mxu0 0
        %1018 = vmatpush.bf16.msra.mxu0 0
        %1019 = vmatpush.bf16.msra.mxu0 0
        %1020 = vmatpush.bf16.msra.mxu0 0
        %1021 = vmatpush.bf16.msra.mxu0 %v797
        %1022 = vmatpush.bf16.msra.mxu0 %v796
        %1023 = vmatpush.bf16.msra.mxu0 %v795
        %1024 = vmatpush.bf16.msra.mxu0 %v794
        %1025 = vmatmul.bf16.gmra.mxu0 %v1002
        %v1026 = vpop.f32.mrf.mxu0
        %v1027 = vadd.f32 %v1014, %v1026
        %v1028 = vpop.f32.mrf.mxu0
        %1029 = vdwg.mxu0
        %v1030 = vmax.f32 %v1027, 0.0
        %1032 = vrot.lane.b32.xlu0 %v729, 64
        %v1033 = vpop.permute.xlu0 %1032
        %v1035 = vsel %vm736, %v728, %v1033
        %v1036 = vpack.c.bf16 %v1035, %v1035
        %v1037 = vpack.c.bf16 %v730, %v730
        %v1039 = vsel %vm736, %v1037, 0
        %1041 = vmatpush.bf16.msra.mxu0 %v793
        %1042 = vmatpush.bf16.msra.mxu0 %v792
        %1043 = vmatpush.bf16.msra.mxu0 %v791
        %1044 = vmatpush.bf16.msra.mxu0 %v790
        %1045 = vmatpush.bf16.msra.mxu0 %v848
        %1046 = vmatpush.bf16.msra.mxu0 %v847
        %1047 = vmatpush.bf16.msra.mxu0 %v846
        %1048 = vmatpush.bf16.msra.mxu0 %v845
        %1049 = vmatmul.bf16.gmra.mxu0 %v1036
        %v1050 = vpop.f32.mrf.mxu0
        %v1051 = vadd.f32 %v756, %v1050
        %v1052 = vpop.f32.mrf.mxu0
        %1053 = vdwg.mxu0
        %1054 = vmatpush.bf16.msra.mxu0 0
        %1055 = vmatpush.bf16.msra.mxu0 0
        %1056 = vmatpush.bf16.msra.mxu0 0
        %1057 = vmatpush.bf16.msra.mxu0 0
        %1058 = vmatpush.bf16.msra.mxu0 %v797
        %1059 = vmatpush.bf16.msra.mxu0 %v796
        %1060 = vmatpush.bf16.msra.mxu0 %v795
        %1061 = vmatpush.bf16.msra.mxu0 %v794
        %1062 = vmatmul.bf16.gmra.mxu0 %v1039
        %v1063 = vpop.f32.mrf.mxu0
        %v1064 = vadd.f32 %v1051, %v1063
        %v1065 = vpop.f32.mrf.mxu0
        %1066 = vdwg.mxu0
        %v1067 = vmax.f32 %v1064, 0.0
        %1069 = vrot.lane.b32.xlu0 %v730, 64
        %v1070 = vpop.permute.xlu0 %1069
        %v1072 = vsel %vm736, %v729, %v1070
        %v1073 = vpack.c.bf16 %v1072, %v1072
        %v1074 = vld [vmem:[%s3] sm:$0xf]
        %v1075 = vld [vmem:[%s3 + $0x4] sm:$0xf]
        %v1076 = vld [vmem:[%s3 + $0x8] sm:$0xf]
        %v1077 = vld [vmem:[%s3 + $0xc] sm:$0xf]
        %v1078 = vld [vmem:[%s3 + $0x10] sm:$0xf]
        %v1079 = vld [vmem:[%s3 + $0x14] sm:$0xf]
        %v1080 = vld [vmem:[%s3 + $0x18] sm:$0xf]
        %v1081 = vld [vmem:[%s3 + $0x1c] sm:$0xf]
        %v1082 = vld [vmem:[%s3 + $0x20] sm:$0xf]
        %v1083 = vld [vmem:[%s3 + $0x24] sm:$0xf]
        %v1084 = vld [vmem:[%s3 + $0x28] sm:$0xf]
        %v1085 = vld [vmem:[%s3 + $0x2c] sm:$0xf]
        %v1086 = vld [vmem:[%s3 + $0x30] sm:$0xf]
        %v1087 = vld [vmem:[%s3 + $0x34] sm:$0xf]
        %v1088 = vld [vmem:[%s3 + $0x38] sm:$0xf]
        %v1089 = vld [vmem:[%s3 + $0x3c] sm:$0xf]
        %v1106 = vunpack.c.l.b16 %v1074
        %v1107 = vunpack.c.l.b16 %v1075
        %v1108 = vunpack.c.l.b16 %v1076
        %v1109 = vunpack.c.l.b16 %v1077
        %v1110 = vunpack.c.l.b16 %v1078
        %v1111 = vunpack.c.l.b16 %v1079
        %v1112 = vunpack.c.l.b16 %v1080
        %v1113 = vunpack.c.l.b16 %v1081
        %v1114 = vunpack.c.l.b16 %v1082
        %v1115 = vunpack.c.l.b16 %v1083
        %v1116 = vunpack.c.l.b16 %v1084
        %v1117 = vunpack.c.l.b16 %v1085
        %v1118 = vunpack.c.l.b16 %v1086
        %v1119 = vunpack.c.l.b16 %v1087
        %v1120 = vunpack.c.l.b16 %v1088
        %v1121 = vunpack.c.l.b16 %v1089
        %v1122 = vpack.c.b16 %v1107, %v1106
        %v1123 = vpack.c.b16 %v1109, %v1108
        %v1124 = vpack.c.b16 %v1111, %v1110
        %v1125 = vpack.c.b16 %v1113, %v1112
        %v1126 = vpack.c.b16 %v1115, %v1114
        %v1127 = vpack.c.b16 %v1117, %v1116
        %v1128 = vpack.c.b16 %v1119, %v1118
        %v1129 = vpack.c.b16 %v1121, %v1120
        %1138 = vmatpush.bf16.msra.mxu0 %v1129
        %1139 = vmatpush.bf16.msra.mxu0 %v1128
        %1140 = vmatpush.bf16.msra.mxu0 %v1127
        %1141 = vmatpush.bf16.msra.mxu0 %v1126
        %1142 = vmatpush.bf16.msra.mxu0 %v1125
        %1143 = vmatpush.bf16.msra.mxu0 %v1124
        %1144 = vmatpush.bf16.msra.mxu0 %v1123
        %1145 = vmatpush.bf16.msra.mxu0 %v1122
        %1146 = vmatmul.bf16.gmra.mxu0 %v1073
        %v1147 = vpop.f32.mrf.mxu0
        %v1148 = vadd.f32 %v756, %v1147
        %v1149 = vpop.f32.mrf.mxu0
        %1150 = vdwg.mxu0
        %v1151 = vmax.f32 %v1148, 0.0
        %v1152 = vmax.f32 %v819, %v882
        %v1153 = vmax.f32 %v919, %v956
        %v1154 = vmax.f32 %v993, %v1030
        %v1155 = vmax.f32 %v1067, %v1151
        %v1156 = vld [vmem:[%s6] sm:$0x3]
        %v1157 = vpack.c.bf16 %v1152, %v1152
        %v1158 = vpack.c.bf16 %v1153, %v1153
        %v1159 = vld [vmem:[#allocation2 + $0x80] sm:$0xff]
        %v1160 = vld [vmem:[#allocation2 + $0x88] sm:$0xff]
        %v1161 = vld [vmem:[#allocation2 + $0x90] sm:$0xff]
        %v1162 = vld [vmem:[#allocation2 + $0x98] sm:$0xff]
        %v1163 = vld [vmem:[#allocation2 + $0xa0] sm:$0xff]
        %v1164 = vld [vmem:[#allocation2 + $0xa8] sm:$0xff]
        %v1165 = vld [vmem:[#allocation2 + $0xb0] sm:$0xff]
        %v1166 = vld [vmem:[#allocation2 + $0xb8] sm:$0xff]
        %v1167 = vld [vmem:[#allocation2 + $0xc0] sm:$0xff]
        %v1168 = vld [vmem:[#allocation2 + $0xc8] sm:$0xff]
        %v1169 = vld [vmem:[#allocation2 + $0xd0] sm:$0xff]
        %v1170 = vld [vmem:[#allocation2 + $0xd8] sm:$0xff]
        %v1171 = vld [vmem:[#allocation2 + $0xe0] sm:$0xff]
        %v1172 = vld [vmem:[#allocation2 + $0xe8] sm:$0xff]
        %v1173 = vld [vmem:[#allocation2 + $0xf0] sm:$0xff]
        %v1174 = vld [vmem:[#allocation2 + $0xf8] sm:$0xff]
        %v1175 = vld [vmem:[#allocation2 + $0x100] sm:$0xff]
        %v1176 = vld [vmem:[#allocation2 + $0x108] sm:$0xff]
        %v1177 = vld [vmem:[#allocation2 + $0x110] sm:$0xff]
        %v1178 = vld [vmem:[#allocation2 + $0x118] sm:$0xff]
        %v1179 = vld [vmem:[#allocation2 + $0x120] sm:$0xff]
        %v1180 = vld [vmem:[#allocation2 + $0x128] sm:$0xff]
        %v1181 = vld [vmem:[#allocation2 + $0x130] sm:$0xff]
        %v1182 = vld [vmem:[#allocation2 + $0x138] sm:$0xff]
        %v1183 = vld [vmem:[#allocation2 + $0x140] sm:$0xff]
        %v1184 = vld [vmem:[#allocation2 + $0x148] sm:$0xff]
        %v1185 = vld [vmem:[#allocation2 + $0x150] sm:$0xff]
        %v1186 = vld [vmem:[#allocation2 + $0x158] sm:$0xff]
        %v1187 = vld [vmem:[#allocation2 + $0x160] sm:$0xff]
        %v1188 = vld [vmem:[#allocation2 + $0x168] sm:$0xff]
        %v1189 = vld [vmem:[#allocation2 + $0x170] sm:$0xff]
        %v1190 = vld [vmem:[#allocation2 + $0x178] sm:$0xff]
        %v1192 = vperm.slane %v1156, 0
        %v1193 = vperm.slane %v1156, 1
        %v1228 = vunpack.c.l.b16 %v1159
        %v1229 = vunpack.c.h.b16 %v1159
        %v1230 = vunpack.c.l.b16 %v1160
        %v1231 = vunpack.c.h.b16 %v1160
        %v1232 = vunpack.c.l.b16 %v1161
        %v1233 = vunpack.c.h.b16 %v1161
        %v1234 = vunpack.c.l.b16 %v1162
        %v1235 = vunpack.c.h.b16 %v1162
        %v1236 = vunpack.c.l.b16 %v1163
        %v1237 = vunpack.c.h.b16 %v1163
        %v1238 = vunpack.c.l.b16 %v1164
        %v1239 = vunpack.c.h.b16 %v1164
        %v1240 = vunpack.c.l.b16 %v1165
        %v1241 = vunpack.c.h.b16 %v1165
        %v1242 = vunpack.c.l.b16 %v1166
        %v1243 = vunpack.c.h.b16 %v1166
        %v1244 = vunpack.c.l.b16 %v1167
        %v1245 = vunpack.c.h.b16 %v1167
        %v1246 = vunpack.c.l.b16 %v1168
        %v1247 = vunpack.c.h.b16 %v1168
        %v1248 = vunpack.c.l.b16 %v1169
        %v1249 = vunpack.c.h.b16 %v1169
        %v1250 = vunpack.c.l.b16 %v1170
        %v1251 = vunpack.c.h.b16 %v1170
        %v1252 = vunpack.c.l.b16 %v1171
        %v1253 = vunpack.c.h.b16 %v1171
        %v1254 = vunpack.c.l.b16 %v1172
        %v1255 = vunpack.c.h.b16 %v1172
        %v1256 = vunpack.c.l.b16 %v1173
        %v1257 = vunpack.c.h.b16 %v1173
        %v1258 = vunpack.c.l.b16 %v1174
        %v1259 = vunpack.c.h.b16 %v1174
        %v1260 = vunpack.c.l.b16 %v1175
        %v1261 = vunpack.c.h.b16 %v1175
        %v1262 = vunpack.c.l.b16 %v1176
        %v1263 = vunpack.c.h.b16 %v1176
        %v1264 = vunpack.c.l.b16 %v1177
        %v1265 = vunpack.c.h.b16 %v1177
        %v1266 = vunpack.c.l.b16 %v1178
        %v1267 = vunpack.c.h.b16 %v1178
        %v1268 = vunpack.c.l.b16 %v1179
        %v1269 = vunpack.c.h.b16 %v1179
        %v1270 = vunpack.c.l.b16 %v1180
        %v1271 = vunpack.c.h.b16 %v1180
        %v1272 = vunpack.c.l.b16 %v1181
        %v1273 = vunpack.c.h.b16 %v1181
        %v1274 = vunpack.c.l.b16 %v1182
        %v1275 = vunpack.c.h.b16 %v1182
        %v1276 = vunpack.c.l.b16 %v1183
        %v1277 = vunpack.c.h.b16 %v1183
        %v1278 = vunpack.c.l.b16 %v1184
        %v1279 = vunpack.c.h.b16 %v1184
        %v1280 = vunpack.c.l.b16 %v1185
        %v1281 = vunpack.c.h.b16 %v1185
        %v1282 = vunpack.c.l.b16 %v1186
        %v1283 = vunpack.c.h.b16 %v1186
        %v1284 = vunpack.c.l.b16 %v1187
        %v1285 = vunpack.c.h.b16 %v1187
        %v1286 = vunpack.c.l.b16 %v1188
        %v1287 = vunpack.c.h.b16 %v1188
        %v1288 = vunpack.c.l.b16 %v1189
        %v1289 = vunpack.c.h.b16 %v1189
        %v1290 = vunpack.c.l.b16 %v1190
        %v1291 = vunpack.c.h.b16 %v1190
        %v1292 = vpack.c.b16 %v1230, %v1228
        %v1293 = vpack.c.b16 %v1231, %v1229
        %v1294 = vpack.c.b16 %v1234, %v1232
        %v1295 = vpack.c.b16 %v1235, %v1233
        %v1296 = vpack.c.b16 %v1238, %v1236
        %v1297 = vpack.c.b16 %v1239, %v1237
        %v1298 = vpack.c.b16 %v1242, %v1240
        %v1299 = vpack.c.b16 %v1243, %v1241
        %v1300 = vpack.c.b16 %v1246, %v1244
        %v1301 = vpack.c.b16 %v1247, %v1245
        %v1302 = vpack.c.b16 %v1250, %v1248
        %v1303 = vpack.c.b16 %v1251, %v1249
        %v1304 = vpack.c.b16 %v1254, %v1252
        %v1305 = vpack.c.b16 %v1255, %v1253
        %v1306 = vpack.c.b16 %v1258, %v1256
        %v1307 = vpack.c.b16 %v1259, %v1257
        %v1308 = vpack.c.b16 %v1262, %v1260
        %v1309 = vpack.c.b16 %v1263, %v1261
        %v1310 = vpack.c.b16 %v1266, %v1264
        %v1311 = vpack.c.b16 %v1267, %v1265
        %v1312 = vpack.c.b16 %v1270, %v1268
        %v1313 = vpack.c.b16 %v1271, %v1269
        %v1314 = vpack.c.b16 %v1274, %v1272
        %v1315 = vpack.c.b16 %v1275, %v1273
        %v1316 = vpack.c.b16 %v1278, %v1276
        %v1317 = vpack.c.b16 %v1279, %v1277
        %v1318 = vpack.c.b16 %v1282, %v1280
        %v1319 = vpack.c.b16 %v1283, %v1281
        %v1320 = vpack.c.b16 %v1286, %v1284
        %v1321 = vpack.c.b16 %v1287, %v1285
        %v1322 = vpack.c.b16 %v1290, %v1288
        %v1323 = vpack.c.b16 %v1291, %v1289
        %1356 = vmatpush.bf16.msra.mxu0 %v1306
        %1357 = vmatpush.bf16.msra.mxu0 %v1304
        %1358 = vmatpush.bf16.msra.mxu0 %v1302
        %1359 = vmatpush.bf16.msra.mxu0 %v1300
        %1360 = vmatpush.bf16.msra.mxu0 %v1298
        %1361 = vmatpush.bf16.msra.mxu0 %v1296
        %1362 = vmatpush.bf16.msra.mxu0 %v1294
        %1363 = vmatpush.bf16.msra.mxu0 %v1292
        %1364 = vmatmul.bf16.gmra.mxu0 %v1157
        %v1365 = vpop.f32.mrf.mxu0
        %v1366 = vadd.f32 %v1192, %v1365
        %v1367 = vpop.f32.mrf.mxu0
        %1368 = vdwg.mxu0
        %1369 = vmatpush.bf16.msra.mxu0 %v1322
        %1370 = vmatpush.bf16.msra.mxu0 %v1320
        %1371 = vmatpush.bf16.msra.mxu0 %v1318
        %1372 = vmatpush.bf16.msra.mxu0 %v1316
        %1373 = vmatpush.bf16.msra.mxu0 %v1314
        %1374 = vmatpush.bf16.msra.mxu0 %v1312
        %1375 = vmatpush.bf16.msra.mxu0 %v1310
        %1376 = vmatpush.bf16.msra.mxu0 %v1308
        %1377 = vmatmul.bf16.gmra.mxu0 %v1158
        %v1378 = vpop.f32.mrf.mxu0
        %v1379 = vadd.f32 %v1366, %v1378
        %v1380 = vpop.f32.mrf.mxu0
        %1381 = vdwg.mxu0
        %1382 = vmatpush.bf16.msra.mxu0 %v1307
        %1383 = vmatpush.bf16.msra.mxu0 %v1305
        %1384 = vmatpush.bf16.msra.mxu0 %v1303
        %1385 = vmatpush.bf16.msra.mxu0 %v1301
        %1386 = vmatpush.bf16.msra.mxu0 %v1299
        %1387 = vmatpush.bf16.msra.mxu0 %v1297
        %1388 = vmatpush.bf16.msra.mxu0 %v1295
        %1389 = vmatpush.bf16.msra.mxu0 %v1293
        %1390 = vmatmul.bf16.gmra.mxu0 %v1157
        %v1391 = vpop.f32.mrf.mxu0
        %v1392 = vadd.f32 %v1193, %v1391
        %v1393 = vpop.f32.mrf.mxu0
        %1394 = vdwg.mxu0
        %1395 = vmatpush.bf16.msra.mxu0 %v1323
        %1396 = vmatpush.bf16.msra.mxu0 %v1321
        %1397 = vmatpush.bf16.msra.mxu0 %v1319
        %1398 = vmatpush.bf16.msra.mxu0 %v1317
        %1399 = vmatpush.bf16.msra.mxu0 %v1315
        %1400 = vmatpush.bf16.msra.mxu0 %v1313
        %1401 = vmatpush.bf16.msra.mxu0 %v1311
        %1402 = vmatpush.bf16.msra.mxu0 %v1309
        %1403 = vmatmul.bf16.gmra.mxu0 %v1158
        %v1404 = vpop.f32.mrf.mxu0
        %v1405 = vadd.f32 %v1392, %v1404
        %v1406 = vpop.f32.mrf.mxu0
        %1407 = vdwg.mxu0
        %v1408 = vmax.f32 %v1379, 0.0
        %v1409 = vmax.f32 %v1405, 0.0
        %v1410 = vpack.c.bf16 %v1154, %v1154
        %v1411 = vld [vmem:[#allocation2] sm:$0xff]
        %v1412 = vld [vmem:[#allocation2 + $0x8] sm:$0xff]
        %v1413 = vld [vmem:[#allocation2 + $0x10] sm:$0xff]
        %v1414 = vld [vmem:[#allocation2 + $0x18] sm:$0xff]
        %v1415 = vld [vmem:[#allocation2 + $0x20] sm:$0xff]
        %v1416 = vld [vmem:[#allocation2 + $0x28] sm:$0xff]
        %v1417 = vld [vmem:[#allocation2 + $0x30] sm:$0xff]
        %v1418 = vld [vmem:[#allocation2 + $0x38] sm:$0xff]
        %v1419 = vld [vmem:[#allocation2 + $0x40] sm:$0xff]
        %v1420 = vld [vmem:[#allocation2 + $0x48] sm:$0xff]
        %v1421 = vld [vmem:[#allocation2 + $0x50] sm:$0xff]
        %v1422 = vld [vmem:[#allocation2 + $0x58] sm:$0xff]
        %v1423 = vld [vmem:[#allocation2 + $0x60] sm:$0xff]
        %v1424 = vld [vmem:[#allocation2 + $0x68] sm:$0xff]
        %v1425 = vld [vmem:[#allocation2 + $0x70] sm:$0xff]
        %v1426 = vld [vmem:[#allocation2 + $0x78] sm:$0xff]
        %v1443 = vunpack.c.l.b16 %v1411
        %v1444 = vunpack.c.h.b16 %v1411
        %v1445 = vunpack.c.l.b16 %v1412
        %v1446 = vunpack.c.h.b16 %v1412
        %v1447 = vunpack.c.l.b16 %v1413
        %v1448 = vunpack.c.h.b16 %v1413
        %v1449 = vunpack.c.l.b16 %v1414
        %v1450 = vunpack.c.h.b16 %v1414
        %v1451 = vunpack.c.l.b16 %v1415
        %v1452 = vunpack.c.h.b16 %v1415
        %v1453 = vunpack.c.l.b16 %v1416
        %v1454 = vunpack.c.h.b16 %v1416
        %v1455 = vunpack.c.l.b16 %v1417
        %v1456 = vunpack.c.h.b16 %v1417
        %v1457 = vunpack.c.l.b16 %v1418
        %v1458 = vunpack.c.h.b16 %v1418
        %v1459 = vunpack.c.l.b16 %v1419
        %v1460 = vunpack.c.h.b16 %v1419
        %v1461 = vunpack.c.l.b16 %v1420
        %v1462 = vunpack.c.h.b16 %v1420
        %v1463 = vunpack.c.l.b16 %v1421
        %v1464 = vunpack.c.h.b16 %v1421
        %v1465 = vunpack.c.l.b16 %v1422
        %v1466 = vunpack.c.h.b16 %v1422
        %v1467 = vunpack.c.l.b16 %v1423
        %v1468 = vunpack.c.h.b16 %v1423
        %v1469 = vunpack.c.l.b16 %v1424
        %v1470 = vunpack.c.h.b16 %v1424
        %v1471 = vunpack.c.l.b16 %v1425
        %v1472 = vunpack.c.h.b16 %v1425
        %v1473 = vunpack.c.l.b16 %v1426
        %v1474 = vunpack.c.h.b16 %v1426
        %v1475 = vpack.c.b16 %v1445, %v1443
        %v1476 = vpack.c.b16 %v1446, %v1444
        %v1477 = vpack.c.b16 %v1449, %v1447
        %v1478 = vpack.c.b16 %v1450, %v1448
        %v1479 = vpack.c.b16 %v1453, %v1451
        %v1480 = vpack.c.b16 %v1454, %v1452
        %v1481 = vpack.c.b16 %v1457, %v1455
        %v1482 = vpack.c.b16 %v1458, %v1456
        %v1483 = vpack.c.b16 %v1461, %v1459
        %v1484 = vpack.c.b16 %v1462, %v1460
        %v1485 = vpack.c.b16 %v1465, %v1463
        %v1486 = vpack.c.b16 %v1466, %v1464
        %v1487 = vpack.c.b16 %v1469, %v1467
        %v1488 = vpack.c.b16 %v1470, %v1468
        %v1489 = vpack.c.b16 %v1473, %v1471
        %v1490 = vpack.c.b16 %v1474, %v1472
        %1507 = vmatpush.bf16.msra.mxu0 %v1489
        %1508 = vmatpush.bf16.msra.mxu0 %v1487
        %1509 = vmatpush.bf16.msra.mxu0 %v1485
        %1510 = vmatpush.bf16.msra.mxu0 %v1483
        %1511 = vmatpush.bf16.msra.mxu0 %v1481
        %1512 = vmatpush.bf16.msra.mxu0 %v1479
        %1513 = vmatpush.bf16.msra.mxu0 %v1477
        %1514 = vmatpush.bf16.msra.mxu0 %v1475
        %1515 = vmatmul.bf16.gmra.mxu0 %v1157
        %v1516 = vpop.f32.mrf.mxu0
        %v1517 = vadd.f32 %v1192, %v1516
        %v1518 = vpop.f32.mrf.mxu0
        %1519 = vdwg.mxu0
        %1520 = vmatpush.bf16.msra.mxu0 %v1306
        %1521 = vmatpush.bf16.msra.mxu0 %v1304
        %1522 = vmatpush.bf16.msra.mxu0 %v1302
        %1523 = vmatpush.bf16.msra.mxu0 %v1300
        %1524 = vmatpush.bf16.msra.mxu0 %v1298
        %1525 = vmatpush.bf16.msra.mxu0 %v1296
        %1526 = vmatpush.bf16.msra.mxu0 %v1294
        %1527 = vmatpush.bf16.msra.mxu0 %v1292
        %1528 = vmatmul.bf16.gmra.mxu0 %v1158
        %v1529 = vpop.f32.mrf.mxu0
        %v1530 = vadd.f32 %v1517, %v1529
        %v1531 = vpop.f32.mrf.mxu0
        %1532 = vdwg.mxu0
        %1533 = vmatpush.bf16.msra.mxu0 %v1322
        %1534 = vmatpush.bf16.msra.mxu0 %v1320
        %1535 = vmatpush.bf16.msra.mxu0 %v1318
        %1536 = vmatpush.bf16.msra.mxu0 %v1316
        %1537 = vmatpush.bf16.msra.mxu0 %v1314
        %1538 = vmatpush.bf16.msra.mxu0 %v1312
        %1539 = vmatpush.bf16.msra.mxu0 %v1310
        %1540 = vmatpush.bf16.msra.mxu0 %v1308
        %1541 = vmatmul.bf16.gmra.mxu0 %v1410
        %v1542 = vpop.f32.mrf.mxu0
        %v1543 = vadd.f32 %v1530, %v1542
        %v1544 = vpop.f32.mrf.mxu0
        %1545 = vdwg.mxu0
        %1546 = vmatpush.bf16.msra.mxu0 %v1490
        %1547 = vmatpush.bf16.msra.mxu0 %v1488
        %1548 = vmatpush.bf16.msra.mxu0 %v1486
        %1549 = vmatpush.bf16.msra.mxu0 %v1484
        %1550 = vmatpush.bf16.msra.mxu0 %v1482
        %1551 = vmatpush.bf16.msra.mxu0 %v1480
        %1552 = vmatpush.bf16.msra.mxu0 %v1478
        %1553 = vmatpush.bf16.msra.mxu0 %v1476
        %1554 = vmatmul.bf16.gmra.mxu0 %v1157
        %v1555 = vpop.f32.mrf.mxu0
        %v1556 = vadd.f32 %v1193, %v1555
        %v1557 = vpop.f32.mrf.mxu0
        %1558 = vdwg.mxu0
        %1559 = vmatpush.bf16.msra.mxu0 %v1307
        %1560 = vmatpush.bf16.msra.mxu0 %v1305
        %1561 = vmatpush.bf16.msra.mxu0 %v1303
        %1562 = vmatpush.bf16.msra.mxu0 %v1301
        %1563 = vmatpush.bf16.msra.mxu0 %v1299
        %1564 = vmatpush.bf16.msra.mxu0 %v1297
        %1565 = vmatpush.bf16.msra.mxu0 %v1295
        %1566 = vmatpush.bf16.msra.mxu0 %v1293
        %1567 = vmatmul.bf16.gmra.mxu0 %v1158
        %v1568 = vpop.f32.mrf.mxu0
        %v1569 = vadd.f32 %v1556, %v1568
        %v1570 = vpop.f32.mrf.mxu0
        %1571 = vdwg.mxu0
        %1572 = vmatpush.bf16.msra.mxu0 %v1323
        %1573 = vmatpush.bf16.msra.mxu0 %v1321
        %1574 = vmatpush.bf16.msra.mxu0 %v1319
        %1575 = vmatpush.bf16.msra.mxu0 %v1317
        %1576 = vmatpush.bf16.msra.mxu0 %v1315
        %1577 = vmatpush.bf16.msra.mxu0 %v1313
        %1578 = vmatpush.bf16.msra.mxu0 %v1311
        %1579 = vmatpush.bf16.msra.mxu0 %v1309
        %1580 = vmatmul.bf16.gmra.mxu0 %v1410
        %v1581 = vpop.f32.mrf.mxu0
        %v1582 = vadd.f32 %v1569, %v1581
        %v1583 = vpop.f32.mrf.mxu0
        %1584 = vdwg.mxu0
        %v1585 = vmax.f32 %v1543, 0.0
        %v1586 = vmax.f32 %v1582, 0.0
        %v1587 = vpack.c.bf16 %v1155, %v1155
        %1588 = vmatpush.bf16.msra.mxu0 %v1489
        %1589 = vmatpush.bf16.msra.mxu0 %v1487
        %1590 = vmatpush.bf16.msra.mxu0 %v1485
        %1591 = vmatpush.bf16.msra.mxu0 %v1483
        %1592 = vmatpush.bf16.msra.mxu0 %v1481
        %1593 = vmatpush.bf16.msra.mxu0 %v1479
        %1594 = vmatpush.bf16.msra.mxu0 %v1477
        %1595 = vmatpush.bf16.msra.mxu0 %v1475
        %1596 = vmatmul.bf16.gmra.mxu0 %v1158
        %v1597 = vpop.f32.mrf.mxu0
        %v1598 = vadd.f32 %v1192, %v1597
        %v1599 = vpop.f32.mrf.mxu0
        %1600 = vdwg.mxu0
        %1601 = vmatpush.bf16.msra.mxu0 %v1306
        %1602 = vmatpush.bf16.msra.mxu0 %v1304
        %1603 = vmatpush.bf16.msra.mxu0 %v1302
        %1604 = vmatpush.bf16.msra.mxu0 %v1300
        %1605 = vmatpush.bf16.msra.mxu0 %v1298
        %1606 = vmatpush.bf16.msra.mxu0 %v1296
        %1607 = vmatpush.bf16.msra.mxu0 %v1294
        %1608 = vmatpush.bf16.msra.mxu0 %v1292
        %1609 = vmatmul.bf16.gmra.mxu0 %v1410
        %v1610 = vpop.f32.mrf.mxu0
        %v1611 = vadd.f32 %v1598, %v1610
        %v1612 = vpop.f32.mrf.mxu0
        %1613 = vdwg.mxu0
        %1614 = vmatpush.bf16.msra.mxu0 %v1322
        %1615 = vmatpush.bf16.msra.mxu0 %v1320
        %1616 = vmatpush.bf16.msra.mxu0 %v1318
        %1617 = vmatpush.bf16.msra.mxu0 %v1316
        %1618 = vmatpush.bf16.msra.mxu0 %v1314
        %1619 = vmatpush.bf16.msra.mxu0 %v1312
        %1620 = vmatpush.bf16.msra.mxu0 %v1310
        %1621 = vmatpush.bf16.msra.mxu0 %v1308
        %1622 = vmatmul.bf16.gmra.mxu0 %v1587
        %v1623 = vpop.f32.mrf.mxu0
        %v1624 = vadd.f32 %v1611, %v1623
        %v1625 = vpop.f32.mrf.mxu0
        %1626 = vdwg.mxu0
        %1627 = vmatpush.bf16.msra.mxu0 %v1490
        %1628 = vmatpush.bf16.msra.mxu0 %v1488
        %1629 = vmatpush.bf16.msra.mxu0 %v1486
        %1630 = vmatpush.bf16.msra.mxu0 %v1484
        %1631 = vmatpush.bf16.msra.mxu0 %v1482
        %1632 = vmatpush.bf16.msra.mxu0 %v1480
        %1633 = vmatpush.bf16.msra.mxu0 %v1478
        %1634 = vmatpush.bf16.msra.mxu0 %v1476
        %1635 = vmatmul.bf16.gmra.mxu0 %v1158
        %v1636 = vpop.f32.mrf.mxu0
        %v1637 = vadd.f32 %v1193, %v1636
        %v1638 = vpop.f32.mrf.mxu0
        %1639 = vdwg.mxu0
        %1640 = vmatpush.bf16.msra.mxu0 %v1307
        %1641 = vmatpush.bf16.msra.mxu0 %v1305
        %1642 = vmatpush.bf16.msra.mxu0 %v1303
        %1643 = vmatpush.bf16.msra.mxu0 %v1301
        %1644 = vmatpush.bf16.msra.mxu0 %v1299
        %1645 = vmatpush.bf16.msra.mxu0 %v1297
        %1646 = vmatpush.bf16.msra.mxu0 %v1295
        %1647 = vmatpush.bf16.msra.mxu0 %v1293
        %1648 = vmatmul.bf16.gmra.mxu0 %v1410
        %v1649 = vpop.f32.mrf.mxu0
        %v1650 = vadd.f32 %v1637, %v1649
        %v1651 = vpop.f32.mrf.mxu0
        %1652 = vdwg.mxu0
        %1653 = vmatpush.bf16.msra.mxu0 %v1323
        %1654 = vmatpush.bf16.msra.mxu0 %v1321
        %1655 = vmatpush.bf16.msra.mxu0 %v1319
        %1656 = vmatpush.bf16.msra.mxu0 %v1317
        %1657 = vmatpush.bf16.msra.mxu0 %v1315
        %1658 = vmatpush.bf16.msra.mxu0 %v1313
        %1659 = vmatpush.bf16.msra.mxu0 %v1311
        %1660 = vmatpush.bf16.msra.mxu0 %v1309
        %1661 = vmatmul.bf16.gmra.mxu0 %v1587
        %v1662 = vpop.f32.mrf.mxu0
        %v1663 = vadd.f32 %v1650, %v1662
        %v1664 = vpop.f32.mrf.mxu0
        %1665 = vdwg.mxu0
        %v1666 = vmax.f32 %v1624, 0.0
        %v1667 = vmax.f32 %v1663, 0.0
        %v1668 = vld [vmem:[#allocation2] sm:$0xff]
        %v1669 = vld [vmem:[#allocation2 + $0x8] sm:$0xff]
        %v1670 = vld [vmem:[#allocation2 + $0x10] sm:$0xff]
        %v1671 = vld [vmem:[#allocation2 + $0x18] sm:$0xff]
        %v1672 = vld [vmem:[#allocation2 + $0x20] sm:$0xff]
        %v1673 = vld [vmem:[#allocation2 + $0x28] sm:$0xff]
        %v1674 = vld [vmem:[#allocation2 + $0x30] sm:$0xff]
        %v1675 = vld [vmem:[#allocation2 + $0x38] sm:$0xff]
        %v1676 = vld [vmem:[#allocation2 + $0x40] sm:$0xff]
        %v1677 = vld [vmem:[#allocation2 + $0x48] sm:$0xff]
        %v1678 = vld [vmem:[#allocation2 + $0x50] sm:$0xff]
        %v1679 = vld [vmem:[#allocation2 + $0x58] sm:$0xff]
        %v1680 = vld [vmem:[#allocation2 + $0x60] sm:$0xff]
        %v1681 = vld [vmem:[#allocation2 + $0x68] sm:$0xff]
        %v1682 = vld [vmem:[#allocation2 + $0x70] sm:$0xff]
        %v1683 = vld [vmem:[#allocation2 + $0x78] sm:$0xff]
        %v1684 = vld [vmem:[#allocation2 + $0x80] sm:$0xff]
        %v1685 = vld [vmem:[#allocation2 + $0x88] sm:$0xff]
        %v1686 = vld [vmem:[#allocation2 + $0x90] sm:$0xff]
        %v1687 = vld [vmem:[#allocation2 + $0x98] sm:$0xff]
        %v1688 = vld [vmem:[#allocation2 + $0xa0] sm:$0xff]
        %v1689 = vld [vmem:[#allocation2 + $0xa8] sm:$0xff]
        %v1690 = vld [vmem:[#allocation2 + $0xb0] sm:$0xff]
        %v1691 = vld [vmem:[#allocation2 + $0xb8] sm:$0xff]
        %v1692 = vld [vmem:[#allocation2 + $0xc0] sm:$0xff]
        %v1693 = vld [vmem:[#allocation2 + $0xc8] sm:$0xff]
        %v1694 = vld [vmem:[#allocation2 + $0xd0] sm:$0xff]
        %v1695 = vld [vmem:[#allocation2 + $0xd8] sm:$0xff]
        %v1696 = vld [vmem:[#allocation2 + $0xe0] sm:$0xff]
        %v1697 = vld [vmem:[#allocation2 + $0xe8] sm:$0xff]
        %v1698 = vld [vmem:[#allocation2 + $0xf0] sm:$0xff]
        %v1699 = vld [vmem:[#allocation2 + $0xf8] sm:$0xff]
        %v1732 = vunpack.c.l.b16 %v1668
        %v1733 = vunpack.c.h.b16 %v1668
        %v1734 = vunpack.c.l.b16 %v1669
        %v1735 = vunpack.c.h.b16 %v1669
        %v1736 = vunpack.c.l.b16 %v1670
        %v1737 = vunpack.c.h.b16 %v1670
        %v1738 = vunpack.c.l.b16 %v1671
        %v1739 = vunpack.c.h.b16 %v1671
        %v1740 = vunpack.c.l.b16 %v1672
        %v1741 = vunpack.c.h.b16 %v1672
        %v1742 = vunpack.c.l.b16 %v1673
        %v1743 = vunpack.c.h.b16 %v1673
        %v1744 = vunpack.c.l.b16 %v1674
        %v1745 = vunpack.c.h.b16 %v1674
        %v1746 = vunpack.c.l.b16 %v1675
        %v1747 = vunpack.c.h.b16 %v1675
        %v1748 = vunpack.c.l.b16 %v1676
        %v1749 = vunpack.c.h.b16 %v1676
        %v1750 = vunpack.c.l.b16 %v1677
        %v1751 = vunpack.c.h.b16 %v1677
        %v1752 = vunpack.c.l.b16 %v1678
        %v1753 = vunpack.c.h.b16 %v1678
        %v1754 = vunpack.c.l.b16 %v1679
        %v1755 = vunpack.c.h.b16 %v1679
        %v1756 = vunpack.c.l.b16 %v1680
        %v1757 = vunpack.c.h.b16 %v1680
        %v1758 = vunpack.c.l.b16 %v1681
        %v1759 = vunpack.c.h.b16 %v1681
        %v1760 = vunpack.c.l.b16 %v1682
        %v1761 = vunpack.c.h.b16 %v1682
        %v1762 = vunpack.c.l.b16 %v1683
        %v1763 = vunpack.c.h.b16 %v1683
        %v1764 = vunpack.c.l.b16 %v1684
        %v1765 = vunpack.c.h.b16 %v1684
        %v1766 = vunpack.c.l.b16 %v1685
        %v1767 = vunpack.c.h.b16 %v1685
        %v1768 = vunpack.c.l.b16 %v1686
        %v1769 = vunpack.c.h.b16 %v1686
        %v1770 = vunpack.c.l.b16 %v1687
        %v1771 = vunpack.c.h.b16 %v1687
        %v1772 = vunpack.c.l.b16 %v1688
        %v1773 = vunpack.c.h.b16 %v1688
        %v1774 = vunpack.c.l.b16 %v1689
        %v1775 = vunpack.c.h.b16 %v1689
        %v1776 = vunpack.c.l.b16 %v1690
        %v1777 = vunpack.c.h.b16 %v1690
        %v1778 = vunpack.c.l.b16 %v1691
        %v1779 = vunpack.c.h.b16 %v1691
        %v1780 = vunpack.c.l.b16 %v1692
        %v1781 = vunpack.c.h.b16 %v1692
        %v1782 = vunpack.c.l.b16 %v1693
        %v1783 = vunpack.c.h.b16 %v1693
        %v1784 = vunpack.c.l.b16 %v1694
        %v1785 = vunpack.c.h.b16 %v1694
        %v1786 = vunpack.c.l.b16 %v1695
        %v1787 = vunpack.c.h.b16 %v1695
        %v1788 = vunpack.c.l.b16 %v1696
        %v1789 = vunpack.c.h.b16 %v1696
        %v1790 = vunpack.c.l.b16 %v1697
        %v1791 = vunpack.c.h.b16 %v1697
        %v1792 = vunpack.c.l.b16 %v1698
        %v1793 = vunpack.c.h.b16 %v1698
        %v1794 = vunpack.c.l.b16 %v1699
        %v1795 = vunpack.c.h.b16 %v1699
        %v1796 = vpack.c.b16 %v1734, %v1732
        %v1797 = vpack.c.b16 %v1735, %v1733
        %v1798 = vpack.c.b16 %v1738, %v1736
        %v1799 = vpack.c.b16 %v1739, %v1737
        %v1800 = vpack.c.b16 %v1742, %v1740
        %v1801 = vpack.c.b16 %v1743, %v1741
        %v1802 = vpack.c.b16 %v1746, %v1744
        %v1803 = vpack.c.b16 %v1747, %v1745
        %v1804 = vpack.c.b16 %v1750, %v1748
        %v1805 = vpack.c.b16 %v1751, %v1749
        %v1806 = vpack.c.b16 %v1754, %v1752
        %v1807 = vpack.c.b16 %v1755, %v1753
        %v1808 = vpack.c.b16 %v1758, %v1756
        %v1809 = vpack.c.b16 %v1759, %v1757
        %v1810 = vpack.c.b16 %v1762, %v1760
        %v1811 = vpack.c.b16 %v1763, %v1761
        %v1812 = vpack.c.b16 %v1766, %v1764
        %v1813 = vpack.c.b16 %v1767, %v1765
        %v1814 = vpack.c.b16 %v1770, %v1768
        %v1815 = vpack.c.b16 %v1771, %v1769
        %v1816 = vpack.c.b16 %v1774, %v1772
        %v1817 = vpack.c.b16 %v1775, %v1773
        %v1818 = vpack.c.b16 %v1778, %v1776
        %v1819 = vpack.c.b16 %v1779, %v1777
        %v1820 = vpack.c.b16 %v1782, %v1780
        %v1821 = vpack.c.b16 %v1783, %v1781
        %v1822 = vpack.c.b16 %v1786, %v1784
        %v1823 = vpack.c.b16 %v1787, %v1785
        %v1824 = vpack.c.b16 %v1790, %v1788
        %v1825 = vpack.c.b16 %v1791, %v1789
        %v1826 = vpack.c.b16 %v1794, %v1792
        %v1827 = vpack.c.b16 %v1795, %v1793
        %1860 = vmatpush.bf16.msra.mxu0 %v1810
        %1861 = vmatpush.bf16.msra.mxu0 %v1808
        %1862 = vmatpush.bf16.msra.mxu0 %v1806
        %1863 = vmatpush.bf16.msra.mxu0 %v1804
        %1864 = vmatpush.bf16.msra.mxu0 %v1802
        %1865 = vmatpush.bf16.msra.mxu0 %v1800
        %1866 = vmatpush.bf16.msra.mxu0 %v1798
        %1867 = vmatpush.bf16.msra.mxu0 %v1796
        %1868 = vmatmul.bf16.gmra.mxu0 %v1410
        %v1869 = vpop.f32.mrf.mxu0
        %v1870 = vadd.f32 %v1192, %v1869
        %v1871 = vpop.f32.mrf.mxu0
        %1872 = vdwg.mxu0
        %1873 = vmatpush.bf16.msra.mxu0 %v1826
        %1874 = vmatpush.bf16.msra.mxu0 %v1824
        %1875 = vmatpush.bf16.msra.mxu0 %v1822
        %1876 = vmatpush.bf16.msra.mxu0 %v1820
        %1877 = vmatpush.bf16.msra.mxu0 %v1818
        %1878 = vmatpush.bf16.msra.mxu0 %v1816
        %1879 = vmatpush.bf16.msra.mxu0 %v1814
        %1880 = vmatpush.bf16.msra.mxu0 %v1812
        %1881 = vmatmul.bf16.gmra.mxu0 %v1587
        %v1882 = vpop.f32.mrf.mxu0
        %v1883 = vadd.f32 %v1870, %v1882
        %v1884 = vpop.f32.mrf.mxu0
        %1885 = vdwg.mxu0
        %1886 = vmatpush.bf16.msra.mxu0 %v1811
        %1887 = vmatpush.bf16.msra.mxu0 %v1809
        %1888 = vmatpush.bf16.msra.mxu0 %v1807
        %1889 = vmatpush.bf16.msra.mxu0 %v1805
        %1890 = vmatpush.bf16.msra.mxu0 %v1803
        %1891 = vmatpush.bf16.msra.mxu0 %v1801
        %1892 = vmatpush.bf16.msra.mxu0 %v1799
        %1893 = vmatpush.bf16.msra.mxu0 %v1797
        %1894 = vmatmul.bf16.gmra.mxu0 %v1410
        %v1895 = vpop.f32.mrf.mxu0
        %v1896 = vadd.f32 %v1193, %v1895
        %v1897 = vpop.f32.mrf.mxu0
        %1898 = vdwg.mxu0
        %1899 = vmatpush.bf16.msra.mxu0 %v1827
        %1900 = vmatpush.bf16.msra.mxu0 %v1825
        %1901 = vmatpush.bf16.msra.mxu0 %v1823
        %1902 = vmatpush.bf16.msra.mxu0 %v1821
        %1903 = vmatpush.bf16.msra.mxu0 %v1819
        %1904 = vmatpush.bf16.msra.mxu0 %v1817
        %1905 = vmatpush.bf16.msra.mxu0 %v1815
        %1906 = vmatpush.bf16.msra.mxu0 %v1813
        %1907 = vmatmul.bf16.gmra.mxu0 %v1587
        %v1908 = vpop.f32.mrf.mxu0
        %v1909 = vadd.f32 %v1896, %v1908
        %v1910 = vpop.f32.mrf.mxu0
        %1911 = vdwg.mxu0
        %v1912 = vmax.f32 %v1883, 0.0
        %v1913 = vmax.f32 %v1909, 0.0
        %v1914 = vpack.c.bf16 %v1408, %v1408
        %v1915 = vpack.c.bf16 %v1409, %v1409
        %v1916 = vld [vmem:[#allocation4] sm:$0xff]
        %v1917 = vld [vmem:[#allocation4 + $0x8] sm:$0xff]
        %v1918 = vld [vmem:[#allocation4 + $0x10] sm:$0xff]
        %v1919 = vld [vmem:[#allocation4 + $0x18] sm:$0xff]
        %v1920 = vld [vmem:[#allocation4 + $0x20] sm:$0xff]
        %v1921 = vld [vmem:[#allocation4 + $0x28] sm:$0xff]
        %v1922 = vld [vmem:[#allocation4 + $0x30] sm:$0xff]
        %v1923 = vld [vmem:[#allocation4 + $0x38] sm:$0xff]
        %v1924 = vld [vmem:[#allocation4 + $0x40] sm:$0xff]
        %v1925 = vld [vmem:[#allocation4 + $0x48] sm:$0xff]
        %v1926 = vld [vmem:[#allocation4 + $0x50] sm:$0xff]
        %v1927 = vld [vmem:[#allocation4 + $0x58] sm:$0xff]
        %v1928 = vld [vmem:[#allocation4 + $0x60] sm:$0xff]
        %v1929 = vld [vmem:[#allocation4 + $0x68] sm:$0xff]
        %v1930 = vld [vmem:[#allocation4 + $0x70] sm:$0xff]
        %v1931 = vld [vmem:[#allocation4 + $0x78] sm:$0xff]
        %v1932 = vld [vmem:[#allocation4 + $0x80] sm:$0xff]
        %v1933 = vld [vmem:[#allocation4 + $0x88] sm:$0xff]
        %v1934 = vld [vmem:[#allocation4 + $0x90] sm:$0xff]
        %v1935 = vld [vmem:[#allocation4 + $0x98] sm:$0xff]
        %v1936 = vld [vmem:[#allocation4 + $0xa0] sm:$0xff]
        %v1937 = vld [vmem:[#allocation4 + $0xa8] sm:$0xff]
        %v1938 = vld [vmem:[#allocation4 + $0xb0] sm:$0xff]
        %v1939 = vld [vmem:[#allocation4 + $0xb8] sm:$0xff]
        %v1940 = vld [vmem:[#allocation4 + $0xc0] sm:$0xff]
        %v1941 = vld [vmem:[#allocation4 + $0xc8] sm:$0xff]
        %v1942 = vld [vmem:[#allocation4 + $0xd0] sm:$0xff]
        %v1943 = vld [vmem:[#allocation4 + $0xd8] sm:$0xff]
        %v1944 = vld [vmem:[#allocation4 + $0xe0] sm:$0xff]
        %v1945 = vld [vmem:[#allocation4 + $0xe8] sm:$0xff]
        %v1946 = vld [vmem:[#allocation4 + $0xf0] sm:$0xff]
        %v1947 = vld [vmem:[#allocation4 + $0xf8] sm:$0xff]
        %v1948 = vld [vmem:[#allocation4 + $0x100] sm:$0xff]
        %v1949 = vld [vmem:[#allocation4 + $0x108] sm:$0xff]
        %v1950 = vld [vmem:[#allocation4 + $0x110] sm:$0xff]
        %v1951 = vld [vmem:[#allocation4 + $0x118] sm:$0xff]
        %v1952 = vld [vmem:[#allocation4 + $0x120] sm:$0xff]
        %v1953 = vld [vmem:[#allocation4 + $0x128] sm:$0xff]
        %v1954 = vld [vmem:[#allocation4 + $0x130] sm:$0xff]
        %v1955 = vld [vmem:[#allocation4 + $0x138] sm:$0xff]
        %v1956 = vld [vmem:[#allocation4 + $0x140] sm:$0xff]
        %v1957 = vld [vmem:[#allocation4 + $0x148] sm:$0xff]
        %v1958 = vld [vmem:[#allocation4 + $0x150] sm:$0xff]
        %v1959 = vld [vmem:[#allocation4 + $0x158] sm:$0xff]
        %v1960 = vld [vmem:[#allocation4 + $0x160] sm:$0xff]
        %v1961 = vld [vmem:[#allocation4 + $0x168] sm:$0xff]
        %v1962 = vld [vmem:[#allocation4 + $0x170] sm:$0xff]
        %v1963 = vld [vmem:[#allocation4 + $0x178] sm:$0xff]
        %v1964 = vld [vmem:[#allocation4 + $0x180] sm:$0xff]
        %v1965 = vld [vmem:[#allocation4 + $0x188] sm:$0xff]
        %v1966 = vld [vmem:[#allocation4 + $0x190] sm:$0xff]
        %v1967 = vld [vmem:[#allocation4 + $0x198] sm:$0xff]
        %v1968 = vld [vmem:[#allocation4 + $0x1a0] sm:$0xff]
        %v1969 = vld [vmem:[#allocation4 + $0x1a8] sm:$0xff]
        %v1970 = vld [vmem:[#allocation4 + $0x1b0] sm:$0xff]
        %v1971 = vld [vmem:[#allocation4 + $0x1b8] sm:$0xff]
        %v1972 = vld [vmem:[#allocation4 + $0x1c0] sm:$0xff]
        %v1973 = vld [vmem:[#allocation4 + $0x1c8] sm:$0xff]
        %v1974 = vld [vmem:[#allocation4 + $0x1d0] sm:$0xff]
        %v1975 = vld [vmem:[#allocation4 + $0x1d8] sm:$0xff]
        %v1976 = vld [vmem:[#allocation4 + $0x1e0] sm:$0xff]
        %v1977 = vld [vmem:[#allocation4 + $0x1e8] sm:$0xff]
        %v1978 = vld [vmem:[#allocation4 + $0x1f0] sm:$0xff]
        %v1979 = vld [vmem:[#allocation4 + $0x1f8] sm:$0xff]
        %v1980 = vpack.c.bf16 %v1585, %v1585
        %v1981 = vpack.c.bf16 %v1586, %v1586
        %s1982 = scalar_lea.vmem [#allocation4], 512
        %v1983 = vld [vmem:[%s1982] sm:$0xff]
        %v1984 = vld [vmem:[%s1982 + $0x8] sm:$0xff]
        %v1985 = vld [vmem:[%s1982 + $0x10] sm:$0xff]
        %v1986 = vld [vmem:[%s1982 + $0x18] sm:$0xff]
        %v1987 = vld [vmem:[%s1982 + $0x20] sm:$0xff]
        %v1988 = vld [vmem:[%s1982 + $0x28] sm:$0xff]
        %v1989 = vld [vmem:[%s1982 + $0x30] sm:$0xff]
        %v1990 = vld [vmem:[%s1982 + $0x38] sm:$0xff]
        %v1991 = vld [vmem:[%s1982 + $0x40] sm:$0xff]
        %v1992 = vld [vmem:[%s1982 + $0x48] sm:$0xff]
        %v1993 = vld [vmem:[%s1982 + $0x50] sm:$0xff]
        %v1994 = vld [vmem:[%s1982 + $0x58] sm:$0xff]
        %v1995 = vld [vmem:[%s1982 + $0x60] sm:$0xff]
        %v1996 = vld [vmem:[%s1982 + $0x68] sm:$0xff]
        %v1997 = vld [vmem:[%s1982 + $0x70] sm:$0xff]
        %v1998 = vld [vmem:[%s1982 + $0x78] sm:$0xff]
        %v1999 = vld [vmem:[%s1982 + $0x80] sm:$0xff]
        %v2000 = vld [vmem:[%s1982 + $0x88] sm:$0xff]
        %v2001 = vld [vmem:[%s1982 + $0x90] sm:$0xff]
        %v2002 = vld [vmem:[%s1982 + $0x98] sm:$0xff]
        %v2003 = vld [vmem:[%s1982 + $0xa0] sm:$0xff]
        %v2004 = vld [vmem:[%s1982 + $0xa8] sm:$0xff]
        %v2005 = vld [vmem:[%s1982 + $0xb0] sm:$0xff]
        %v2006 = vld [vmem:[%s1982 + $0xb8] sm:$0xff]
        %v2007 = vld [vmem:[%s1982 + $0xc0] sm:$0xff]
        %v2008 = vld [vmem:[%s1982 + $0xc8] sm:$0xff]
        %v2009 = vld [vmem:[%s1982 + $0xd0] sm:$0xff]
        %v2010 = vld [vmem:[%s1982 + $0xd8] sm:$0xff]
        %v2011 = vld [vmem:[%s1982 + $0xe0] sm:$0xff]
        %v2012 = vld [vmem:[%s1982 + $0xe8] sm:$0xff]
        %v2013 = vld [vmem:[%s1982 + $0xf0] sm:$0xff]
        %v2014 = vld [vmem:[%s1982 + $0xf8] sm:$0xff]
        %v2015 = vld [vmem:[%s1982 + $0x100] sm:$0xff]
        %v2016 = vld [vmem:[%s1982 + $0x108] sm:$0xff]
        %v2017 = vld [vmem:[%s1982 + $0x110] sm:$0xff]
        %v2018 = vld [vmem:[%s1982 + $0x118] sm:$0xff]
        %v2019 = vld [vmem:[%s1982 + $0x120] sm:$0xff]
        %v2020 = vld [vmem:[%s1982 + $0x128] sm:$0xff]
        %v2021 = vld [vmem:[%s1982 + $0x130] sm:$0xff]
        %v2022 = vld [vmem:[%s1982 + $0x138] sm:$0xff]
        %v2023 = vld [vmem:[%s1982 + $0x140] sm:$0xff]
        %v2024 = vld [vmem:[%s1982 + $0x148] sm:$0xff]
        %v2025 = vld [vmem:[%s1982 + $0x150] sm:$0xff]
        %v2026 = vld [vmem:[%s1982 + $0x158] sm:$0xff]
        %v2027 = vld [vmem:[%s1982 + $0x160] sm:$0xff]
        %v2028 = vld [vmem:[%s1982 + $0x168] sm:$0xff]
        %v2029 = vld [vmem:[%s1982 + $0x170] sm:$0xff]
        %v2030 = vld [vmem:[%s1982 + $0x178] sm:$0xff]
        %v2031 = vld [vmem:[%s1982 + $0x180] sm:$0xff]
        %v2032 = vld [vmem:[%s1982 + $0x188] sm:$0xff]
        %v2033 = vld [vmem:[%s1982 + $0x190] sm:$0xff]
        %v2034 = vld [vmem:[%s1982 + $0x198] sm:$0xff]
        %v2035 = vld [vmem:[%s1982 + $0x1a0] sm:$0xff]
        %v2036 = vld [vmem:[%s1982 + $0x1a8] sm:$0xff]
        %v2037 = vld [vmem:[%s1982 + $0x1b0] sm:$0xff]
        %v2038 = vld [vmem:[%s1982 + $0x1b8] sm:$0xff]
        %v2039 = vld [vmem:[%s1982 + $0x1c0] sm:$0xff]
        %v2040 = vld [vmem:[%s1982 + $0x1c8] sm:$0xff]
        %v2041 = vld [vmem:[%s1982 + $0x1d0] sm:$0xff]
        %v2042 = vld [vmem:[%s1982 + $0x1d8] sm:$0xff]
        %v2043 = vld [vmem:[%s1982 + $0x1e0] sm:$0xff]
        %v2044 = vld [vmem:[%s1982 + $0x1e8] sm:$0xff]
        %v2045 = vld [vmem:[%s1982 + $0x1f0] sm:$0xff]
        %v2046 = vld [vmem:[%s1982 + $0x1f8] sm:$0xff]
        %v2111 = vunpack.c.l.b16 %v1983
        %v2112 = vunpack.c.h.b16 %v1983
        %v2113 = vunpack.c.l.b16 %v1984
        %v2114 = vunpack.c.h.b16 %v1984
        %v2115 = vunpack.c.l.b16 %v1985
        %v2116 = vunpack.c.h.b16 %v1985
        %v2117 = vunpack.c.l.b16 %v1986
        %v2118 = vunpack.c.h.b16 %v1986
        %v2119 = vunpack.c.l.b16 %v1987
        %v2120 = vunpack.c.h.b16 %v1987
        %v2121 = vunpack.c.l.b16 %v1988
        %v2122 = vunpack.c.h.b16 %v1988
        %v2123 = vunpack.c.l.b16 %v1989
        %v2124 = vunpack.c.h.b16 %v1989
        %v2125 = vunpack.c.l.b16 %v1990
        %v2126 = vunpack.c.h.b16 %v1990
        %v2127 = vunpack.c.l.b16 %v1991
        %v2128 = vunpack.c.h.b16 %v1991
        %v2129 = vunpack.c.l.b16 %v1992
        %v2130 = vunpack.c.h.b16 %v1992
        %v2131 = vunpack.c.l.b16 %v1993
        %v2132 = vunpack.c.h.b16 %v1993
        %v2133 = vunpack.c.l.b16 %v1994
        %v2134 = vunpack.c.h.b16 %v1994
        %v2135 = vunpack.c.l.b16 %v1995
        %v2136 = vunpack.c.h.b16 %v1995
        %v2137 = vunpack.c.l.b16 %v1996
        %v2138 = vunpack.c.h.b16 %v1996
        %v2139 = vunpack.c.l.b16 %v1997
        %v2140 = vunpack.c.h.b16 %v1997
        %v2141 = vunpack.c.l.b16 %v1998
        %v2142 = vunpack.c.h.b16 %v1998
        %v2143 = vunpack.c.l.b16 %v1999
        %v2144 = vunpack.c.h.b16 %v1999
        %v2145 = vunpack.c.l.b16 %v2000
        %v2146 = vunpack.c.h.b16 %v2000
        %v2147 = vunpack.c.l.b16 %v2001
        %v2148 = vunpack.c.h.b16 %v2001
        %v2149 = vunpack.c.l.b16 %v2002
        %v2150 = vunpack.c.h.b16 %v2002
        %v2151 = vunpack.c.l.b16 %v2003
        %v2152 = vunpack.c.h.b16 %v2003
        %v2153 = vunpack.c.l.b16 %v2004
        %v2154 = vunpack.c.h.b16 %v2004
        %v2155 = vunpack.c.l.b16 %v2005
        %v2156 = vunpack.c.h.b16 %v2005
        %v2157 = vunpack.c.l.b16 %v2006
        %v2158 = vunpack.c.h.b16 %v2006
        %v2159 = vunpack.c.l.b16 %v2007
        %v2160 = vunpack.c.h.b16 %v2007
        %v2161 = vunpack.c.l.b16 %v2008
        %v2162 = vunpack.c.h.b16 %v2008
        %v2163 = vunpack.c.l.b16 %v2009
        %v2164 = vunpack.c.h.b16 %v2009
        %v2165 = vunpack.c.l.b16 %v2010
        %v2166 = vunpack.c.h.b16 %v2010
        %v2167 = vunpack.c.l.b16 %v2011
        %v2168 = vunpack.c.h.b16 %v2011
        %v2169 = vunpack.c.l.b16 %v2012
        %v2170 = vunpack.c.h.b16 %v2012
        %v2171 = vunpack.c.l.b16 %v2013
        %v2172 = vunpack.c.h.b16 %v2013
        %v2173 = vunpack.c.l.b16 %v2014
        %v2174 = vunpack.c.h.b16 %v2014
        %v2175 = vunpack.c.l.b16 %v2015
        %v2176 = vunpack.c.h.b16 %v2015
        %v2177 = vunpack.c.l.b16 %v2016
        %v2178 = vunpack.c.h.b16 %v2016
        %v2179 = vunpack.c.l.b16 %v2017
        %v2180 = vunpack.c.h.b16 %v2017
        %v2181 = vunpack.c.l.b16 %v2018
        %v2182 = vunpack.c.h.b16 %v2018
        %v2183 = vunpack.c.l.b16 %v2019
        %v2184 = vunpack.c.h.b16 %v2019
        %v2185 = vunpack.c.l.b16 %v2020
        %v2186 = vunpack.c.h.b16 %v2020
        %v2187 = vunpack.c.l.b16 %v2021
        %v2188 = vunpack.c.h.b16 %v2021
        %v2189 = vunpack.c.l.b16 %v2022
        %v2190 = vunpack.c.h.b16 %v2022
        %v2191 = vunpack.c.l.b16 %v2023
        %v2192 = vunpack.c.h.b16 %v2023
        %v2193 = vunpack.c.l.b16 %v2024
        %v2194 = vunpack.c.h.b16 %v2024
        %v2195 = vunpack.c.l.b16 %v2025
        %v2196 = vunpack.c.h.b16 %v2025
        %v2197 = vunpack.c.l.b16 %v2026
        %v2198 = vunpack.c.h.b16 %v2026
        %v2199 = vunpack.c.l.b16 %v2027
        %v2200 = vunpack.c.h.b16 %v2027
        %v2201 = vunpack.c.l.b16 %v2028
        %v2202 = vunpack.c.h.b16 %v2028
        %v2203 = vunpack.c.l.b16 %v2029
        %v2204 = vunpack.c.h.b16 %v2029
        %v2205 = vunpack.c.l.b16 %v2030
        %v2206 = vunpack.c.h.b16 %v2030
        %v2207 = vunpack.c.l.b16 %v2031
        %v2208 = vunpack.c.h.b16 %v2031
        %v2209 = vunpack.c.l.b16 %v2032
        %v2210 = vunpack.c.h.b16 %v2032
        %v2211 = vunpack.c.l.b16 %v2033
        %v2212 = vunpack.c.h.b16 %v2033
        %v2213 = vunpack.c.l.b16 %v2034
        %v2214 = vunpack.c.h.b16 %v2034
        %v2215 = vunpack.c.l.b16 %v2035
        %v2216 = vunpack.c.h.b16 %v2035
        %v2217 = vunpack.c.l.b16 %v2036
        %v2218 = vunpack.c.h.b16 %v2036
        %v2219 = vunpack.c.l.b16 %v2037
        %v2220 = vunpack.c.h.b16 %v2037
        %v2221 = vunpack.c.l.b16 %v2038
        %v2222 = vunpack.c.h.b16 %v2038
        %v2223 = vunpack.c.l.b16 %v2039
        %v2224 = vunpack.c.h.b16 %v2039
        %v2225 = vunpack.c.l.b16 %v2040
        %v2226 = vunpack.c.h.b16 %v2040
        %v2227 = vunpack.c.l.b16 %v2041
        %v2228 = vunpack.c.h.b16 %v2041
        %v2229 = vunpack.c.l.b16 %v2042
        %v2230 = vunpack.c.h.b16 %v2042
        %v2231 = vunpack.c.l.b16 %v2043
        %v2232 = vunpack.c.h.b16 %v2043
        %v2233 = vunpack.c.l.b16 %v2044
        %v2234 = vunpack.c.h.b16 %v2044
        %v2235 = vunpack.c.l.b16 %v2045
        %v2236 = vunpack.c.h.b16 %v2045
        %v2237 = vunpack.c.l.b16 %v2046
        %v2238 = vunpack.c.h.b16 %v2046
        %v2239 = vpack.c.b16 %v2115, %v2111
        %v2240 = vpack.c.b16 %v2116, %v2112
        %v2241 = vpack.c.b16 %v2117, %v2113
        %v2242 = vpack.c.b16 %v2118, %v2114
        %v2243 = vpack.c.b16 %v2123, %v2119
        %v2244 = vpack.c.b16 %v2124, %v2120
        %v2245 = vpack.c.b16 %v2125, %v2121
        %v2246 = vpack.c.b16 %v2126, %v2122
        %v2247 = vpack.c.b16 %v2131, %v2127
        %v2248 = vpack.c.b16 %v2132, %v2128
        %v2249 = vpack.c.b16 %v2133, %v2129
        %v2250 = vpack.c.b16 %v2134, %v2130
        %v2251 = vpack.c.b16 %v2139, %v2135
        %v2252 = vpack.c.b16 %v2140, %v2136
        %v2253 = vpack.c.b16 %v2141, %v2137
        %v2254 = vpack.c.b16 %v2142, %v2138
        %v2255 = vpack.c.b16 %v2147, %v2143
        %v2256 = vpack.c.b16 %v2148, %v2144
        %v2257 = vpack.c.b16 %v2149, %v2145
        %v2258 = vpack.c.b16 %v2150, %v2146
        %v2259 = vpack.c.b16 %v2155, %v2151
        %v2260 = vpack.c.b16 %v2156, %v2152
        %v2261 = vpack.c.b16 %v2157, %v2153
        %v2262 = vpack.c.b16 %v2158, %v2154
        %v2263 = vpack.c.b16 %v2163, %v2159
        %v2264 = vpack.c.b16 %v2164, %v2160
        %v2265 = vpack.c.b16 %v2165, %v2161
        %v2266 = vpack.c.b16 %v2166, %v2162
        %v2267 = vpack.c.b16 %v2171, %v2167
        %v2268 = vpack.c.b16 %v2172, %v2168
        %v2269 = vpack.c.b16 %v2173, %v2169
        %v2270 = vpack.c.b16 %v2174, %v2170
        %v2271 = vpack.c.b16 %v2179, %v2175
        %v2272 = vpack.c.b16 %v2180, %v2176
        %v2273 = vpack.c.b16 %v2181, %v2177
        %v2274 = vpack.c.b16 %v2182, %v2178
        %v2275 = vpack.c.b16 %v2187, %v2183
        %v2276 = vpack.c.b16 %v2188, %v2184
        %v2277 = vpack.c.b16 %v2189, %v2185
        %v2278 = vpack.c.b16 %v2190, %v2186
        %v2279 = vpack.c.b16 %v2195, %v2191
        %v2280 = vpack.c.b16 %v2196, %v2192
        %v2281 = vpack.c.b16 %v2197, %v2193
        %v2282 = vpack.c.b16 %v2198, %v2194
        %v2283 = vpack.c.b16 %v2203, %v2199
        %v2284 = vpack.c.b16 %v2204, %v2200
        %v2285 = vpack.c.b16 %v2205, %v2201
        %v2286 = vpack.c.b16 %v2206, %v2202
        %v2287 = vpack.c.b16 %v2211, %v2207
        %v2288 = vpack.c.b16 %v2212, %v2208
        %v2289 = vpack.c.b16 %v2213, %v2209
        %v2290 = vpack.c.b16 %v2214, %v2210
        %v2291 = vpack.c.b16 %v2219, %v2215
        %v2292 = vpack.c.b16 %v2220, %v2216
        %v2293 = vpack.c.b16 %v2221, %v2217
        %v2294 = vpack.c.b16 %v2222, %v2218
        %v2295 = vpack.c.b16 %v2227, %v2223
        %v2296 = vpack.c.b16 %v2228, %v2224
        %v2297 = vpack.c.b16 %v2229, %v2225
        %v2298 = vpack.c.b16 %v2230, %v2226
        %v2299 = vpack.c.b16 %v2235, %v2231
        %v2300 = vpack.c.b16 %v2236, %v2232
        %v2301 = vpack.c.b16 %v2237, %v2233
        %v2302 = vpack.c.b16 %v2238, %v2234
        %2367 = vmatpush.bf16.msra.mxu0 %v2267
        %2368 = vmatpush.bf16.msra.mxu0 %v2263
        %2369 = vmatpush.bf16.msra.mxu0 %v2259
        %2370 = vmatpush.bf16.msra.mxu0 %v2255
        %2371 = vmatpush.bf16.msra.mxu0 %v2251
        %2372 = vmatpush.bf16.msra.mxu0 %v2247
        %2373 = vmatpush.bf16.msra.mxu0 %v2243
        %2374 = vmatpush.bf16.msra.mxu0 %v2239
        %2375 = vmatmul.bf16.gmra.mxu0 %v1980
        %v2376 = vpop.f32.mrf.mxu0
        %v2377 = vadd.f32 0.0, %v2376
        %v2378 = vpop.f32.mrf.mxu0
        %2379 = vdwg.mxu0
        %2380 = vmatpush.bf16.msra.mxu0 %v2299
        %2381 = vmatpush.bf16.msra.mxu0 %v2295
        %2382 = vmatpush.bf16.msra.mxu0 %v2291
        %2383 = vmatpush.bf16.msra.mxu0 %v2287
        %2384 = vmatpush.bf16.msra.mxu0 %v2283
        %2385 = vmatpush.bf16.msra.mxu0 %v2279
        %2386 = vmatpush.bf16.msra.mxu0 %v2275
        %2387 = vmatpush.bf16.msra.mxu0 %v2271
        %2388 = vmatmul.bf16.gmra.mxu0 %v1981
        %v2389 = vpop.f32.mrf.mxu0
        %v2390 = vadd.f32 %v2377, %v2389
        %v2391 = vpop.f32.mrf.mxu0
        %2392 = vdwg.mxu0
        %2393 = vmatpush.bf16.msra.mxu0 %v2268
        %2394 = vmatpush.bf16.msra.mxu0 %v2264
        %2395 = vmatpush.bf16.msra.mxu0 %v2260
        %2396 = vmatpush.bf16.msra.mxu0 %v2256
        %2397 = vmatpush.bf16.msra.mxu0 %v2252
        %2398 = vmatpush.bf16.msra.mxu0 %v2248
        %2399 = vmatpush.bf16.msra.mxu0 %v2244
        %2400 = vmatpush.bf16.msra.mxu0 %v2240
        %2401 = vmatmul.bf16.gmra.mxu0 %v1980
        %v2402 = vpop.f32.mrf.mxu0
        %v2403 = vadd.f32 0.0, %v2402
        %v2404 = vpop.f32.mrf.mxu0
        %2405 = vdwg.mxu0
        %2406 = vmatpush.bf16.msra.mxu0 %v2300
        %2407 = vmatpush.bf16.msra.mxu0 %v2296
        %2408 = vmatpush.bf16.msra.mxu0 %v2292
        %2409 = vmatpush.bf16.msra.mxu0 %v2288
        %2410 = vmatpush.bf16.msra.mxu0 %v2284
        %2411 = vmatpush.bf16.msra.mxu0 %v2280
        %2412 = vmatpush.bf16.msra.mxu0 %v2276
        %2413 = vmatpush.bf16.msra.mxu0 %v2272
        %2414 = vmatmul.bf16.gmra.mxu0 %v1981
        %v2415 = vpop.f32.mrf.mxu0
        %v2416 = vadd.f32 %v2403, %v2415
        %v2417 = vpop.f32.mrf.mxu0
        %2418 = vdwg.mxu0
        %2419 = vmatpush.bf16.msra.mxu0 %v2269
        %2420 = vmatpush.bf16.msra.mxu0 %v2265
        %2421 = vmatpush.bf16.msra.mxu0 %v2261
        %2422 = vmatpush.bf16.msra.mxu0 %v2257
        %2423 = vmatpush.bf16.msra.mxu0 %v2253
        %2424 = vmatpush.bf16.msra.mxu0 %v2249
        %2425 = vmatpush.bf16.msra.mxu0 %v2245
        %2426 = vmatpush.bf16.msra.mxu0 %v2241
        %2427 = vmatmul.bf16.gmra.mxu0 %v1980
        %v2428 = vpop.f32.mrf.mxu0
        %v2429 = vadd.f32 0.0, %v2428
        %v2430 = vpop.f32.mrf.mxu0
        %2431 = vdwg.mxu0
        %2432 = vmatpush.bf16.msra.mxu0 %v2301
        %2433 = vmatpush.bf16.msra.mxu0 %v2297
        %2434 = vmatpush.bf16.msra.mxu0 %v2293
        %2435 = vmatpush.bf16.msra.mxu0 %v2289
        %2436 = vmatpush.bf16.msra.mxu0 %v2285
        %2437 = vmatpush.bf16.msra.mxu0 %v2281
        %2438 = vmatpush.bf16.msra.mxu0 %v2277
        %2439 = vmatpush.bf16.msra.mxu0 %v2273
        %2440 = vmatmul.bf16.gmra.mxu0 %v1981
        %v2441 = vpop.f32.mrf.mxu0
        %v2442 = vadd.f32 %v2429, %v2441
        %v2443 = vpop.f32.mrf.mxu0
        %2444 = vdwg.mxu0
        %2445 = vmatpush.bf16.msra.mxu0 %v2270
        %2446 = vmatpush.bf16.msra.mxu0 %v2266
        %2447 = vmatpush.bf16.msra.mxu0 %v2262
        %2448 = vmatpush.bf16.msra.mxu0 %v2258
        %2449 = vmatpush.bf16.msra.mxu0 %v2254
        %2450 = vmatpush.bf16.msra.mxu0 %v2250
        %2451 = vmatpush.bf16.msra.mxu0 %v2246
        %2452 = vmatpush.bf16.msra.mxu0 %v2242
        %2453 = vmatmul.bf16.gmra.mxu0 %v1980
        %v2454 = vpop.f32.mrf.mxu0
        %v2455 = vadd.f32 0.0, %v2454
        %v2456 = vpop.f32.mrf.mxu0
        %2457 = vdwg.mxu0
        %2458 = vmatpush.bf16.msra.mxu0 %v2302
        %2459 = vmatpush.bf16.msra.mxu0 %v2298
        %2460 = vmatpush.bf16.msra.mxu0 %v2294
        %2461 = vmatpush.bf16.msra.mxu0 %v2290
        %2462 = vmatpush.bf16.msra.mxu0 %v2286
        %2463 = vmatpush.bf16.msra.mxu0 %v2282
        %2464 = vmatpush.bf16.msra.mxu0 %v2278
        %2465 = vmatpush.bf16.msra.mxu0 %v2274
        %2466 = vmatmul.bf16.gmra.mxu0 %v1981
        %v2467 = vpop.f32.mrf.mxu0
        %v2468 = vadd.f32 %v2455, %v2467
        %v2469 = vpop.f32.mrf.mxu0
        %2470 = vdwg.mxu0
        %v2535 = vunpack.c.l.b16 %v1916
        %v2536 = vunpack.c.h.b16 %v1916
        %v2537 = vunpack.c.l.b16 %v1917
        %v2538 = vunpack.c.h.b16 %v1917
        %v2539 = vunpack.c.l.b16 %v1918
        %v2540 = vunpack.c.h.b16 %v1918
        %v2541 = vunpack.c.l.b16 %v1919
        %v2542 = vunpack.c.h.b16 %v1919
        %v2543 = vunpack.c.l.b16 %v1920
        %v2544 = vunpack.c.h.b16 %v1920
        %v2545 = vunpack.c.l.b16 %v1921
        %v2546 = vunpack.c.h.b16 %v1921
        %v2547 = vunpack.c.l.b16 %v1922
        %v2548 = vunpack.c.h.b16 %v1922
        %v2549 = vunpack.c.l.b16 %v1923
        %v2550 = vunpack.c.h.b16 %v1923
        %v2551 = vunpack.c.l.b16 %v1924
        %v2552 = vunpack.c.h.b16 %v1924
        %v2553 = vunpack.c.l.b16 %v1925
        %v2554 = vunpack.c.h.b16 %v1925
        %v2555 = vunpack.c.l.b16 %v1926
        %v2556 = vunpack.c.h.b16 %v1926
        %v2557 = vunpack.c.l.b16 %v1927
        %v2558 = vunpack.c.h.b16 %v1927
        %v2559 = vunpack.c.l.b16 %v1928
        %v2560 = vunpack.c.h.b16 %v1928
        %v2561 = vunpack.c.l.b16 %v1929
        %v2562 = vunpack.c.h.b16 %v1929
        %v2563 = vunpack.c.l.b16 %v1930
        %v2564 = vunpack.c.h.b16 %v1930
        %v2565 = vunpack.c.l.b16 %v1931
        %v2566 = vunpack.c.h.b16 %v1931
        %v2567 = vunpack.c.l.b16 %v1932
        %v2568 = vunpack.c.h.b16 %v1932
        %v2569 = vunpack.c.l.b16 %v1933
        %v2570 = vunpack.c.h.b16 %v1933
        %v2571 = vunpack.c.l.b16 %v1934
        %v2572 = vunpack.c.h.b16 %v1934
        %v2573 = vunpack.c.l.b16 %v1935
        %v2574 = vunpack.c.h.b16 %v1935
        %v2575 = vunpack.c.l.b16 %v1936
        %v2576 = vunpack.c.h.b16 %v1936
        %v2577 = vunpack.c.l.b16 %v1937
        %v2578 = vunpack.c.h.b16 %v1937
        %v2579 = vunpack.c.l.b16 %v1938
        %v2580 = vunpack.c.h.b16 %v1938
        %v2581 = vunpack.c.l.b16 %v1939
        %v2582 = vunpack.c.h.b16 %v1939
        %v2583 = vunpack.c.l.b16 %v1940
        %v2584 = vunpack.c.h.b16 %v1940
        %v2585 = vunpack.c.l.b16 %v1941
        %v2586 = vunpack.c.h.b16 %v1941
        %v2587 = vunpack.c.l.b16 %v1942
        %v2588 = vunpack.c.h.b16 %v1942
        %v2589 = vunpack.c.l.b16 %v1943
        %v2590 = vunpack.c.h.b16 %v1943
        %v2591 = vunpack.c.l.b16 %v1944
        %v2592 = vunpack.c.h.b16 %v1944
        %v2593 = vunpack.c.l.b16 %v1945
        %v2594 = vunpack.c.h.b16 %v1945
        %v2595 = vunpack.c.l.b16 %v1946
        %v2596 = vunpack.c.h.b16 %v1946
        %v2597 = vunpack.c.l.b16 %v1947
        %v2598 = vunpack.c.h.b16 %v1947
        %v2599 = vunpack.c.l.b16 %v1948
        %v2600 = vunpack.c.h.b16 %v1948
        %v2601 = vunpack.c.l.b16 %v1949
        %v2602 = vunpack.c.h.b16 %v1949
        %v2603 = vunpack.c.l.b16 %v1950
        %v2604 = vunpack.c.h.b16 %v1950
        %v2605 = vunpack.c.l.b16 %v1951
        %v2606 = vunpack.c.h.b16 %v1951
        %v2607 = vunpack.c.l.b16 %v1952
        %v2608 = vunpack.c.h.b16 %v1952
        %v2609 = vunpack.c.l.b16 %v1953
        %v2610 = vunpack.c.h.b16 %v1953
        %v2611 = vunpack.c.l.b16 %v1954
        %v2612 = vunpack.c.h.b16 %v1954
        %v2613 = vunpack.c.l.b16 %v1955
        %v2614 = vunpack.c.h.b16 %v1955
        %v2615 = vunpack.c.l.b16 %v1956
        %v2616 = vunpack.c.h.b16 %v1956
        %v2617 = vunpack.c.l.b16 %v1957
        %v2618 = vunpack.c.h.b16 %v1957
        %v2619 = vunpack.c.l.b16 %v1958
        %v2620 = vunpack.c.h.b16 %v1958
        %v2621 = vunpack.c.l.b16 %v1959
        %v2622 = vunpack.c.h.b16 %v1959
        %v2623 = vunpack.c.l.b16 %v1960
        %v2624 = vunpack.c.h.b16 %v1960
        %v2625 = vunpack.c.l.b16 %v1961
        %v2626 = vunpack.c.h.b16 %v1961
        %v2627 = vunpack.c.l.b16 %v1962
        %v2628 = vunpack.c.h.b16 %v1962
        %v2629 = vunpack.c.l.b16 %v1963
        %v2630 = vunpack.c.h.b16 %v1963
        %v2631 = vunpack.c.l.b16 %v1964
        %v2632 = vunpack.c.h.b16 %v1964
        %v2633 = vunpack.c.l.b16 %v1965
        %v2634 = vunpack.c.h.b16 %v1965
        %v2635 = vunpack.c.l.b16 %v1966
        %v2636 = vunpack.c.h.b16 %v1966
        %v2637 = vunpack.c.l.b16 %v1967
        %v2638 = vunpack.c.h.b16 %v1967
        %v2639 = vunpack.c.l.b16 %v1968
        %v2640 = vunpack.c.h.b16 %v1968
        %v2641 = vunpack.c.l.b16 %v1969
        %v2642 = vunpack.c.h.b16 %v1969
        %v2643 = vunpack.c.l.b16 %v1970
        %v2644 = vunpack.c.h.b16 %v1970
        %v2645 = vunpack.c.l.b16 %v1971
        %v2646 = vunpack.c.h.b16 %v1971
        %v2647 = vunpack.c.l.b16 %v1972
        %v2648 = vunpack.c.h.b16 %v1972
        %v2649 = vunpack.c.l.b16 %v1973
        %v2650 = vunpack.c.h.b16 %v1973
        %v2651 = vunpack.c.l.b16 %v1974
        %v2652 = vunpack.c.h.b16 %v1974
        %v2653 = vunpack.c.l.b16 %v1975
        %v2654 = vunpack.c.h.b16 %v1975
        %v2655 = vunpack.c.l.b16 %v1976
        %v2656 = vunpack.c.h.b16 %v1976
        %v2657 = vunpack.c.l.b16 %v1977
        %v2658 = vunpack.c.h.b16 %v1977
        %v2659 = vunpack.c.l.b16 %v1978
        %v2660 = vunpack.c.h.b16 %v1978
        %v2661 = vunpack.c.l.b16 %v1979
        %v2662 = vunpack.c.h.b16 %v1979
        %v2663 = vpack.c.b16 %v2539, %v2535
        %v2664 = vpack.c.b16 %v2540, %v2536
        %v2665 = vpack.c.b16 %v2541, %v2537
        %v2666 = vpack.c.b16 %v2542, %v2538
        %v2667 = vpack.c.b16 %v2547, %v2543
        %v2668 = vpack.c.b16 %v2548, %v2544
        %v2669 = vpack.c.b16 %v2549, %v2545
        %v2670 = vpack.c.b16 %v2550, %v2546
        %v2671 = vpack.c.b16 %v2555, %v2551
        %v2672 = vpack.c.b16 %v2556, %v2552
        %v2673 = vpack.c.b16 %v2557, %v2553
        %v2674 = vpack.c.b16 %v2558, %v2554
        %v2675 = vpack.c.b16 %v2563, %v2559
        %v2676 = vpack.c.b16 %v2564, %v2560
        %v2677 = vpack.c.b16 %v2565, %v2561
        %v2678 = vpack.c.b16 %v2566, %v2562
        %v2679 = vpack.c.b16 %v2571, %v2567
        %v2680 = vpack.c.b16 %v2572, %v2568
        %v2681 = vpack.c.b16 %v2573, %v2569
        %v2682 = vpack.c.b16 %v2574, %v2570
        %v2683 = vpack.c.b16 %v2579, %v2575
        %v2684 = vpack.c.b16 %v2580, %v2576
        %v2685 = vpack.c.b16 %v2581, %v2577
        %v2686 = vpack.c.b16 %v2582, %v2578
        %v2687 = vpack.c.b16 %v2587, %v2583
        %v2688 = vpack.c.b16 %v2588, %v2584
        %v2689 = vpack.c.b16 %v2589, %v2585
        %v2690 = vpack.c.b16 %v2590, %v2586
        %v2691 = vpack.c.b16 %v2595, %v2591
        %v2692 = vpack.c.b16 %v2596, %v2592
        %v2693 = vpack.c.b16 %v2597, %v2593
        %v2694 = vpack.c.b16 %v2598, %v2594
        %v2695 = vpack.c.b16 %v2603, %v2599
        %v2696 = vpack.c.b16 %v2604, %v2600
        %v2697 = vpack.c.b16 %v2605, %v2601
        %v2698 = vpack.c.b16 %v2606, %v2602
        %v2699 = vpack.c.b16 %v2611, %v2607
        %v2700 = vpack.c.b16 %v2612, %v2608
        %v2701 = vpack.c.b16 %v2613, %v2609
        %v2702 = vpack.c.b16 %v2614, %v2610
        %v2703 = vpack.c.b16 %v2619, %v2615
        %v2704 = vpack.c.b16 %v2620, %v2616
        %v2705 = vpack.c.b16 %v2621, %v2617
        %v2706 = vpack.c.b16 %v2622, %v2618
        %v2707 = vpack.c.b16 %v2627, %v2623
        %v2708 = vpack.c.b16 %v2628, %v2624
        %v2709 = vpack.c.b16 %v2629, %v2625
        %v2710 = vpack.c.b16 %v2630, %v2626
        %v2711 = vpack.c.b16 %v2635, %v2631
        %v2712 = vpack.c.b16 %v2636, %v2632
        %v2713 = vpack.c.b16 %v2637, %v2633
        %v2714 = vpack.c.b16 %v2638, %v2634
        %v2715 = vpack.c.b16 %v2643, %v2639
        %v2716 = vpack.c.b16 %v2644, %v2640
        %v2717 = vpack.c.b16 %v2645, %v2641
        %v2718 = vpack.c.b16 %v2646, %v2642
        %v2719 = vpack.c.b16 %v2651, %v2647
        %v2720 = vpack.c.b16 %v2652, %v2648
        %v2721 = vpack.c.b16 %v2653, %v2649
        %v2722 = vpack.c.b16 %v2654, %v2650
        %v2723 = vpack.c.b16 %v2659, %v2655
        %v2724 = vpack.c.b16 %v2660, %v2656
        %v2725 = vpack.c.b16 %v2661, %v2657
        %v2726 = vpack.c.b16 %v2662, %v2658
        %2791 = vmatpush.bf16.msra.mxu0 %v2691
        %2792 = vmatpush.bf16.msra.mxu0 %v2687
        %2793 = vmatpush.bf16.msra.mxu0 %v2683
        %2794 = vmatpush.bf16.msra.mxu0 %v2679
        %2795 = vmatpush.bf16.msra.mxu0 %v2675
        %2796 = vmatpush.bf16.msra.mxu0 %v2671
        %2797 = vmatpush.bf16.msra.mxu0 %v2667
        %2798 = vmatpush.bf16.msra.mxu0 %v2663
        %2799 = vmatmul.bf16.gmra.mxu0 %v1914
        %v2800 = vpop.f32.mrf.mxu0
        %v2801 = vadd.f32 %v2390, %v2800
        %v2802 = vpop.f32.mrf.mxu0
        %2803 = vdwg.mxu0
        %2804 = vmatpush.bf16.msra.mxu0 %v2723
        %2805 = vmatpush.bf16.msra.mxu0 %v2719
        %2806 = vmatpush.bf16.msra.mxu0 %v2715
        %2807 = vmatpush.bf16.msra.mxu0 %v2711
        %2808 = vmatpush.bf16.msra.mxu0 %v2707
        %2809 = vmatpush.bf16.msra.mxu0 %v2703
        %2810 = vmatpush.bf16.msra.mxu0 %v2699
        %2811 = vmatpush.bf16.msra.mxu0 %v2695
        %2812 = vmatmul.bf16.gmra.mxu0 %v1915
        %v2813 = vpop.f32.mrf.mxu0
        %v2814 = vadd.f32 %v2801, %v2813
        %v2815 = vpop.f32.mrf.mxu0
        %2816 = vdwg.mxu0
        %2817 = vmatpush.bf16.msra.mxu0 %v2692
        %2818 = vmatpush.bf16.msra.mxu0 %v2688
        %2819 = vmatpush.bf16.msra.mxu0 %v2684
        %2820 = vmatpush.bf16.msra.mxu0 %v2680
        %2821 = vmatpush.bf16.msra.mxu0 %v2676
        %2822 = vmatpush.bf16.msra.mxu0 %v2672
        %2823 = vmatpush.bf16.msra.mxu0 %v2668
        %2824 = vmatpush.bf16.msra.mxu0 %v2664
        %2825 = vmatmul.bf16.gmra.mxu0 %v1914
        %v2826 = vpop.f32.mrf.mxu0
        %v2827 = vadd.f32 %v2416, %v2826
        %v2828 = vpop.f32.mrf.mxu0
        %2829 = vdwg.mxu0
        %2830 = vmatpush.bf16.msra.mxu0 %v2724
        %2831 = vmatpush.bf16.msra.mxu0 %v2720
        %2832 = vmatpush.bf16.msra.mxu0 %v2716
        %2833 = vmatpush.bf16.msra.mxu0 %v2712
        %2834 = vmatpush.bf16.msra.mxu0 %v2708
        %2835 = vmatpush.bf16.msra.mxu0 %v2704
        %2836 = vmatpush.bf16.msra.mxu0 %v2700
        %2837 = vmatpush.bf16.msra.mxu0 %v2696
        %2838 = vmatmul.bf16.gmra.mxu0 %v1915
        %v2839 = vpop.f32.mrf.mxu0
        %v2840 = vadd.f32 %v2827, %v2839
        %v2841 = vpop.f32.mrf.mxu0
        %2842 = vdwg.mxu0
        %2843 = vmatpush.bf16.msra.mxu0 %v2693
        %2844 = vmatpush.bf16.msra.mxu0 %v2689
        %2845 = vmatpush.bf16.msra.mxu0 %v2685
        %2846 = vmatpush.bf16.msra.mxu0 %v2681
        %2847 = vmatpush.bf16.msra.mxu0 %v2677
        %2848 = vmatpush.bf16.msra.mxu0 %v2673
        %2849 = vmatpush.bf16.msra.mxu0 %v2669
        %2850 = vmatpush.bf16.msra.mxu0 %v2665
        %2851 = vmatmul.bf16.gmra.mxu0 %v1914
        %v2852 = vpop.f32.mrf.mxu0
        %v2853 = vadd.f32 %v2442, %v2852
        %v2854 = vpop.f32.mrf.mxu0
        %2855 = vdwg.mxu0
        %2856 = vmatpush.bf16.msra.mxu0 %v2725
        %2857 = vmatpush.bf16.msra.mxu0 %v2721
        %2858 = vmatpush.bf16.msra.mxu0 %v2717
        %2859 = vmatpush.bf16.msra.mxu0 %v2713
        %2860 = vmatpush.bf16.msra.mxu0 %v2709
        %2861 = vmatpush.bf16.msra.mxu0 %v2705
        %2862 = vmatpush.bf16.msra.mxu0 %v2701
        %2863 = vmatpush.bf16.msra.mxu0 %v2697
        %2864 = vmatmul.bf16.gmra.mxu0 %v1915
        %v2865 = vpop.f32.mrf.mxu0
        %v2866 = vadd.f32 %v2853, %v2865
        %v2867 = vpop.f32.mrf.mxu0
        %2868 = vdwg.mxu0
        %2869 = vmatpush.bf16.msra.mxu0 %v2694
        %2870 = vmatpush.bf16.msra.mxu0 %v2690
        %2871 = vmatpush.bf16.msra.mxu0 %v2686
        %2872 = vmatpush.bf16.msra.mxu0 %v2682
        %2873 = vmatpush.bf16.msra.mxu0 %v2678
        %2874 = vmatpush.bf16.msra.mxu0 %v2674
        %2875 = vmatpush.bf16.msra.mxu0 %v2670
        %2876 = vmatpush.bf16.msra.mxu0 %v2666
        %2877 = vmatmul.bf16.gmra.mxu0 %v1914
        %v2878 = vpop.f32.mrf.mxu0
        %v2879 = vadd.f32 %v2468, %v2878
        %v2880 = vpop.f32.mrf.mxu0
        %2881 = vdwg.mxu0
        %2882 = vmatpush.bf16.msra.mxu0 %v2726
        %2883 = vmatpush.bf16.msra.mxu0 %v2722
        %2884 = vmatpush.bf16.msra.mxu0 %v2718
        %2885 = vmatpush.bf16.msra.mxu0 %v2714
        %2886 = vmatpush.bf16.msra.mxu0 %v2710
        %2887 = vmatpush.bf16.msra.mxu0 %v2706
        %2888 = vmatpush.bf16.msra.mxu0 %v2702
        %2889 = vmatpush.bf16.msra.mxu0 %v2698
        %2890 = vmatmul.bf16.gmra.mxu0 %v1915
        %v2891 = vpop.f32.mrf.mxu0
        %v2892 = vadd.f32 %v2879, %v2891
        %v2893 = vpop.f32.mrf.mxu0
        %2894 = vdwg.mxu0
        %v2895 = vpack.c.bf16 %v1666, %v1666
        %v2896 = vpack.c.bf16 %v1667, %v1667
        %s2897 = scalar_lea.vmem [#allocation4], 1024
        %v2898 = vld [vmem:[%s2897] sm:$0xff]
        %v2899 = vld [vmem:[%s2897 + $0x8] sm:$0xff]
        %v2900 = vld [vmem:[%s2897 + $0x10] sm:$0xff]
        %v2901 = vld [vmem:[%s2897 + $0x18] sm:$0xff]
        %v2902 = vld [vmem:[%s2897 + $0x20] sm:$0xff]
        %v2903 = vld [vmem:[%s2897 + $0x28] sm:$0xff]
        %v2904 = vld [vmem:[%s2897 + $0x30] sm:$0xff]
        %v2905 = vld [vmem:[%s2897 + $0x38] sm:$0xff]
        %v2906 = vld [vmem:[%s2897 + $0x40] sm:$0xff]
        %v2907 = vld [vmem:[%s2897 + $0x48] sm:$0xff]
        %v2908 = vld [vmem:[%s2897 + $0x50] sm:$0xff]
        %v2909 = vld [vmem:[%s2897 + $0x58] sm:$0xff]
        %v2910 = vld [vmem:[%s2897 + $0x60] sm:$0xff]
        %v2911 = vld [vmem:[%s2897 + $0x68] sm:$0xff]
        %v2912 = vld [vmem:[%s2897 + $0x70] sm:$0xff]
        %v2913 = vld [vmem:[%s2897 + $0x78] sm:$0xff]
        %v2914 = vld [vmem:[%s2897 + $0x80] sm:$0xff]
        %v2915 = vld [vmem:[%s2897 + $0x88] sm:$0xff]
        %v2916 = vld [vmem:[%s2897 + $0x90] sm:$0xff]
        %v2917 = vld [vmem:[%s2897 + $0x98] sm:$0xff]
        %v2918 = vld [vmem:[%s2897 + $0xa0] sm:$0xff]
        %v2919 = vld [vmem:[%s2897 + $0xa8] sm:$0xff]
        %v2920 = vld [vmem:[%s2897 + $0xb0] sm:$0xff]
        %v2921 = vld [vmem:[%s2897 + $0xb8] sm:$0xff]
        %v2922 = vld [vmem:[%s2897 + $0xc0] sm:$0xff]
        %v2923 = vld [vmem:[%s2897 + $0xc8] sm:$0xff]
        %v2924 = vld [vmem:[%s2897 + $0xd0] sm:$0xff]
        %v2925 = vld [vmem:[%s2897 + $0xd8] sm:$0xff]
        %v2926 = vld [vmem:[%s2897 + $0xe0] sm:$0xff]
        %v2927 = vld [vmem:[%s2897 + $0xe8] sm:$0xff]
        %v2928 = vld [vmem:[%s2897 + $0xf0] sm:$0xff]
        %v2929 = vld [vmem:[%s2897 + $0xf8] sm:$0xff]
        %v2930 = vld [vmem:[%s2897 + $0x100] sm:$0xff]
        %v2931 = vld [vmem:[%s2897 + $0x108] sm:$0xff]
        %v2932 = vld [vmem:[%s2897 + $0x110] sm:$0xff]
        %v2933 = vld [vmem:[%s2897 + $0x118] sm:$0xff]
        %v2934 = vld [vmem:[%s2897 + $0x120] sm:$0xff]
        %v2935 = vld [vmem:[%s2897 + $0x128] sm:$0xff]
        %v2936 = vld [vmem:[%s2897 + $0x130] sm:$0xff]
        %v2937 = vld [vmem:[%s2897 + $0x138] sm:$0xff]
        %v2938 = vld [vmem:[%s2897 + $0x140] sm:$0xff]
        %v2939 = vld [vmem:[%s2897 + $0x148] sm:$0xff]
        %v2940 = vld [vmem:[%s2897 + $0x150] sm:$0xff]
        %v2941 = vld [vmem:[%s2897 + $0x158] sm:$0xff]
        %v2942 = vld [vmem:[%s2897 + $0x160] sm:$0xff]
        %v2943 = vld [vmem:[%s2897 + $0x168] sm:$0xff]
        %v2944 = vld [vmem:[%s2897 + $0x170] sm:$0xff]
        %v2945 = vld [vmem:[%s2897 + $0x178] sm:$0xff]
        %v2946 = vld [vmem:[%s2897 + $0x180] sm:$0xff]
        %v2947 = vld [vmem:[%s2897 + $0x188] sm:$0xff]
        %v2948 = vld [vmem:[%s2897 + $0x190] sm:$0xff]
        %v2949 = vld [vmem:[%s2897 + $0x198] sm:$0xff]
        %v2950 = vld [vmem:[%s2897 + $0x1a0] sm:$0xff]
        %v2951 = vld [vmem:[%s2897 + $0x1a8] sm:$0xff]
        %v2952 = vld [vmem:[%s2897 + $0x1b0] sm:$0xff]
        %v2953 = vld [vmem:[%s2897 + $0x1b8] sm:$0xff]
        %v2954 = vld [vmem:[%s2897 + $0x1c0] sm:$0xff]
        %v2955 = vld [vmem:[%s2897 + $0x1c8] sm:$0xff]
        %v2956 = vld [vmem:[%s2897 + $0x1d0] sm:$0xff]
        %v2957 = vld [vmem:[%s2897 + $0x1d8] sm:$0xff]
        %v2958 = vld [vmem:[%s2897 + $0x1e0] sm:$0xff]
        %v2959 = vld [vmem:[%s2897 + $0x1e8] sm:$0xff]
        %v2960 = vld [vmem:[%s2897 + $0x1f0] sm:$0xff]
        %v2961 = vld [vmem:[%s2897 + $0x1f8] sm:$0xff]
        %v3026 = vunpack.c.l.b16 %v2898
        %v3027 = vunpack.c.h.b16 %v2898
        %v3028 = vunpack.c.l.b16 %v2899
        %v3029 = vunpack.c.h.b16 %v2899
        %v3030 = vunpack.c.l.b16 %v2900
        %v3031 = vunpack.c.h.b16 %v2900
        %v3032 = vunpack.c.l.b16 %v2901
        %v3033 = vunpack.c.h.b16 %v2901
        %v3034 = vunpack.c.l.b16 %v2902
        %v3035 = vunpack.c.h.b16 %v2902
        %v3036 = vunpack.c.l.b16 %v2903
        %v3037 = vunpack.c.h.b16 %v2903
        %v3038 = vunpack.c.l.b16 %v2904
        %v3039 = vunpack.c.h.b16 %v2904
        %v3040 = vunpack.c.l.b16 %v2905
        %v3041 = vunpack.c.h.b16 %v2905
        %v3042 = vunpack.c.l.b16 %v2906
        %v3043 = vunpack.c.h.b16 %v2906
        %v3044 = vunpack.c.l.b16 %v2907
        %v3045 = vunpack.c.h.b16 %v2907
        %v3046 = vunpack.c.l.b16 %v2908
        %v3047 = vunpack.c.h.b16 %v2908
        %v3048 = vunpack.c.l.b16 %v2909
        %v3049 = vunpack.c.h.b16 %v2909
        %v3050 = vunpack.c.l.b16 %v2910
        %v3051 = vunpack.c.h.b16 %v2910
        %v3052 = vunpack.c.l.b16 %v2911
        %v3053 = vunpack.c.h.b16 %v2911
        %v3054 = vunpack.c.l.b16 %v2912
        %v3055 = vunpack.c.h.b16 %v2912
        %v3056 = vunpack.c.l.b16 %v2913
        %v3057 = vunpack.c.h.b16 %v2913
        %v3058 = vunpack.c.l.b16 %v2914
        %v3059 = vunpack.c.h.b16 %v2914
        %v3060 = vunpack.c.l.b16 %v2915
        %v3061 = vunpack.c.h.b16 %v2915
        %v3062 = vunpack.c.l.b16 %v2916
        %v3063 = vunpack.c.h.b16 %v2916
        %v3064 = vunpack.c.l.b16 %v2917
        %v3065 = vunpack.c.h.b16 %v2917
        %v3066 = vunpack.c.l.b16 %v2918
        %v3067 = vunpack.c.h.b16 %v2918
        %v3068 = vunpack.c.l.b16 %v2919
        %v3069 = vunpack.c.h.b16 %v2919
        %v3070 = vunpack.c.l.b16 %v2920
        %v3071 = vunpack.c.h.b16 %v2920
        %v3072 = vunpack.c.l.b16 %v2921
        %v3073 = vunpack.c.h.b16 %v2921
        %v3074 = vunpack.c.l.b16 %v2922
        %v3075 = vunpack.c.h.b16 %v2922
        %v3076 = vunpack.c.l.b16 %v2923
        %v3077 = vunpack.c.h.b16 %v2923
        %v3078 = vunpack.c.l.b16 %v2924
        %v3079 = vunpack.c.h.b16 %v2924
        %v3080 = vunpack.c.l.b16 %v2925
        %v3081 = vunpack.c.h.b16 %v2925
        %v3082 = vunpack.c.l.b16 %v2926
        %v3083 = vunpack.c.h.b16 %v2926
        %v3084 = vunpack.c.l.b16 %v2927
        %v3085 = vunpack.c.h.b16 %v2927
        %v3086 = vunpack.c.l.b16 %v2928
        %v3087 = vunpack.c.h.b16 %v2928
        %v3088 = vunpack.c.l.b16 %v2929
        %v3089 = vunpack.c.h.b16 %v2929
        %v3090 = vunpack.c.l.b16 %v2930
        %v3091 = vunpack.c.h.b16 %v2930
        %v3092 = vunpack.c.l.b16 %v2931
        %v3093 = vunpack.c.h.b16 %v2931
        %v3094 = vunpack.c.l.b16 %v2932
        %v3095 = vunpack.c.h.b16 %v2932
        %v3096 = vunpack.c.l.b16 %v2933
        %v3097 = vunpack.c.h.b16 %v2933
        %v3098 = vunpack.c.l.b16 %v2934
        %v3099 = vunpack.c.h.b16 %v2934
        %v3100 = vunpack.c.l.b16 %v2935
        %v3101 = vunpack.c.h.b16 %v2935
        %v3102 = vunpack.c.l.b16 %v2936
        %v3103 = vunpack.c.h.b16 %v2936
        %v3104 = vunpack.c.l.b16 %v2937
        %v3105 = vunpack.c.h.b16 %v2937
        %v3106 = vunpack.c.l.b16 %v2938
        %v3107 = vunpack.c.h.b16 %v2938
        %v3108 = vunpack.c.l.b16 %v2939
        %v3109 = vunpack.c.h.b16 %v2939
        %v3110 = vunpack.c.l.b16 %v2940
        %v3111 = vunpack.c.h.b16 %v2940
        %v3112 = vunpack.c.l.b16 %v2941
        %v3113 = vunpack.c.h.b16 %v2941
        %v3114 = vunpack.c.l.b16 %v2942
        %v3115 = vunpack.c.h.b16 %v2942
        %v3116 = vunpack.c.l.b16 %v2943
        %v3117 = vunpack.c.h.b16 %v2943
        %v3118 = vunpack.c.l.b16 %v2944
        %v3119 = vunpack.c.h.b16 %v2944
        %v3120 = vunpack.c.l.b16 %v2945
        %v3121 = vunpack.c.h.b16 %v2945
        %v3122 = vunpack.c.l.b16 %v2946
        %v3123 = vunpack.c.h.b16 %v2946
        %v3124 = vunpack.c.l.b16 %v2947
        %v3125 = vunpack.c.h.b16 %v2947
        %v3126 = vunpack.c.l.b16 %v2948
        %v3127 = vunpack.c.h.b16 %v2948
        %v3128 = vunpack.c.l.b16 %v2949
        %v3129 = vunpack.c.h.b16 %v2949
        %v3130 = vunpack.c.l.b16 %v2950
        %v3131 = vunpack.c.h.b16 %v2950
        %v3132 = vunpack.c.l.b16 %v2951
        %v3133 = vunpack.c.h.b16 %v2951
        %v3134 = vunpack.c.l.b16 %v2952
        %v3135 = vunpack.c.h.b16 %v2952
        %v3136 = vunpack.c.l.b16 %v2953
        %v3137 = vunpack.c.h.b16 %v2953
        %v3138 = vunpack.c.l.b16 %v2954
        %v3139 = vunpack.c.h.b16 %v2954
        %v3140 = vunpack.c.l.b16 %v2955
        %v3141 = vunpack.c.h.b16 %v2955
        %v3142 = vunpack.c.l.b16 %v2956
        %v3143 = vunpack.c.h.b16 %v2956
        %v3144 = vunpack.c.l.b16 %v2957
        %v3145 = vunpack.c.h.b16 %v2957
        %v3146 = vunpack.c.l.b16 %v2958
        %v3147 = vunpack.c.h.b16 %v2958
        %v3148 = vunpack.c.l.b16 %v2959
        %v3149 = vunpack.c.h.b16 %v2959
        %v3150 = vunpack.c.l.b16 %v2960
        %v3151 = vunpack.c.h.b16 %v2960
        %v3152 = vunpack.c.l.b16 %v2961
        %v3153 = vunpack.c.h.b16 %v2961
        %v3154 = vpack.c.b16 %v3030, %v3026
        %v3155 = vpack.c.b16 %v3031, %v3027
        %v3156 = vpack.c.b16 %v3032, %v3028
        %v3157 = vpack.c.b16 %v3033, %v3029
        %v3158 = vpack.c.b16 %v3038, %v3034
        %v3159 = vpack.c.b16 %v3039, %v3035
        %v3160 = vpack.c.b16 %v3040, %v3036
        %v3161 = vpack.c.b16 %v3041, %v3037
        %v3162 = vpack.c.b16 %v3046, %v3042
        %v3163 = vpack.c.b16 %v3047, %v3043
        %v3164 = vpack.c.b16 %v3048, %v3044
        %v3165 = vpack.c.b16 %v3049, %v3045
        %v3166 = vpack.c.b16 %v3054, %v3050
        %v3167 = vpack.c.b16 %v3055, %v3051
        %v3168 = vpack.c.b16 %v3056, %v3052
        %v3169 = vpack.c.b16 %v3057, %v3053
        %v3170 = vpack.c.b16 %v3062, %v3058
        %v3171 = vpack.c.b16 %v3063, %v3059
        %v3172 = vpack.c.b16 %v3064, %v3060
        %v3173 = vpack.c.b16 %v3065, %v3061
        %v3174 = vpack.c.b16 %v3070, %v3066
        %v3175 = vpack.c.b16 %v3071, %v3067
        %v3176 = vpack.c.b16 %v3072, %v3068
        %v3177 = vpack.c.b16 %v3073, %v3069
        %v3178 = vpack.c.b16 %v3078, %v3074
        %v3179 = vpack.c.b16 %v3079, %v3075
        %v3180 = vpack.c.b16 %v3080, %v3076
        %v3181 = vpack.c.b16 %v3081, %v3077
        %v3182 = vpack.c.b16 %v3086, %v3082
        %v3183 = vpack.c.b16 %v3087, %v3083
        %v3184 = vpack.c.b16 %v3088, %v3084
        %v3185 = vpack.c.b16 %v3089, %v3085
        %v3186 = vpack.c.b16 %v3094, %v3090
        %v3187 = vpack.c.b16 %v3095, %v3091
        %v3188 = vpack.c.b16 %v3096, %v3092
        %v3189 = vpack.c.b16 %v3097, %v3093
        %v3190 = vpack.c.b16 %v3102, %v3098
        %v3191 = vpack.c.b16 %v3103, %v3099
        %v3192 = vpack.c.b16 %v3104, %v3100
        %v3193 = vpack.c.b16 %v3105, %v3101
        %v3194 = vpack.c.b16 %v3110, %v3106
        %v3195 = vpack.c.b16 %v3111, %v3107
        %v3196 = vpack.c.b16 %v3112, %v3108
        %v3197 = vpack.c.b16 %v3113, %v3109
        %v3198 = vpack.c.b16 %v3118, %v3114
        %v3199 = vpack.c.b16 %v3119, %v3115
        %v3200 = vpack.c.b16 %v3120, %v3116
        %v3201 = vpack.c.b16 %v3121, %v3117
        %v3202 = vpack.c.b16 %v3126, %v3122
        %v3203 = vpack.c.b16 %v3127, %v3123
        %v3204 = vpack.c.b16 %v3128, %v3124
        %v3205 = vpack.c.b16 %v3129, %v3125
        %v3206 = vpack.c.b16 %v3134, %v3130
        %v3207 = vpack.c.b16 %v3135, %v3131
        %v3208 = vpack.c.b16 %v3136, %v3132
        %v3209 = vpack.c.b16 %v3137, %v3133
        %v3210 = vpack.c.b16 %v3142, %v3138
        %v3211 = vpack.c.b16 %v3143, %v3139
        %v3212 = vpack.c.b16 %v3144, %v3140
        %v3213 = vpack.c.b16 %v3145, %v3141
        %v3214 = vpack.c.b16 %v3150, %v3146
        %v3215 = vpack.c.b16 %v3151, %v3147
        %v3216 = vpack.c.b16 %v3152, %v3148
        %v3217 = vpack.c.b16 %v3153, %v3149
        %3282 = vmatpush.bf16.msra.mxu0 %v3182
        %3283 = vmatpush.bf16.msra.mxu0 %v3178
        %3284 = vmatpush.bf16.msra.mxu0 %v3174
        %3285 = vmatpush.bf16.msra.mxu0 %v3170
        %3286 = vmatpush.bf16.msra.mxu0 %v3166
        %3287 = vmatpush.bf16.msra.mxu0 %v3162
        %3288 = vmatpush.bf16.msra.mxu0 %v3158
        %3289 = vmatpush.bf16.msra.mxu0 %v3154
        %3290 = vmatmul.bf16.gmra.mxu0 %v2895
        %v3291 = vpop.f32.mrf.mxu0
        %v3292 = vadd.f32 0.0, %v3291
        %v3293 = vpop.f32.mrf.mxu0
        %3294 = vdwg.mxu0
        %3295 = vmatpush.bf16.msra.mxu0 %v3214
        %3296 = vmatpush.bf16.msra.mxu0 %v3210
        %3297 = vmatpush.bf16.msra.mxu0 %v3206
        %3298 = vmatpush.bf16.msra.mxu0 %v3202
        %3299 = vmatpush.bf16.msra.mxu0 %v3198
        %3300 = vmatpush.bf16.msra.mxu0 %v3194
        %3301 = vmatpush.bf16.msra.mxu0 %v3190
        %3302 = vmatpush.bf16.msra.mxu0 %v3186
        %3303 = vmatmul.bf16.gmra.mxu0 %v2896
        %v3304 = vpop.f32.mrf.mxu0
        %v3305 = vadd.f32 %v3292, %v3304
        %v3306 = vpop.f32.mrf.mxu0
        %3307 = vdwg.mxu0
        %3308 = vmatpush.bf16.msra.mxu0 %v3183
        %3309 = vmatpush.bf16.msra.mxu0 %v3179
        %3310 = vmatpush.bf16.msra.mxu0 %v3175
        %3311 = vmatpush.bf16.msra.mxu0 %v3171
        %3312 = vmatpush.bf16.msra.mxu0 %v3167
        %3313 = vmatpush.bf16.msra.mxu0 %v3163
        %3314 = vmatpush.bf16.msra.mxu0 %v3159
        %3315 = vmatpush.bf16.msra.mxu0 %v3155
        %3316 = vmatmul.bf16.gmra.mxu0 %v2895
        %v3317 = vpop.f32.mrf.mxu0
        %v3318 = vadd.f32 0.0, %v3317
        %v3319 = vpop.f32.mrf.mxu0
        %3320 = vdwg.mxu0
        %3321 = vmatpush.bf16.msra.mxu0 %v3215
        %3322 = vmatpush.bf16.msra.mxu0 %v3211
        %3323 = vmatpush.bf16.msra.mxu0 %v3207
        %3324 = vmatpush.bf16.msra.mxu0 %v3203
        %3325 = vmatpush.bf16.msra.mxu0 %v3199
        %3326 = vmatpush.bf16.msra.mxu0 %v3195
        %3327 = vmatpush.bf16.msra.mxu0 %v3191
        %3328 = vmatpush.bf16.msra.mxu0 %v3187
        %3329 = vmatmul.bf16.gmra.mxu0 %v2896
        %v3330 = vpop.f32.mrf.mxu0
        %v3331 = vadd.f32 %v3318, %v3330
        %v3332 = vpop.f32.mrf.mxu0
        %3333 = vdwg.mxu0
        %3334 = vmatpush.bf16.msra.mxu0 %v3184
        %3335 = vmatpush.bf16.msra.mxu0 %v3180
        %3336 = vmatpush.bf16.msra.mxu0 %v3176
        %3337 = vmatpush.bf16.msra.mxu0 %v3172
        %3338 = vmatpush.bf16.msra.mxu0 %v3168
        %3339 = vmatpush.bf16.msra.mxu0 %v3164
        %3340 = vmatpush.bf16.msra.mxu0 %v3160
        %3341 = vmatpush.bf16.msra.mxu0 %v3156
        %3342 = vmatmul.bf16.gmra.mxu0 %v2895
        %v3343 = vpop.f32.mrf.mxu0
        %v3344 = vadd.f32 0.0, %v3343
        %v3345 = vpop.f32.mrf.mxu0
        %3346 = vdwg.mxu0
        %3347 = vmatpush.bf16.msra.mxu0 %v3216
        %3348 = vmatpush.bf16.msra.mxu0 %v3212
        %3349 = vmatpush.bf16.msra.mxu0 %v3208
        %3350 = vmatpush.bf16.msra.mxu0 %v3204
        %3351 = vmatpush.bf16.msra.mxu0 %v3200
        %3352 = vmatpush.bf16.msra.mxu0 %v3196
        %3353 = vmatpush.bf16.msra.mxu0 %v3192
        %3354 = vmatpush.bf16.msra.mxu0 %v3188
        %3355 = vmatmul.bf16.gmra.mxu0 %v2896
        %v3356 = vpop.f32.mrf.mxu0
        %v3357 = vadd.f32 %v3344, %v3356
        %v3358 = vpop.f32.mrf.mxu0
        %3359 = vdwg.mxu0
        %3360 = vmatpush.bf16.msra.mxu0 %v3185
        %3361 = vmatpush.bf16.msra.mxu0 %v3181
        %3362 = vmatpush.bf16.msra.mxu0 %v3177
        %3363 = vmatpush.bf16.msra.mxu0 %v3173
        %3364 = vmatpush.bf16.msra.mxu0 %v3169
        %3365 = vmatpush.bf16.msra.mxu0 %v3165
        %3366 = vmatpush.bf16.msra.mxu0 %v3161
        %3367 = vmatpush.bf16.msra.mxu0 %v3157
        %3368 = vmatmul.bf16.gmra.mxu0 %v2895
        %v3369 = vpop.f32.mrf.mxu0
        %v3370 = vadd.f32 0.0, %v3369
        %v3371 = vpop.f32.mrf.mxu0
        %3372 = vdwg.mxu0
        %3373 = vmatpush.bf16.msra.mxu0 %v3217
        %3374 = vmatpush.bf16.msra.mxu0 %v3213
        %3375 = vmatpush.bf16.msra.mxu0 %v3209
        %3376 = vmatpush.bf16.msra.mxu0 %v3205
        %3377 = vmatpush.bf16.msra.mxu0 %v3201
        %3378 = vmatpush.bf16.msra.mxu0 %v3197
        %3379 = vmatpush.bf16.msra.mxu0 %v3193
        %3380 = vmatpush.bf16.msra.mxu0 %v3189
        %3381 = vmatmul.bf16.gmra.mxu0 %v2896
        %v3382 = vpop.f32.mrf.mxu0
        %v3383 = vadd.f32 %v3370, %v3382
        %v3384 = vpop.f32.mrf.mxu0
        %3385 = vdwg.mxu0
        %v3386 = vadd.f32 %v2814, %v3305
        %v3387 = vadd.f32 %v2840, %v3331
        %v3388 = vadd.f32 %v2866, %v3357
        %v3389 = vadd.f32 %v2892, %v3383
        %v3390 = vpack.c.bf16 %v1912, %v1912
        %v3391 = vpack.c.bf16 %v1913, %v1913
        %s3392 = scalar_lea.vmem [#allocation4], 1536
        %v3393 = vld [vmem:[%s3392] sm:$0xff]
        %v3394 = vld [vmem:[%s3392 + $0x8] sm:$0xff]
        %v3395 = vld [vmem:[%s3392 + $0x10] sm:$0xff]
        %v3396 = vld [vmem:[%s3392 + $0x18] sm:$0xff]
        %v3397 = vld [vmem:[%s3392 + $0x20] sm:$0xff]
        %v3398 = vld [vmem:[%s3392 + $0x28] sm:$0xff]
        %v3399 = vld [vmem:[%s3392 + $0x30] sm:$0xff]
        %v3400 = vld [vmem:[%s3392 + $0x38] sm:$0xff]
        %v3401 = vld [vmem:[%s3392 + $0x40] sm:$0xff]
        %v3402 = vld [vmem:[%s3392 + $0x48] sm:$0xff]
        %v3403 = vld [vmem:[%s3392 + $0x50] sm:$0xff]
        %v3404 = vld [vmem:[%s3392 + $0x58] sm:$0xff]
        %v3405 = vld [vmem:[%s3392 + $0x60] sm:$0xff]
        %v3406 = vld [vmem:[%s3392 + $0x68] sm:$0xff]
        %v3407 = vld [vmem:[%s3392 + $0x70] sm:$0xff]
        %v3408 = vld [vmem:[%s3392 + $0x78] sm:$0xff]
        %v3409 = vld [vmem:[%s3392 + $0x80] sm:$0xff]
        %v3410 = vld [vmem:[%s3392 + $0x88] sm:$0xff]
        %v3411 = vld [vmem:[%s3392 + $0x90] sm:$0xff]
        %v3412 = vld [vmem:[%s3392 + $0x98] sm:$0xff]
        %v3413 = vld [vmem:[%s3392 + $0xa0] sm:$0xff]
        %v3414 = vld [vmem:[%s3392 + $0xa8] sm:$0xff]
        %v3415 = vld [vmem:[%s3392 + $0xb0] sm:$0xff]
        %v3416 = vld [vmem:[%s3392 + $0xb8] sm:$0xff]
        %v3417 = vld [vmem:[%s3392 + $0xc0] sm:$0xff]
        %v3418 = vld [vmem:[%s3392 + $0xc8] sm:$0xff]
        %v3419 = vld [vmem:[%s3392 + $0xd0] sm:$0xff]
        %v3420 = vld [vmem:[%s3392 + $0xd8] sm:$0xff]
        %v3421 = vld [vmem:[%s3392 + $0xe0] sm:$0xff]
        %v3422 = vld [vmem:[%s3392 + $0xe8] sm:$0xff]
        %v3423 = vld [vmem:[%s3392 + $0xf0] sm:$0xff]
        %v3424 = vld [vmem:[%s3392 + $0xf8] sm:$0xff]
        %v3425 = vld [vmem:[%s3392 + $0x100] sm:$0xff]
        %v3426 = vld [vmem:[%s3392 + $0x108] sm:$0xff]
        %v3427 = vld [vmem:[%s3392 + $0x110] sm:$0xff]
        %v3428 = vld [vmem:[%s3392 + $0x118] sm:$0xff]
        %v3429 = vld [vmem:[%s3392 + $0x120] sm:$0xff]
        %v3430 = vld [vmem:[%s3392 + $0x128] sm:$0xff]
        %v3431 = vld [vmem:[%s3392 + $0x130] sm:$0xff]
        %v3432 = vld [vmem:[%s3392 + $0x138] sm:$0xff]
        %v3433 = vld [vmem:[%s3392 + $0x140] sm:$0xff]
        %v3434 = vld [vmem:[%s3392 + $0x148] sm:$0xff]
        %v3435 = vld [vmem:[%s3392 + $0x150] sm:$0xff]
        %v3436 = vld [vmem:[%s3392 + $0x158] sm:$0xff]
        %v3437 = vld [vmem:[%s3392 + $0x160] sm:$0xff]
        %v3438 = vld [vmem:[%s3392 + $0x168] sm:$0xff]
        %v3439 = vld [vmem:[%s3392 + $0x170] sm:$0xff]
        %v3440 = vld [vmem:[%s3392 + $0x178] sm:$0xff]
        %v3441 = vld [vmem:[%s3392 + $0x180] sm:$0xff]
        %v3442 = vld [vmem:[%s3392 + $0x188] sm:$0xff]
        %v3443 = vld [vmem:[%s3392 + $0x190] sm:$0xff]
        %v3444 = vld [vmem:[%s3392 + $0x198] sm:$0xff]
        %v3445 = vld [vmem:[%s3392 + $0x1a0] sm:$0xff]
        %v3446 = vld [vmem:[%s3392 + $0x1a8] sm:$0xff]
        %v3447 = vld [vmem:[%s3392 + $0x1b0] sm:$0xff]
        %v3448 = vld [vmem:[%s3392 + $0x1b8] sm:$0xff]
        %v3449 = vld [vmem:[%s3392 + $0x1c0] sm:$0xff]
        %v3450 = vld [vmem:[%s3392 + $0x1c8] sm:$0xff]
        %v3451 = vld [vmem:[%s3392 + $0x1d0] sm:$0xff]
        %v3452 = vld [vmem:[%s3392 + $0x1d8] sm:$0xff]
        %v3453 = vld [vmem:[%s3392 + $0x1e0] sm:$0xff]
        %v3454 = vld [vmem:[%s3392 + $0x1e8] sm:$0xff]
        %v3455 = vld [vmem:[%s3392 + $0x1f0] sm:$0xff]
        %v3456 = vld [vmem:[%s3392 + $0x1f8] sm:$0xff]
        %v3521 = vunpack.c.l.b16 %v3393
        %v3522 = vunpack.c.h.b16 %v3393
        %v3523 = vunpack.c.l.b16 %v3394
        %v3524 = vunpack.c.h.b16 %v3394
        %v3525 = vunpack.c.l.b16 %v3395
        %v3526 = vunpack.c.h.b16 %v3395
        %v3527 = vunpack.c.l.b16 %v3396
        %v3528 = vunpack.c.h.b16 %v3396
        %v3529 = vunpack.c.l.b16 %v3397
        %v3530 = vunpack.c.h.b16 %v3397
        %v3531 = vunpack.c.l.b16 %v3398
        %v3532 = vunpack.c.h.b16 %v3398
        %v3533 = vunpack.c.l.b16 %v3399
        %v3534 = vunpack.c.h.b16 %v3399
        %v3535 = vunpack.c.l.b16 %v3400
        %v3536 = vunpack.c.h.b16 %v3400
        %v3537 = vunpack.c.l.b16 %v3401
        %v3538 = vunpack.c.h.b16 %v3401
        %v3539 = vunpack.c.l.b16 %v3402
        %v3540 = vunpack.c.h.b16 %v3402
        %v3541 = vunpack.c.l.b16 %v3403
        %v3542 = vunpack.c.h.b16 %v3403
        %v3543 = vunpack.c.l.b16 %v3404
        %v3544 = vunpack.c.h.b16 %v3404
        %v3545 = vunpack.c.l.b16 %v3405
        %v3546 = vunpack.c.h.b16 %v3405
        %v3547 = vunpack.c.l.b16 %v3406
        %v3548 = vunpack.c.h.b16 %v3406
        %v3549 = vunpack.c.l.b16 %v3407
        %v3550 = vunpack.c.h.b16 %v3407
        %v3551 = vunpack.c.l.b16 %v3408
        %v3552 = vunpack.c.h.b16 %v3408
        %v3553 = vunpack.c.l.b16 %v3409
        %v3554 = vunpack.c.h.b16 %v3409
        %v3555 = vunpack.c.l.b16 %v3410
        %v3556 = vunpack.c.h.b16 %v3410
        %v3557 = vunpack.c.l.b16 %v3411
        %v3558 = vunpack.c.h.b16 %v3411
        %v3559 = vunpack.c.l.b16 %v3412
        %v3560 = vunpack.c.h.b16 %v3412
        %v3561 = vunpack.c.l.b16 %v3413
        %v3562 = vunpack.c.h.b16 %v3413
        %v3563 = vunpack.c.l.b16 %v3414
        %v3564 = vunpack.c.h.b16 %v3414
        %v3565 = vunpack.c.l.b16 %v3415
        %v3566 = vunpack.c.h.b16 %v3415
        %v3567 = vunpack.c.l.b16 %v3416
        %v3568 = vunpack.c.h.b16 %v3416
        %v3569 = vunpack.c.l.b16 %v3417
        %v3570 = vunpack.c.h.b16 %v3417
        %v3571 = vunpack.c.l.b16 %v3418
        %v3572 = vunpack.c.h.b16 %v3418
        %v3573 = vunpack.c.l.b16 %v3419
        %v3574 = vunpack.c.h.b16 %v3419
        %v3575 = vunpack.c.l.b16 %v3420
        %v3576 = vunpack.c.h.b16 %v3420
        %v3577 = vunpack.c.l.b16 %v3421
        %v3578 = vunpack.c.h.b16 %v3421
        %v3579 = vunpack.c.l.b16 %v3422
        %v3580 = vunpack.c.h.b16 %v3422
        %v3581 = vunpack.c.l.b16 %v3423
        %v3582 = vunpack.c.h.b16 %v3423
        %v3583 = vunpack.c.l.b16 %v3424
        %v3584 = vunpack.c.h.b16 %v3424
        %v3585 = vunpack.c.l.b16 %v3425
        %v3586 = vunpack.c.h.b16 %v3425
        %v3587 = vunpack.c.l.b16 %v3426
        %v3588 = vunpack.c.h.b16 %v3426
        %v3589 = vunpack.c.l.b16 %v3427
        %v3590 = vunpack.c.h.b16 %v3427
        %v3591 = vunpack.c.l.b16 %v3428
        %v3592 = vunpack.c.h.b16 %v3428
        %v3593 = vunpack.c.l.b16 %v3429
        %v3594 = vunpack.c.h.b16 %v3429
        %v3595 = vunpack.c.l.b16 %v3430
        %v3596 = vunpack.c.h.b16 %v3430
        %v3597 = vunpack.c.l.b16 %v3431
        %v3598 = vunpack.c.h.b16 %v3431
        %v3599 = vunpack.c.l.b16 %v3432
        %v3600 = vunpack.c.h.b16 %v3432
        %v3601 = vunpack.c.l.b16 %v3433
        %v3602 = vunpack.c.h.b16 %v3433
        %v3603 = vunpack.c.l.b16 %v3434
        %v3604 = vunpack.c.h.b16 %v3434
        %v3605 = vunpack.c.l.b16 %v3435
        %v3606 = vunpack.c.h.b16 %v3435
        %v3607 = vunpack.c.l.b16 %v3436
        %v3608 = vunpack.c.h.b16 %v3436
        %v3609 = vunpack.c.l.b16 %v3437
        %v3610 = vunpack.c.h.b16 %v3437
        %v3611 = vunpack.c.l.b16 %v3438
        %v3612 = vunpack.c.h.b16 %v3438
        %v3613 = vunpack.c.l.b16 %v3439
        %v3614 = vunpack.c.h.b16 %v3439
        %v3615 = vunpack.c.l.b16 %v3440
        %v3616 = vunpack.c.h.b16 %v3440
        %v3617 = vunpack.c.l.b16 %v3441
        %v3618 = vunpack.c.h.b16 %v3441
        %v3619 = vunpack.c.l.b16 %v3442
        %v3620 = vunpack.c.h.b16 %v3442
        %v3621 = vunpack.c.l.b16 %v3443
        %v3622 = vunpack.c.h.b16 %v3443
        %v3623 = vunpack.c.l.b16 %v3444
        %v3624 = vunpack.c.h.b16 %v3444
        %v3625 = vunpack.c.l.b16 %v3445
        %v3626 = vunpack.c.h.b16 %v3445
        %v3627 = vunpack.c.l.b16 %v3446
        %v3628 = vunpack.c.h.b16 %v3446
        %v3629 = vunpack.c.l.b16 %v3447
        %v3630 = vunpack.c.h.b16 %v3447
        %v3631 = vunpack.c.l.b16 %v3448
        %v3632 = vunpack.c.h.b16 %v3448
        %v3633 = vunpack.c.l.b16 %v3449
        %v3634 = vunpack.c.h.b16 %v3449
        %v3635 = vunpack.c.l.b16 %v3450
        %v3636 = vunpack.c.h.b16 %v3450
        %v3637 = vunpack.c.l.b16 %v3451
        %v3638 = vunpack.c.h.b16 %v3451
        %v3639 = vunpack.c.l.b16 %v3452
        %v3640 = vunpack.c.h.b16 %v3452
        %v3641 = vunpack.c.l.b16 %v3453
        %v3642 = vunpack.c.h.b16 %v3453
        %v3643 = vunpack.c.l.b16 %v3454
        %v3644 = vunpack.c.h.b16 %v3454
        %v3645 = vunpack.c.l.b16 %v3455
        %v3646 = vunpack.c.h.b16 %v3455
        %v3647 = vunpack.c.l.b16 %v3456
        %v3648 = vunpack.c.h.b16 %v3456
        %v3649 = vpack.c.b16 %v3525, %v3521
        %v3650 = vpack.c.b16 %v3526, %v3522
        %v3651 = vpack.c.b16 %v3527, %v3523
        %v3652 = vpack.c.b16 %v3528, %v3524
        %v3653 = vpack.c.b16 %v3533, %v3529
        %v3654 = vpack.c.b16 %v3534, %v3530
        %v3655 = vpack.c.b16 %v3535, %v3531
        %v3656 = vpack.c.b16 %v3536, %v3532
        %v3657 = vpack.c.b16 %v3541, %v3537
        %v3658 = vpack.c.b16 %v3542, %v3538
        %v3659 = vpack.c.b16 %v3543, %v3539
        %v3660 = vpack.c.b16 %v3544, %v3540
        %v3661 = vpack.c.b16 %v3549, %v3545
        %v3662 = vpack.c.b16 %v3550, %v3546
        %v3663 = vpack.c.b16 %v3551, %v3547
        %v3664 = vpack.c.b16 %v3552, %v3548
        %v3665 = vpack.c.b16 %v3557, %v3553
        %v3666 = vpack.c.b16 %v3558, %v3554
        %v3667 = vpack.c.b16 %v3559, %v3555
        %v3668 = vpack.c.b16 %v3560, %v3556
        %v3669 = vpack.c.b16 %v3565, %v3561
        %v3670 = vpack.c.b16 %v3566, %v3562
        %v3671 = vpack.c.b16 %v3567, %v3563
        %v3672 = vpack.c.b16 %v3568, %v3564
        %v3673 = vpack.c.b16 %v3573, %v3569
        %v3674 = vpack.c.b16 %v3574, %v3570
        %v3675 = vpack.c.b16 %v3575, %v3571
        %v3676 = vpack.c.b16 %v3576, %v3572
        %v3677 = vpack.c.b16 %v3581, %v3577
        %v3678 = vpack.c.b16 %v3582, %v3578
        %v3679 = vpack.c.b16 %v3583, %v3579
        %v3680 = vpack.c.b16 %v3584, %v3580
        %v3681 = vpack.c.b16 %v3589, %v3585
        %v3682 = vpack.c.b16 %v3590, %v3586
        %v3683 = vpack.c.b16 %v3591, %v3587
        %v3684 = vpack.c.b16 %v3592, %v3588
        %v3685 = vpack.c.b16 %v3597, %v3593
        %v3686 = vpack.c.b16 %v3598, %v3594
        %v3687 = vpack.c.b16 %v3599, %v3595
        %v3688 = vpack.c.b16 %v3600, %v3596
        %v3689 = vpack.c.b16 %v3605, %v3601
        %v3690 = vpack.c.b16 %v3606, %v3602
        %v3691 = vpack.c.b16 %v3607, %v3603
        %v3692 = vpack.c.b16 %v3608, %v3604
        %v3693 = vpack.c.b16 %v3613, %v3609
        %v3694 = vpack.c.b16 %v3614, %v3610
        %v3695 = vpack.c.b16 %v3615, %v3611
        %v3696 = vpack.c.b16 %v3616, %v3612
        %v3697 = vpack.c.b16 %v3621, %v3617
        %v3698 = vpack.c.b16 %v3622, %v3618
        %v3699 = vpack.c.b16 %v3623, %v3619
        %v3700 = vpack.c.b16 %v3624, %v3620
        %v3701 = vpack.c.b16 %v3629, %v3625
        %v3702 = vpack.c.b16 %v3630, %v3626
        %v3703 = vpack.c.b16 %v3631, %v3627
        %v3704 = vpack.c.b16 %v3632, %v3628
        %v3705 = vpack.c.b16 %v3637, %v3633
        %v3706 = vpack.c.b16 %v3638, %v3634
        %v3707 = vpack.c.b16 %v3639, %v3635
        %v3708 = vpack.c.b16 %v3640, %v3636
        %v3709 = vpack.c.b16 %v3645, %v3641
        %v3710 = vpack.c.b16 %v3646, %v3642
        %v3711 = vpack.c.b16 %v3647, %v3643
        %v3712 = vpack.c.b16 %v3648, %v3644
        %3777 = vmatpush.bf16.msra.mxu0 %v3677
        %3778 = vmatpush.bf16.msra.mxu0 %v3673
        %3779 = vmatpush.bf16.msra.mxu0 %v3669
        %3780 = vmatpush.bf16.msra.mxu0 %v3665
        %3781 = vmatpush.bf16.msra.mxu0 %v3661
        %3782 = vmatpush.bf16.msra.mxu0 %v3657
        %3783 = vmatpush.bf16.msra.mxu0 %v3653
        %3784 = vmatpush.bf16.msra.mxu0 %v3649
        %3785 = vmatmul.bf16.gmra.mxu0 %v3390
        %v3786 = vpop.f32.mrf.mxu0
        %v3787 = vadd.f32 0.0, %v3786
        %v3788 = vpop.f32.mrf.mxu0
        %3789 = vdwg.mxu0
        %3790 = vmatpush.bf16.msra.mxu0 %v3709
        %3791 = vmatpush.bf16.msra.mxu0 %v3705
        %3792 = vmatpush.bf16.msra.mxu0 %v3701
        %3793 = vmatpush.bf16.msra.mxu0 %v3697
        %3794 = vmatpush.bf16.msra.mxu0 %v3693
        %3795 = vmatpush.bf16.msra.mxu0 %v3689
        %3796 = vmatpush.bf16.msra.mxu0 %v3685
        %3797 = vmatpush.bf16.msra.mxu0 %v3681
        %3798 = vmatmul.bf16.gmra.mxu0 %v3391
        %v3799 = vpop.f32.mrf.mxu0
        %v3800 = vadd.f32 %v3787, %v3799
        %v3801 = vpop.f32.mrf.mxu0
        %3802 = vdwg.mxu0
        %3803 = vmatpush.bf16.msra.mxu0 %v3678
        %3804 = vmatpush.bf16.msra.mxu0 %v3674
        %3805 = vmatpush.bf16.msra.mxu0 %v3670
        %3806 = vmatpush.bf16.msra.mxu0 %v3666
        %3807 = vmatpush.bf16.msra.mxu0 %v3662
        %3808 = vmatpush.bf16.msra.mxu0 %v3658
        %3809 = vmatpush.bf16.msra.mxu0 %v3654
        %3810 = vmatpush.bf16.msra.mxu0 %v3650
        %3811 = vmatmul.bf16.gmra.mxu0 %v3390
        %v3812 = vpop.f32.mrf.mxu0
        %v3813 = vadd.f32 0.0, %v3812
        %v3814 = vpop.f32.mrf.mxu0
        %3815 = vdwg.mxu0
        %3816 = vmatpush.bf16.msra.mxu0 %v3710
        %3817 = vmatpush.bf16.msra.mxu0 %v3706
        %3818 = vmatpush.bf16.msra.mxu0 %v3702
        %3819 = vmatpush.bf16.msra.mxu0 %v3698
        %3820 = vmatpush.bf16.msra.mxu0 %v3694
        %3821 = vmatpush.bf16.msra.mxu0 %v3690
        %3822 = vmatpush.bf16.msra.mxu0 %v3686
        %3823 = vmatpush.bf16.msra.mxu0 %v3682
        %3824 = vmatmul.bf16.gmra.mxu0 %v3391
        %v3825 = vpop.f32.mrf.mxu0
        %v3826 = vadd.f32 %v3813, %v3825
        %v3827 = vpop.f32.mrf.mxu0
        %3828 = vdwg.mxu0
        %3829 = vmatpush.bf16.msra.mxu0 %v3679
        %3830 = vmatpush.bf16.msra.mxu0 %v3675
        %3831 = vmatpush.bf16.msra.mxu0 %v3671
        %3832 = vmatpush.bf16.msra.mxu0 %v3667
        %3833 = vmatpush.bf16.msra.mxu0 %v3663
        %3834 = vmatpush.bf16.msra.mxu0 %v3659
        %3835 = vmatpush.bf16.msra.mxu0 %v3655
        %3836 = vmatpush.bf16.msra.mxu0 %v3651
        %3837 = vmatmul.bf16.gmra.mxu0 %v3390
        %v3838 = vpop.f32.mrf.mxu0
        %v3839 = vadd.f32 0.0, %v3838
        %v3840 = vpop.f32.mrf.mxu0
        %3841 = vdwg.mxu0
        %3842 = vmatpush.bf16.msra.mxu0 %v3711
        %3843 = vmatpush.bf16.msra.mxu0 %v3707
        %3844 = vmatpush.bf16.msra.mxu0 %v3703
        %3845 = vmatpush.bf16.msra.mxu0 %v3699
        %3846 = vmatpush.bf16.msra.mxu0 %v3695
        %3847 = vmatpush.bf16.msra.mxu0 %v3691
        %3848 = vmatpush.bf16.msra.mxu0 %v3687
        %3849 = vmatpush.bf16.msra.mxu0 %v3683
        %3850 = vmatmul.bf16.gmra.mxu0 %v3391
        %v3851 = vpop.f32.mrf.mxu0
        %v3852 = vadd.f32 %v3839, %v3851
        %v3853 = vpop.f32.mrf.mxu0
        %3854 = vdwg.mxu0
        %3855 = vmatpush.bf16.msra.mxu0 %v3680
        %3856 = vmatpush.bf16.msra.mxu0 %v3676
        %3857 = vmatpush.bf16.msra.mxu0 %v3672
        %3858 = vmatpush.bf16.msra.mxu0 %v3668
        %3859 = vmatpush.bf16.msra.mxu0 %v3664
        %3860 = vmatpush.bf16.msra.mxu0 %v3660
        %3861 = vmatpush.bf16.msra.mxu0 %v3656
        %3862 = vmatpush.bf16.msra.mxu0 %v3652
        %3863 = vmatmul.bf16.gmra.mxu0 %v3390
        %v3864 = vpop.f32.mrf.mxu0
        %v3865 = vadd.f32 0.0, %v3864
        %v3866 = vpop.f32.mrf.mxu0
        %3867 = vdwg.mxu0
        %3868 = vmatpush.bf16.msra.mxu0 %v3712
        %3869 = vmatpush.bf16.msra.mxu0 %v3708
        %3870 = vmatpush.bf16.msra.mxu0 %v3704
        %3871 = vmatpush.bf16.msra.mxu0 %v3700
        %3872 = vmatpush.bf16.msra.mxu0 %v3696
        %3873 = vmatpush.bf16.msra.mxu0 %v3692
        %3874 = vmatpush.bf16.msra.mxu0 %v3688
        %3875 = vmatpush.bf16.msra.mxu0 %v3684
        %3876 = vmatmul.bf16.gmra.mxu0 %v3391
        %v3877 = vpop.f32.mrf.mxu0
        %v3878 = vadd.f32 %v3865, %v3877
        %v3879 = vpop.f32.mrf.mxu0
        %3880 = vdwg.mxu0
        %v3881 = vadd.f32 %v3386, %v3800
        %v3882 = vadd.f32 %v3387, %v3826
        %v3883 = vadd.f32 %v3388, %v3852
        %v3884 = vadd.f32 %v3389, %v3878
        %v3885 = vld [vmem:[%s8] sm:$0xf]
        %v3887 = vperm.slane %v3885, 0
        %v3888 = vperm.slane %v3885, 1
        %v3889 = vperm.slane %v3885, 2
        %v3890 = vperm.slane %v3885, 3
        %v3895 = vadd.f32 %v3881, %v3887
        %v3896 = vadd.f32 %v3882, %v3888
        %v3897 = vadd.f32 %v3883, %v3889
        %v3898 = vadd.f32 %v3884, %v3890
        %v3899 = vmax.f32 %v3895, 0.0
        %v3900 = vmax.f32 %v3896, 0.0
        %v3901 = vmax.f32 %v3897, 0.0
        %v3902 = vmax.f32 %v3898, 0.0
        %v3903 = vpack.c.bf16 %v3899, %v3899
        %v3904 = vpack.c.bf16 %v3900, %v3900
        %v3905 = vpack.c.bf16 %v3901, %v3901
        %v3906 = vpack.c.bf16 %v3902, %v3902
        %v3907 = vld [vmem:[#allocation6] sm:$0xf]
        %v3908 = vld [vmem:[#allocation6 + $0x4] sm:$0xf]
        %v3909 = vld [vmem:[#allocation6 + $0x8] sm:$0xf]
        %v3910 = vld [vmem:[#allocation6 + $0xc] sm:$0xf]
        %v3911 = vld [vmem:[#allocation6 + $0x10] sm:$0xf]
        %v3912 = vld [vmem:[#allocation6 + $0x14] sm:$0xf]
        %v3913 = vld [vmem:[#allocation6 + $0x18] sm:$0xf]
        %v3914 = vld [vmem:[#allocation6 + $0x1c] sm:$0xf]
        %v3915 = vld [vmem:[#allocation6 + $0x20] sm:$0xf]
        %v3916 = vld [vmem:[#allocation6 + $0x24] sm:$0xf]
        %v3917 = vld [vmem:[#allocation6 + $0x28] sm:$0xf]
        %v3918 = vld [vmem:[#allocation6 + $0x2c] sm:$0xf]
        %v3919 = vld [vmem:[#allocation6 + $0x30] sm:$0xf]
        %v3920 = vld [vmem:[#allocation6 + $0x34] sm:$0xf]
        %v3921 = vld [vmem:[#allocation6 + $0x38] sm:$0xf]
        %v3922 = vld [vmem:[#allocation6 + $0x3c] sm:$0xf]
        %v3923 = vld [vmem:[#allocation6 + $0x40] sm:$0xf]
        %v3924 = vld [vmem:[#allocation6 + $0x44] sm:$0xf]
        %v3925 = vld [vmem:[#allocation6 + $0x48] sm:$0xf]
        %v3926 = vld [vmem:[#allocation6 + $0x4c] sm:$0xf]
        %v3927 = vld [vmem:[#allocation6 + $0x50] sm:$0xf]
        %v3928 = vld [vmem:[#allocation6 + $0x54] sm:$0xf]
        %v3929 = vld [vmem:[#allocation6 + $0x58] sm:$0xf]
        %v3930 = vld [vmem:[#allocation6 + $0x5c] sm:$0xf]
        %v3931 = vld [vmem:[#allocation6 + $0x60] sm:$0xf]
        %v3932 = vld [vmem:[#allocation6 + $0x64] sm:$0xf]
        %v3933 = vld [vmem:[#allocation6 + $0x68] sm:$0xf]
        %v3934 = vld [vmem:[#allocation6 + $0x6c] sm:$0xf]
        %v3935 = vld [vmem:[#allocation6 + $0x70] sm:$0xf]
        %v3936 = vld [vmem:[#allocation6 + $0x74] sm:$0xf]
        %v3937 = vld [vmem:[#allocation6 + $0x78] sm:$0xf]
        %v3938 = vld [vmem:[#allocation6 + $0x7c] sm:$0xf]
        %v3939 = vld [vmem:[#allocation6 + $0x80] sm:$0xf]
        %v3940 = vld [vmem:[#allocation6 + $0x84] sm:$0xf]
        %v3941 = vld [vmem:[#allocation6 + $0x88] sm:$0xf]
        %v3942 = vld [vmem:[#allocation6 + $0x8c] sm:$0xf]
        %v3943 = vld [vmem:[#allocation6 + $0x90] sm:$0xf]
        %v3944 = vld [vmem:[#allocation6 + $0x94] sm:$0xf]
        %v3945 = vld [vmem:[#allocation6 + $0x98] sm:$0xf]
        %v3946 = vld [vmem:[#allocation6 + $0x9c] sm:$0xf]
        %v3947 = vld [vmem:[#allocation6 + $0xa0] sm:$0xf]
        %v3948 = vld [vmem:[#allocation6 + $0xa4] sm:$0xf]
        %v3949 = vld [vmem:[#allocation6 + $0xa8] sm:$0xf]
        %v3950 = vld [vmem:[#allocation6 + $0xac] sm:$0xf]
        %v3951 = vld [vmem:[#allocation6 + $0xb0] sm:$0xf]
        %v3952 = vld [vmem:[#allocation6 + $0xb4] sm:$0xf]
        %v3953 = vld [vmem:[#allocation6 + $0xb8] sm:$0xf]
        %v3954 = vld [vmem:[#allocation6 + $0xbc] sm:$0xf]
        %v3955 = vld [vmem:[#allocation6 + $0xc0] sm:$0xf]
        %v3956 = vld [vmem:[#allocation6 + $0xc4] sm:$0xf]
        %v3957 = vld [vmem:[#allocation6 + $0xc8] sm:$0xf]
        %v3958 = vld [vmem:[#allocation6 + $0xcc] sm:$0xf]
        %v3959 = vld [vmem:[#allocation6 + $0xd0] sm:$0xf]
        %v3960 = vld [vmem:[#allocation6 + $0xd4] sm:$0xf]
        %v3961 = vld [vmem:[#allocation6 + $0xd8] sm:$0xf]
        %v3962 = vld [vmem:[#allocation6 + $0xdc] sm:$0xf]
        %v3963 = vld [vmem:[#allocation6 + $0xe0] sm:$0xf]
        %v3964 = vld [vmem:[#allocation6 + $0xe4] sm:$0xf]
        %v3965 = vld [vmem:[#allocation6 + $0xe8] sm:$0xf]
        %v3966 = vld [vmem:[#allocation6 + $0xec] sm:$0xf]
        %v3967 = vld [vmem:[#allocation6 + $0xf0] sm:$0xf]
        %v3968 = vld [vmem:[#allocation6 + $0xf4] sm:$0xf]
        %v3969 = vld [vmem:[#allocation6 + $0xf8] sm:$0xf]
        %v3970 = vld [vmem:[#allocation6 + $0xfc] sm:$0xf]
        %v3971 = vld [vmem:[%s10] sm:$0x1]
        %v3973 = vperm.slane %v3971, 0
        %v4039 = vunpack.c.l.b16 %v3907
        %v4040 = vunpack.c.l.b16 %v3908
        %v4041 = vunpack.c.l.b16 %v3909
        %v4042 = vunpack.c.l.b16 %v3910
        %v4043 = vunpack.c.l.b16 %v3911
        %v4044 = vunpack.c.l.b16 %v3912
        %v4045 = vunpack.c.l.b16 %v3913
        %v4046 = vunpack.c.l.b16 %v3914
        %v4047 = vunpack.c.l.b16 %v3915
        %v4048 = vunpack.c.l.b16 %v3916
        %v4049 = vunpack.c.l.b16 %v3917
        %v4050 = vunpack.c.l.b16 %v3918
        %v4051 = vunpack.c.l.b16 %v3919
        %v4052 = vunpack.c.l.b16 %v3920
        %v4053 = vunpack.c.l.b16 %v3921
        %v4054 = vunpack.c.l.b16 %v3922
        %v4055 = vunpack.c.l.b16 %v3923
        %v4056 = vunpack.c.l.b16 %v3924
        %v4057 = vunpack.c.l.b16 %v3925
        %v4058 = vunpack.c.l.b16 %v3926
        %v4059 = vunpack.c.l.b16 %v3927
        %v4060 = vunpack.c.l.b16 %v3928
        %v4061 = vunpack.c.l.b16 %v3929
        %v4062 = vunpack.c.l.b16 %v3930
        %v4063 = vunpack.c.l.b16 %v3931
        %v4064 = vunpack.c.l.b16 %v3932
        %v4065 = vunpack.c.l.b16 %v3933
        %v4066 = vunpack.c.l.b16 %v3934
        %v4067 = vunpack.c.l.b16 %v3935
        %v4068 = vunpack.c.l.b16 %v3936
        %v4069 = vunpack.c.l.b16 %v3937
        %v4070 = vunpack.c.l.b16 %v3938
        %v4071 = vunpack.c.l.b16 %v3939
        %v4072 = vunpack.c.l.b16 %v3940
        %v4073 = vunpack.c.l.b16 %v3941
        %v4074 = vunpack.c.l.b16 %v3942
        %v4075 = vunpack.c.l.b16 %v3943
        %v4076 = vunpack.c.l.b16 %v3944
        %v4077 = vunpack.c.l.b16 %v3945
        %v4078 = vunpack.c.l.b16 %v3946
        %v4079 = vunpack.c.l.b16 %v3947
        %v4080 = vunpack.c.l.b16 %v3948
        %v4081 = vunpack.c.l.b16 %v3949
        %v4082 = vunpack.c.l.b16 %v3950
        %v4083 = vunpack.c.l.b16 %v3951
        %v4084 = vunpack.c.l.b16 %v3952
        %v4085 = vunpack.c.l.b16 %v3953
        %v4086 = vunpack.c.l.b16 %v3954
        %v4087 = vunpack.c.l.b16 %v3955
        %v4088 = vunpack.c.l.b16 %v3956
        %v4089 = vunpack.c.l.b16 %v3957
        %v4090 = vunpack.c.l.b16 %v3958
        %v4091 = vunpack.c.l.b16 %v3959
        %v4092 = vunpack.c.l.b16 %v3960
        %v4093 = vunpack.c.l.b16 %v3961
        %v4094 = vunpack.c.l.b16 %v3962
        %v4095 = vunpack.c.l.b16 %v3963
        %v4096 = vunpack.c.l.b16 %v3964
        %v4097 = vunpack.c.l.b16 %v3965
        %v4098 = vunpack.c.l.b16 %v3966
        %v4099 = vunpack.c.l.b16 %v3967
        %v4100 = vunpack.c.l.b16 %v3968
        %v4101 = vunpack.c.l.b16 %v3969
        %v4102 = vunpack.c.l.b16 %v3970
        %v4103 = vpack.c.b16 %v4040, %v4039
        %v4104 = vpack.c.b16 %v4042, %v4041
        %v4105 = vpack.c.b16 %v4044, %v4043
        %v4106 = vpack.c.b16 %v4046, %v4045
        %v4107 = vpack.c.b16 %v4048, %v4047
        %v4108 = vpack.c.b16 %v4050, %v4049
        %v4109 = vpack.c.b16 %v4052, %v4051
        %v4110 = vpack.c.b16 %v4054, %v4053
        %v4111 = vpack.c.b16 %v4056, %v4055
        %v4112 = vpack.c.b16 %v4058, %v4057
        %v4113 = vpack.c.b16 %v4060, %v4059
        %v4114 = vpack.c.b16 %v4062, %v4061
        %v4115 = vpack.c.b16 %v4064, %v4063
        %v4116 = vpack.c.b16 %v4066, %v4065
        %v4117 = vpack.c.b16 %v4068, %v4067
        %v4118 = vpack.c.b16 %v4070, %v4069
        %v4119 = vpack.c.b16 %v4072, %v4071
        %v4120 = vpack.c.b16 %v4074, %v4073
        %v4121 = vpack.c.b16 %v4076, %v4075
        %v4122 = vpack.c.b16 %v4078, %v4077
        %v4123 = vpack.c.b16 %v4080, %v4079
        %v4124 = vpack.c.b16 %v4082, %v4081
        %v4125 = vpack.c.b16 %v4084, %v4083
        %v4126 = vpack.c.b16 %v4086, %v4085
        %v4127 = vpack.c.b16 %v4088, %v4087
        %v4128 = vpack.c.b16 %v4090, %v4089
        %v4129 = vpack.c.b16 %v4092, %v4091
        %v4130 = vpack.c.b16 %v4094, %v4093
        %v4131 = vpack.c.b16 %v4096, %v4095
        %v4132 = vpack.c.b16 %v4098, %v4097
        %v4133 = vpack.c.b16 %v4100, %v4099
        %v4134 = vpack.c.b16 %v4102, %v4101
        %4167 = vmatpush.bf16.msra.mxu0 %v4110
        %4168 = vmatpush.bf16.msra.mxu0 %v4109
        %4169 = vmatpush.bf16.msra.mxu0 %v4108
        %4170 = vmatpush.bf16.msra.mxu0 %v4107
        %4171 = vmatpush.bf16.msra.mxu0 %v4106
        %4172 = vmatpush.bf16.msra.mxu0 %v4105
        %4173 = vmatpush.bf16.msra.mxu0 %v4104
        %4174 = vmatpush.bf16.msra.mxu0 %v4103
        %4175 = vmatmul.bf16.gmra.mxu0 %v3903
        %v4176 = vpop.f32.mrf.mxu0
        %v4177 = vadd.f32 %v3973, %v4176
        %v4178 = vpop.f32.mrf.mxu0
        %4179 = vdwg.mxu0
        %4180 = vmatpush.bf16.msra.mxu0 %v4118
        %4181 = vmatpush.bf16.msra.mxu0 %v4117
        %4182 = vmatpush.bf16.msra.mxu0 %v4116
        %4183 = vmatpush.bf16.msra.mxu0 %v4115
        %4184 = vmatpush.bf16.msra.mxu0 %v4114
        %4185 = vmatpush.bf16.msra.mxu0 %v4113
        %4186 = vmatpush.bf16.msra.mxu0 %v4112
        %4187 = vmatpush.bf16.msra.mxu0 %v4111
        %4188 = vmatmul.bf16.gmra.mxu0 %v3904
        %v4189 = vpop.f32.mrf.mxu0
        %v4190 = vadd.f32 %v4177, %v4189
        %v4191 = vpop.f32.mrf.mxu0
        %4192 = vdwg.mxu0
        %4193 = vmatpush.bf16.msra.mxu0 %v4126
        %4194 = vmatpush.bf16.msra.mxu0 %v4125
        %4195 = vmatpush.bf16.msra.mxu0 %v4124
        %4196 = vmatpush.bf16.msra.mxu0 %v4123
        %4197 = vmatpush.bf16.msra.mxu0 %v4122
        %4198 = vmatpush.bf16.msra.mxu0 %v4121
        %4199 = vmatpush.bf16.msra.mxu0 %v4120
        %4200 = vmatpush.bf16.msra.mxu0 %v4119
        %4201 = vmatmul.bf16.gmra.mxu0 %v3905
        %v4202 = vpop.f32.mrf.mxu0
        %v4203 = vadd.f32 %v4190, %v4202
        %v4204 = vpop.f32.mrf.mxu0
        %4205 = vdwg.mxu0
        %4206 = vmatpush.bf16.msra.mxu0 %v4134
        %4207 = vmatpush.bf16.msra.mxu0 %v4133
        %4208 = vmatpush.bf16.msra.mxu0 %v4132
        %4209 = vmatpush.bf16.msra.mxu0 %v4131
        %4210 = vmatpush.bf16.msra.mxu0 %v4130
        %4211 = vmatpush.bf16.msra.mxu0 %v4129
        %4212 = vmatpush.bf16.msra.mxu0 %v4128
        %4213 = vmatpush.bf16.msra.mxu0 %v4127
        %4214 = vmatmul.bf16.gmra.mxu0 %v3906
        %v4215 = vpop.f32.mrf.mxu0
        %v4216 = vadd.f32 %v4203, %v4215
        %v4217 = vpop.f32.mrf.mxu0
        %4218 = vdwg.mxu0
        %v4219 = vmax.f32 %v4216, 0.0
        %v4220 = vpack.c.bf16 %v4219, %v4219
        %v4221 = vld [vmem:[%s11] sm:$0xf]
        %v4222 = vld [vmem:[%s11 + $0x4] sm:$0xf]
        %v4223 = vld [vmem:[%s11 + $0x8] sm:$0xf]
        %v4224 = vld [vmem:[%s11 + $0xc] sm:$0xf]
        %v4225 = vld [vmem:[%s11 + $0x10] sm:$0xf]
        %v4226 = vld [vmem:[%s11 + $0x14] sm:$0xf]
        %v4227 = vld [vmem:[%s11 + $0x18] sm:$0xf]
        %v4228 = vld [vmem:[%s11 + $0x1c] sm:$0xf]
        %v4229 = vld [vmem:[%s11 + $0x20] sm:$0xf]
        %v4230 = vld [vmem:[%s11 + $0x24] sm:$0xf]
        %v4231 = vld [vmem:[%s11 + $0x28] sm:$0xf]
        %v4232 = vld [vmem:[%s11 + $0x2c] sm:$0xf]
        %v4233 = vld [vmem:[%s11 + $0x30] sm:$0xf]
        %v4234 = vld [vmem:[%s11 + $0x34] sm:$0xf]
        %v4235 = vld [vmem:[%s11 + $0x38] sm:$0xf]
        %v4236 = vld [vmem:[%s11 + $0x3c] sm:$0xf]
        %v4237 = vld [vmem:[%s12] sm:$0x1]
        %v4239 = vperm.slane %v4237, 0
        %v4257 = vunpack.c.l.b16 %v4221
        %v4258 = vunpack.c.l.b16 %v4222
        %v4259 = vunpack.c.l.b16 %v4223
        %v4260 = vunpack.c.l.b16 %v4224
        %v4261 = vunpack.c.l.b16 %v4225
        %v4262 = vunpack.c.l.b16 %v4226
        %v4263 = vunpack.c.l.b16 %v4227
        %v4264 = vunpack.c.l.b16 %v4228
        %v4265 = vunpack.c.l.b16 %v4229
        %v4266 = vunpack.c.l.b16 %v4230
        %v4267 = vunpack.c.l.b16 %v4231
        %v4268 = vunpack.c.l.b16 %v4232
        %v4269 = vunpack.c.l.b16 %v4233
        %v4270 = vunpack.c.l.b16 %v4234
        %v4271 = vunpack.c.l.b16 %v4235
        %v4272 = vunpack.c.l.b16 %v4236
        %v4273 = vpack.c.b16 %v4258, %v4257
        %v4274 = vpack.c.b16 %v4260, %v4259
        %v4275 = vpack.c.b16 %v4262, %v4261
        %v4276 = vpack.c.b16 %v4264, %v4263
        %v4277 = vpack.c.b16 %v4266, %v4265
        %v4278 = vpack.c.b16 %v4268, %v4267
        %v4279 = vpack.c.b16 %v4270, %v4269
        %v4280 = vpack.c.b16 %v4272, %v4271
        %4289 = vmatpush.bf16.msra.mxu0 %v4280
        %4290 = vmatpush.bf16.msra.mxu0 %v4279
        %4291 = vmatpush.bf16.msra.mxu0 %v4278
        %4292 = vmatpush.bf16.msra.mxu0 %v4277
        %4293 = vmatpush.bf16.msra.mxu0 %v4276
        %4294 = vmatpush.bf16.msra.mxu0 %v4275
        %4295 = vmatpush.bf16.msra.mxu0 %v4274
        %4296 = vmatpush.bf16.msra.mxu0 %v4273
        %4297 = vmatmul.bf16.gmra.mxu0 %v4220
        %v4298 = vpop.f32.mrf.mxu0
        %v4299 = vadd.f32 %v4239, %v4298
        %v4300 = vpop.f32.mrf.mxu0
        %4301 = vdwg.mxu0
        %v4302 = vmax.f32 %v4299, 0.0
        %v4303 = vpack.c.bf16 %v4302, %v4302
        %v4304 = vld [vmem:[%s13] sm:$0xf]
        %v4305 = vld [vmem:[%s13 + $0x4] sm:$0xf]
        %v4306 = vld [vmem:[%s13 + $0x8] sm:$0xf]
        %v4307 = vld [vmem:[%s13 + $0xc] sm:$0xf]
        %v4308 = vld [vmem:[%s14] sm:$0x1]
        %v4310 = vperm.slane %v4308, 0
        %v4316 = vunpack.c.l.b16 %v4304
        %v4317 = vunpack.c.l.b16 %v4305
        %v4318 = vunpack.c.l.b16 %v4306
        %v4319 = vunpack.c.l.b16 %v4307
        %v4320 = vpack.c.b16 %v4317, %v4316
        %v4321 = vpack.c.b16 %v4319, %v4318
        %vm4324 = vcmask 261120
        %v4326 = vsel %vm4324, %v4303, 0
        %4328 = vmatpush.bf16.msra.mxu0 0
        %4329 = vmatpush.bf16.msra.mxu0 0
        %4330 = vmatpush.bf16.msra.mxu0 0
        %4331 = vmatpush.bf16.msra.mxu0 0
        %4332 = vmatpush.bf16.msra.mxu0 0
        %4333 = vmatpush.bf16.msra.mxu0 0
        %4334 = vmatpush.bf16.msra.mxu0 %v4321
        %4335 = vmatpush.bf16.msra.mxu0 %v4320
        %4336 = vmatmul.bf16.gmra.mxu0 %v4326
        %v4337 = vpop.f32.mrf.mxu0
        %v4338 = vadd.f32 %v4310, %v4337
        %v4339 = vpop.f32.mrf.mxu0
        %4340 = vdwg.mxu0
        %4341 = vst [vmem:[%s539] sm:$0xff] %v4338
        %p4342 = scmp.lt.s32.totalorder %s28, 2
        %s4343 = scalar_select %p4342, %s28, 2
        %s4344 = smul.addr %s4343, 8
        %s4345 = scalar_lea.vmem %s15, %s4344
        // Predicated region
        $region93: #{_lambda_.1} parent=79 // pred_check
          %p4346 = pneg %p366
        $region94: #{_lambda_.1} parent=79 // pred_check_branch
          %4348 = sbr.rel (%p4346) target = $region96
        $region95: #{_lambda_.1} parent=79 // pred_region
          _
        $region96: #{_lambda_.1} parent=79 // pred_fallthru
          _
      $region80: #{_lambda_.1} parent=5 // pred_fallthru
        _
      %p4349 = scmp.le.s32.totalorder 2, %s23
      // Predicated region
      $region97: #{_lambda_.1} parent=5 // pred_check
        %p4350 = pneg %p4349
      $region98: #{_lambda_.1} parent=5 // pred_check_branch
        %4352 = sbr.rel (%p4350) target = $region100
      $region99: #{_lambda_.1} parent=5 // pred_region
        %s4353 = ssub.s32 %s23, 2
        // Predicated region
        $region101: #{_lambda_.1} parent=99 // pred_check
          %p4354 = pneg %p372
        $region102: #{_lambda_.1} parent=99 // pred_check_branch
          %4356 = sbr.rel (%p4354) target = $region104
        $region103: #{_lambda_.1} parent=99 // pred_region
          %p4357 = scmp.lt.s32.totalorder %s29, 2
          %s4358 = scalar_select %p4357, %s29, 2
          %s4359 = smul.addr %s4358, 8
          %s4360 = scalar_lea.vmem %s15, %s4359
        $region104: #{_lambda_.1} parent=99 // pred_fallthru
          _
      $region100: #{_lambda_.1} parent=5 // pred_fallthru
        _
    $region6: #{_lambda_.1} parent=1 // loop_footer
      %s27 = sadd.s32 1, %s23
    $region7: #{_lambda_.1} parent=1 // loop_footer_branch
      %22 = sbr.rel target = $region3
    $region8: #{_lambda_.1} parent=1 // loop_exit
      _
    %4361 = vsyncpa [#allocation3], 1
    %s4362 = scalar_lea.sflag [#allocation3], 1
    %4363 = vsyncpa %s4362, 1
    %4364 = vsyncpa [#allocation5], 1

</llo_original>
